<compile_context>
chip_gen: v7x
topology: tpu7x:2x2x1
jax: 0.10.0
libtpu: 0.0.40
codegen_flags: <defaults>
</compile_context>

<pallas_src>
import functools

import numpy as np
import jax
import jax.numpy as jnp
from jax import lax
from jax.experimental import pallas as pl
from jax.experimental.pallas import tpu as pltpu

EMB_DIM = 300
EMB_PAD = 384               # 300 padded to 3 clean 128-lane tiles
HID = 128
KSIZE = 5
DILATIONS = (1, 2, 4, 8, 16, 32, 64)
RF = 1 + (KSIZE - 1) * sum(DILATIONS)   # 509-step receptive field
DE_DIM = 11                 # args.TAALES == False branch -> fc input = 128 + 11
FC1, FC2 = 64, 32


def _round_up(x, m):
    return ((x + m - 1) // m) * m


def _pick_tb(batch, lp):
    """Batch-tile size: target M = TB*Lp ~ 256, cap VMEM, keep grid >= 2."""
    tb = max(1, -(-256 // lp))                                 # ceil(256 / lp)
    tb = min(tb, batch)
    # Cap the per-step im2col block (~TB*Lp*5*384 bf16 bytes) at ~8 MiB so the
    # working set stays far below v7x's 64 MiB physical VMEM.
    cap = max(1, (8 << 20) // (lp * KSIZE * EMB_PAD * 2))
    tb = min(tb, cap)
    if batch >= 2:                      # keep >= 2 grid steps for v7x megacore
        tb = min(tb, max(1, batch // 2))
    return tb


# ---------------------------------------------------------------------------
# Fused kernel: one grid step = TB sequences, flattened as [TB*Lp, ...] rows.
# Row r belongs to local sequence r // Lp at local time r % Lp; the first
# `pad` local rows of each sequence are dummy front-padding (their values
# never reach a real row because every shifted tap is masked / causal).
# ---------------------------------------------------------------------------
def _fused_ccnn_kernel(x_ref, t_ref, de_bias_ref, w0_ref, wr_ref, b_ref,
                       w1f_ref, w2_ref, b2_ref, w3_ref, b3_ref, o_ref,
                       *, tb, lp, lc, pad, need_mask):
    tbl = tb * lp
    t_local = t_ref[...] if need_mask else None          # [TBL, 1] int32

    def im2col(h, dilation):
        # Stack the K causally shifted copies of h along lanes: [TBL, K*Cin].
        cin = h.shape[1]
        pieces = []
        for j in range(KSIZE):
            s = (KSIZE - 1 - j) * dilation
            if s >= lc:                 # tap only ever reads causal zeros
                pieces.append(jnp.zeros((tbl, cin), h.dtype))
                continue
            if s == 0:
                p = h
            else:
                p = jnp.concatenate(
                    [jnp.zeros((s, cin), h.dtype), h[:tbl - s, :]], axis=0)
                if need_mask:           # zero rows whose window crosses the
                    p = jnp.where(t_local >= pad + s, p,   # sequence start /
                                  jnp.zeros_like(p))       # batch boundary
            pieces.append(p)
        return jnp.concatenate(pieces, axis=1)

    # 7-layer causal dilated conv stack: one bf16 MXU matmul per layer,
    # f32 accumulation, bias + ReLU on the VPU.
    h_in = x_ref[...]                                     # [TBL, 384] bf16
    h_f32 = None
    for li in range(len(DILATIONS)):
        cols = im2col(h_in, DILATIONS[li])                # [TBL, K*Cin] bf16
        w = w0_ref[...] if li == 0 else wr_ref[li - 1]    # [K*Cin, 128] bf16
        acc = jnp.dot(cols, w, preferred_element_type=jnp.float32)
        h_f32 = jnp.maximum(acc + b_ref[li], 0.0)         # [TBL, 128] f32
        h_in = h_f32.astype(jnp.bfloat16)                 # next layer's input

    # fc head (tiny, kept in f32) on the last real timestep of each sequence.
    feat = jnp.concatenate(
        [h_f32[(k + 1) * lp - 1:(k + 1) * lp, :] for k in range(tb)], axis=0)
    h1 = jnp.dot(feat, w1f_ref[...], preferred_element_type=jnp.float32)
    h1 = jnp.maximum(h1 + de_bias_ref[...], 0.0)          # [TB, 64]
    h2 = jnp.dot(h1, w2_ref[...], preferred_element_type=jnp.float32)
    h2 = jnp.maximum(h2 + b2_ref[...], 0.0)               # [TB, 32]
    logit = jnp.dot(h2, w3_ref[...], preferred_element_type=jnp.float32)
    o_ref[...] = (logit + b3_ref[...]).astype(o_ref.dtype)  # [TB, 128]


# ---------------------------------------------------------------------------
# Full module forward
# ---------------------------------------------------------------------------
def devault_single_ccnn_forward(params, token_ids, de_feature):
    B, L = token_ids.shape

    # Only the last timestep feeds the fc head -> clipping to the receptive
    # field is exact and bounds both DMA and conv FLOPs for long sequences.
    lc = min(L, RF)
    token_ids = token_ids[:, L - lc:]
    lp = _round_up(lc, 8)               # front-pad time so blocks are 8-aligned
    pad = lp - lc

    tb = _pick_tb(B, lp)
    n_blocks = -(-B // tb)
    b_pad = n_blocks * tb

    # Embedding lookup is a gather; kept in plain JAX glue.
    x = jnp.take(params["embedding"], token_ids, axis=0)        # [B, lc, 300]
    x = jnp.pad(x, ((0, b_pad - B), (pad, 0), (0, EMB_PAD - EMB_DIM)))
    x = x.astype(jnp.bfloat16).reshape(b_pad * lp, EMB_PAD)     # [B_pad*Lp, 384]

    # Local-time index of every row within its sequence (same for all blocks).
    t_local = jnp.tile(jnp.arange(lp, dtype=jnp.int32), tb).reshape(tb * lp, 1)

    # im2col weight prep: [K, Cin, Cout] -> [K*Cin, Cout], bf16 operands.
    w0, _ = params["conv"][0]                                   # [K, 300, 128]
    w0p = jnp.pad(w0, ((0, 0), (0, EMB_PAD - EMB_DIM), (0, 0)))
    w0i = w0p.reshape(KSIZE * EMB_PAD, HID).astype(jnp.bfloat16)      # [1920,128]
    wri = jnp.stack([w.reshape(KSIZE * HID, HID)
                     for (w, _) in params["conv"][1:]], axis=0)
    wri = wri.astype(jnp.bfloat16)                              # [6, 640, 128]
    b_all = jnp.stack([b for (_, b) in params["conv"]], axis=0)  # [7,1,128] f32

    (w1, b1), (w2, b2), (w3, b3) = params["fc"]
    w1_feat = w1[:HID, :]                                       # [128, 64] f32
    w1_de = w1[HID:, :]                                         # [11, 64]
    # Tiny per-batch projection of the dense features + b1 (JAX glue, f32),
    # folded into the kernel as the fc1 "bias".
    de_bias = de_feature @ w1_de + b1                           # [B, 64]
    de_bias = jnp.pad(de_bias, ((0, b_pad - B), (0, 0)))
    de_bias = de_bias.reshape(n_blocks, tb, FC1)
    # Lane-pad the final 32->1 projection so the kernel output is lane-dense.
    w3p = jnp.pad(w3, ((0, 0), (0, HID - w3.shape[1])))         # [32, 128]
    b3p = jnp.pad(b3, ((0, 0), (0, HID - b3.shape[1])))         # [1, 128]

    kernel = functools.partial(
        _fused_ccnn_kernel, tb=tb, lp=lp, lc=lc, pad=pad,
        need_mask=(tb > 1 or pad > 0))

    out = pl.pallas_call(
        kernel,
        out_shape=jax.ShapeDtypeStruct((n_blocks, tb, HID), jnp.float32),
        grid=(n_blocks,),
        in_specs=[
            pl.BlockSpec((tb * lp, EMB_PAD), lambda i: (i, 0)),        # x
            pl.BlockSpec((tb * lp, 1), lambda i: (0, 0)),              # t_local
            pl.BlockSpec((None, tb, FC1), lambda i: (i, 0, 0)),        # de_bias
            pl.BlockSpec((KSIZE * EMB_PAD, HID), lambda i: (0, 0)),    # w0 im2col
            pl.BlockSpec((len(DILATIONS) - 1, KSIZE * HID, HID),
                         lambda i: (0, 0, 0)),                         # w1..6
            pl.BlockSpec((len(DILATIONS), 1, HID), lambda i: (0, 0, 0)),  # biases
            pl.BlockSpec((HID, FC1), lambda i: (0, 0)),                # w1_feat
            pl.BlockSpec((FC1, FC2), lambda i: (0, 0)),                # w2
            pl.BlockSpec((1, FC2), lambda i: (0, 0)),                  # b2
            pl.BlockSpec((FC2, HID), lambda i: (0, 0)),                # w3p
            pl.BlockSpec((1, HID), lambda i: (0, 0)),                  # b3p
        ],
        out_specs=pl.BlockSpec((None, tb, HID), lambda i: (i, 0, 0)),
        compiler_params=pltpu.CompilerParams(
            dimension_semantics=("parallel",),
            vmem_limit_bytes=48 * 1024 * 1024),
    )(x, t_local, de_bias, w0i, wri, b_all, w1_feat, w2, b2, w3p, b3p)

    return out.reshape(b_pad, HID)[:B, :1]                      # [B, 1]


# ---------------------------------------------------------------------------
# Deterministic synthetic parameter init (shapes from the module's __init__).
# ---------------------------------------------------------------------------
def init_params(key, token_size):
    params = {}
    key, k_emb = jax.random.split(key)
    params["embedding"] = (
        jax.random.normal(k_emb, (token_size, EMB_DIM), jnp.float32) * 0.1)

    conv = []
    cin = EMB_DIM
    for _ in DILATIONS:
        key, kw, kb = jax.random.split(key, 3)
        w = jax.random.normal(kw, (KSIZE, cin, HID), jnp.float32)
        w = w * (1.0 / np.sqrt(cin * KSIZE))
        b = jax.random.normal(kb, (1, HID), jnp.float32) * 0.01
        conv.append((w, b))
        cin = HID
    params["conv"] = conv

    fc = []
    for din, dout in ((HID + DE_DIM, FC1), (FC1, FC2), (FC2, 1)):
        key, kw, kb = jax.random.split(key, 3)
        w = jax.random.normal(kw, (din, dout), jnp.float32) / np.sqrt(din)
        b = jax.random.normal(kb, (1, dout), jnp.float32) * 0.01
        fc.append((w, b))
    params["fc"] = fc
    return params


# ---------------------------------------------------------------------------
# Pure-JAX f32 reference (independent path via lax.conv_general_dilated, NCL).
# ---------------------------------------------------------------------------
def reference_forward(params, token_ids, de_feature):
    x = jnp.take(params["embedding"], token_ids, axis=0)   # [B, L, 300]
    x = jnp.transpose(x, (0, 2, 1))                        # [B, C, L] like torch
    for (w, b), d in zip(params["conv"], DILATIONS):
        w_oik = jnp.transpose(w, (2, 1, 0))                # [Cout, Cin, K]
        pad = (KSIZE - 1) * d
        y = lax.conv_general_dilated(
            x, w_oik, window_strides=(1,), padding=[(pad, 0)],
            rhs_dilation=(d,), dimension_numbers=("NCH", "OIH", "NCH"))
        x = jnp.maximum(y + b.reshape(1, -1, 1), 0.0)
    out = jnp.transpose(x, (0, 2, 1))                      # [B, L, 128]
    embedding_v = out[:, -1, :]
    combo = jnp.concatenate([embedding_v, de_feature], axis=1)
    (w1, b1), (w2, b2), (w3, b3) = params["fc"]
    h = jnp.maximum(combo @ w1 + b1, 0.0)
    h = jnp.maximum(h @ w2 + b2, 0.0)
    return h @ w3 + b3


if __name__ == "__main__":
    B, L = 2, 16
    token_size = 50

    key = jax.random.PRNGKey(0)
    key, k_ids, k_de, k_par = jax.random.split(key, 4)
    token_ids = jax.random.randint(k_ids, (B, L), 0, token_size, dtype=jnp.int32)
    de_feature = jax.random.normal(k_de, (B, DE_DIM), jnp.float32)
    params = init_params(k_par, token_size)

    logits = devault_single_ccnn_forward(params, token_ids, de_feature)
    logits = jax.block_until_ready(logits)
    assert logits.shape == (B, 1)

    ref = reference_forward(params, token_ids, de_feature)
    # Conv matmul operands are bf16 (f32 accumulation, f32 fc head), so compare
    # against the f32 reference with a correspondingly looser tolerance.
    np.testing.assert_allclose(np.asarray(logits), np.asarray(ref),
                               rtol=1e-2, atol=1e-2)
    print("KERNEL_OK")
</pallas_src>

<mosaic_0001>
module attributes {stable_mosaic.version = 11 : i64} {
  func.func @_fused_ccnn_kernel(%arg0: i32, %arg1: memref<16x384xbf16, #tpu.memory_space<vmem>>, %arg2: memref<16x1xi32, #tpu.memory_space<vmem>>, %arg3: memref<1x1x64xf32, #tpu.memory_space<vmem>>, %arg4: memref<1920x128xbf16, #tpu.memory_space<vmem>>, %arg5: memref<6x640x128xbf16, #tpu.memory_space<vmem>>, %arg6: memref<7x1x128xf32, #tpu.memory_space<vmem>>, %arg7: memref<128x64xf32, #tpu.memory_space<vmem>>, %arg8: memref<64x32xf32, #tpu.memory_space<vmem>>, %arg9: memref<1x32xf32, #tpu.memory_space<vmem>>, %arg10: memref<32x128xf32, #tpu.memory_space<vmem>>, %arg11: memref<1x128xf32, #tpu.memory_space<vmem>>, %arg12: memref<1x1x128xf32, #tpu.memory_space<vmem>>) attributes {dimension_semantics = [#tpu.dimension_semantics<parallel>], iteration_bounds = array<i64: 2>, scalar_prefetch = 0 : i64, scratch_operands = 0 : i64, tpu.core_type = #tpu.core_type<tc>, window_params = [{transform_indices = @transform_0, window_bounds = array<i64: 16, 384>}, {pipeline_mode = #tpu.pipeline_mode<synchronous>, transform_indices = @transform_1, window_bounds = array<i64: 16, 1>}, {transform_indices = @transform_2, window_bounds = array<i64: 1, 1, 64>}, {pipeline_mode = #tpu.pipeline_mode<synchronous>, transform_indices = @transform_3, window_bounds = array<i64: 1920, 128>}, {pipeline_mode = #tpu.pipeline_mode<synchronous>, transform_indices = @transform_4, window_bounds = array<i64: 6, 640, 128>}, {pipeline_mode = #tpu.pipeline_mode<synchronous>, transform_indices = @transform_5, window_bounds = array<i64: 7, 1, 128>}, {pipeline_mode = #tpu.pipeline_mode<synchronous>, transform_indices = @transform_6, window_bounds = array<i64: 128, 64>}, {pipeline_mode = #tpu.pipeline_mode<synchronous>, transform_indices = @transform_7, window_bounds = array<i64: 64, 32>}, {pipeline_mode = #tpu.pipeline_mode<synchronous>, transform_indices = @transform_8, window_bounds = array<i64: 1, 32>}, {pipeline_mode = #tpu.pipeline_mode<synchronous>, transform_indices = @transform_9, window_bounds = array<i64: 32, 128>}, {pipeline_mode = #tpu.pipeline_mode<synchronous>, transform_indices = @transform_10, window_bounds = array<i64: 1, 128>}, {transform_indices = @transform_11, window_bounds = array<i64: 1, 1, 128>}]} {
    %c0 = arith.constant 0 : index
    %c0_0 = arith.constant 0 : index
    %0 = vector.load %arg1[%c0, %c0_0] : memref<16x384xbf16, #tpu.memory_space<vmem>>, vector<16x384xbf16>
    %cst = arith.constant 0.000000e+00 : bf16
    %1 = vector.broadcast %cst : bf16 to vector<4x384xbf16>
    %2 = vector.extract_strided_slice %0 {offsets = [0, 0], sizes = [12, 384], strides = [1, 1]} : vector<16x384xbf16> to vector<12x384xbf16>
    %3 = tpu.concatenate %1, %2 in 0 : vector<4x384xbf16>, vector<12x384xbf16> -> vector<16x384xbf16>
    %cst_1 = arith.constant 0.000000e+00 : bf16
    %4 = vector.broadcast %cst_1 : bf16 to vector<3x384xbf16>
    %5 = vector.extract_strided_slice %0 {offsets = [0, 0], sizes = [13, 384], strides = [1, 1]} : vector<16x384xbf16> to vector<13x384xbf16>
    %6 = tpu.concatenate %4, %5 in 0 : vector<3x384xbf16>, vector<13x384xbf16> -> vector<16x384xbf16>
    %cst_2 = arith.constant 0.000000e+00 : bf16
    %7 = vector.broadcast %cst_2 : bf16 to vector<2x384xbf16>
    %8 = vector.extract_strided_slice %0 {offsets = [0, 0], sizes = [14, 384], strides = [1, 1]} : vector<16x384xbf16> to vector<14x384xbf16>
    %9 = tpu.concatenate %7, %8 in 0 : vector<2x384xbf16>, vector<14x384xbf16> -> vector<16x384xbf16>
    %cst_3 = arith.constant 0.000000e+00 : bf16
    %10 = vector.broadcast %cst_3 : bf16 to vector<1x384xbf16>
    %11 = vector.extract_strided_slice %0 {offsets = [0, 0], sizes = [15, 384], strides = [1, 1]} : vector<16x384xbf16> to vector<15x384xbf16>
    %12 = tpu.concatenate %10, %11 in 0 : vector<1x384xbf16>, vector<15x384xbf16> -> vector<16x384xbf16>
    %13 = tpu.concatenate %3, %6, %9, %12, %0 in 1 : vector<16x384xbf16>, vector<16x384xbf16>, vector<16x384xbf16>, vector<16x384xbf16>, vector<16x384xbf16> -> vector<16x1920xbf16>
    %c0_4 = arith.constant 0 : index
    %c0_5 = arith.constant 0 : index
    %14 = vector.load %arg4[%c0_4, %c0_5] : memref<1920x128xbf16, #tpu.memory_space<vmem>>, vector<1920x128xbf16>
    %cst_6 = arith.constant dense<0.000000e+00> : vector<16x128xf32>
    %15 = tpu.matmul %13, %14, %cst_6 {dimension_numbers = #tpu.dot_dimension_numbers<[1], [0], [0], [1], [0, 0, 1, 1], [], []>} : vector<16x1920xbf16>, vector<1920x128xbf16>, vector<16x128xf32> -> vector<16x128xf32>
    %c0_7 = arith.constant 0 : index
    %c0_8 = arith.constant 0 : index
    %c0_9 = arith.constant 0 : index
    %16 = vector.load %arg6[%c0_7, %c0_8, %c0_9] : memref<7x1x128xf32, #tpu.memory_space<vmem>>, vector<1x1x128xf32>
    %17 = vector.shape_cast %16 : vector<1x1x128xf32> to vector<1x128xf32>
    %18 = vector.broadcast %17 : vector<1x128xf32> to vector<16x128xf32>
    %19 = arith.addf %15, %18 : vector<16x128xf32>
    %cst_10 = arith.constant 0.000000e+00 : f32
    %20 = vector.broadcast %cst_10 : f32 to vector<16x128xf32>
    %21 = arith.maximumf %19, %20 : vector<16x128xf32>
    %22 = arith.truncf %21 : vector<16x128xf32> to vector<16x128xbf16>
    %cst_11 = arith.constant 0.000000e+00 : bf16
    %23 = vector.broadcast %cst_11 : bf16 to vector<8x128xbf16>
    %24 = vector.extract_strided_slice %22 {offsets = [0, 0], sizes = [8, 128], strides = [1, 1]} : vector<16x128xbf16> to vector<8x128xbf16>
    %25 = tpu.concatenate %23, %24 in 0 : vector<8x128xbf16>, vector<8x128xbf16> -> vector<16x128xbf16>
    %cst_12 = arith.constant 0.000000e+00 : bf16
    %26 = vector.broadcast %cst_12 : bf16 to vector<6x128xbf16>
    %27 = vector.extract_strided_slice %22 {offsets = [0, 0], sizes = [10, 128], strides = [1, 1]} : vector<16x128xbf16> to vector<10x128xbf16>
    %28 = tpu.concatenate %26, %27 in 0 : vector<6x128xbf16>, vector<10x128xbf16> -> vector<16x128xbf16>
    %cst_13 = arith.constant 0.000000e+00 : bf16
    %29 = vector.broadcast %cst_13 : bf16 to vector<4x128xbf16>
    %30 = vector.extract_strided_slice %22 {offsets = [0, 0], sizes = [12, 128], strides = [1, 1]} : vector<16x128xbf16> to vector<12x128xbf16>
    %31 = tpu.concatenate %29, %30 in 0 : vector<4x128xbf16>, vector<12x128xbf16> -> vector<16x128xbf16>
    %cst_14 = arith.constant 0.000000e+00 : bf16
    %32 = vector.broadcast %cst_14 : bf16 to vector<2x128xbf16>
    %33 = vector.extract_strided_slice %22 {offsets = [0, 0], sizes = [14, 128], strides = [1, 1]} : vector<16x128xbf16> to vector<14x128xbf16>
    %34 = tpu.concatenate %32, %33 in 0 : vector<2x128xbf16>, vector<14x128xbf16> -> vector<16x128xbf16>
    %35 = tpu.concatenate %25, %28, %31, %34, %22 in 1 : vector<16x128xbf16>, vector<16x128xbf16>, vector<16x128xbf16>, vector<16x128xbf16>, vector<16x128xbf16> -> vector<16x640xbf16>
    %c0_15 = arith.constant 0 : index
    %c0_16 = arith.constant 0 : index
    %c0_17 = arith.constant 0 : index
    %36 = vector.load %arg5[%c0_15, %c0_16, %c0_17] : memref<6x640x128xbf16, #tpu.memory_space<vmem>>, vector<1x640x128xbf16>
    %37 = vector.shape_cast %36 : vector<1x640x128xbf16> to vector<640x128xbf16>
    %cst_18 = arith.constant dense<0.000000e+00> : vector<16x128xf32>
    %38 = tpu.matmul %35, %37, %cst_18 {dimension_numbers = #tpu.dot_dimension_numbers<[1], [0], [0], [1], [0, 0, 1, 1], [], []>} : vector<16x640xbf16>, vector<640x128xbf16>, vector<16x128xf32> -> vector<16x128xf32>
    %c1 = arith.constant 1 : index
    %c0_19 = arith.constant 0 : index
    %c0_20 = arith.constant 0 : index
    %39 = vector.load %arg6[%c1, %c0_19, %c0_20] : memref<7x1x128xf32, #tpu.memory_space<vmem>>, vector<1x1x128xf32>
    %40 = vector.shape_cast %39 : vector<1x1x128xf32> to vector<1x128xf32>
    %41 = vector.broadcast %40 : vector<1x128xf32> to vector<16x128xf32>
    %42 = arith.addf %38, %41 : vector<16x128xf32>
    %cst_21 = arith.constant 0.000000e+00 : f32
    %43 = vector.broadcast %cst_21 : f32 to vector<16x128xf32>
    %44 = arith.maximumf %42, %43 : vector<16x128xf32>
    %45 = arith.truncf %44 : vector<16x128xf32> to vector<16x128xbf16>
    %cst_22 = arith.constant 0.000000e+00 : bf16
    %46 = vector.broadcast %cst_22 : bf16 to vector<16x128xbf16>
    %cst_23 = arith.constant 0.000000e+00 : bf16
    %47 = vector.broadcast %cst_23 : bf16 to vector<12x128xbf16>
    %48 = vector.extract_strided_slice %45 {offsets = [0, 0], sizes = [4, 128], strides = [1, 1]} : vector<16x128xbf16> to vector<4x128xbf16>
    %49 = tpu.concatenate %47, %48 in 0 : vector<12x128xbf16>, vector<4x128xbf16> -> vector<16x128xbf16>
    %cst_24 = arith.constant 0.000000e+00 : bf16
    %50 = vector.broadcast %cst_24 : bf16 to vector<8x128xbf16>
    %51 = vector.extract_strided_slice %45 {offsets = [0, 0], sizes = [8, 128], strides = [1, 1]} : vector<16x128xbf16> to vector<8x128xbf16>
    %52 = tpu.concatenate %50, %51 in 0 : vector<8x128xbf16>, vector<8x128xbf16> -> vector<16x128xbf16>
    %cst_25 = arith.constant 0.000000e+00 : bf16
    %53 = vector.broadcast %cst_25 : bf16 to vector<4x128xbf16>
    %54 = vector.extract_strided_slice %45 {offsets = [0, 0], sizes = [12, 128], strides = [1, 1]} : vector<16x128xbf16> to vector<12x128xbf16>
    %55 = tpu.concatenate %53, %54 in 0 : vector<4x128xbf16>, vector<12x128xbf16> -> vector<16x128xbf16>
    %56 = tpu.concatenate %46, %49, %52, %55, %45 in 1 : vector<16x128xbf16>, vector<16x128xbf16>, vector<16x128xbf16>, vector<16x128xbf16>, vector<16x128xbf16> -> vector<16x640xbf16>
    %c1_26 = arith.constant 1 : index
    %c0_27 = arith.constant 0 : index
    %c0_28 = arith.constant 0 : index
    %57 = vector.load %arg5[%c1_26, %c0_27, %c0_28] : memref<6x640x128xbf16, #tpu.memory_space<vmem>>, vector<1x640x128xbf16>
    %58 = vector.shape_cast %57 : vector<1x640x128xbf16> to vector<640x128xbf16>
    %cst_29 = arith.constant dense<0.000000e+00> : vector<16x128xf32>
    %59 = tpu.matmul %56, %58, %cst_29 {dimension_numbers = #tpu.dot_dimension_numbers<[1], [0], [0], [1], [0, 0, 1, 1], [], []>} : vector<16x640xbf16>, vector<640x128xbf16>, vector<16x128xf32> -> vector<16x128xf32>
    %c2 = arith.constant 2 : index
    %c0_30 = arith.constant 0 : index
    %c0_31 = arith.constant 0 : index
    %60 = vector.load %arg6[%c2, %c0_30, %c0_31] : memref<7x1x128xf32, #tpu.memory_space<vmem>>, vector<1x1x128xf32>
    %61 = vector.shape_cast %60 : vector<1x1x128xf32> to vector<1x128xf32>
    %62 = vector.broadcast %61 : vector<1x128xf32> to vector<16x128xf32>
    %63 = arith.addf %59, %62 : vector<16x128xf32>
    %cst_32 = arith.constant 0.000000e+00 : f32
    %64 = vector.broadcast %cst_32 : f32 to vector<16x128xf32>
    %65 = arith.maximumf %63, %64 : vector<16x128xf32>
    %66 = arith.truncf %65 : vector<16x128xf32> to vector<16x128xbf16>
    %cst_33 = arith.constant 0.000000e+00 : bf16
    %67 = vector.broadcast %cst_33 : bf16 to vector<16x128xbf16>
    %cst_34 = arith.constant 0.000000e+00 : bf16
    %68 = vector.broadcast %cst_34 : bf16 to vector<16x128xbf16>
    %cst_35 = arith.constant 0.000000e+00 : bf16
    %69 = vector.broadcast %cst_35 : bf16 to vector<16x128xbf16>
    %cst_36 = arith.constant 0.000000e+00 : bf16
    %70 = vector.broadcast %cst_36 : bf16 to vector<8x128xbf16>
    %71 = vector.extract_strided_slice %66 {offsets = [0, 0], sizes = [8, 128], strides = [1, 1]} : vector<16x128xbf16> to vector<8x128xbf16>
    %72 = tpu.concatenate %70, %71 in 0 : vector<8x128xbf16>, vector<8x128xbf16> -> vector<16x128xbf16>
    %73 = tpu.concatenate %67, %68, %69, %72, %66 in 1 : vector<16x128xbf16>, vector<16x128xbf16>, vector<16x128xbf16>, vector<16x128xbf16>, vector<16x128xbf16> -> vector<16x640xbf16>
    %c2_37 = arith.constant 2 : index
    %c0_38 = arith.constant 0 : index
    %c0_39 = arith.constant 0 : index
    %74 = vector.load %arg5[%c2_37, %c0_38, %c0_39] : memref<6x640x128xbf16, #tpu.memory_space<vmem>>, vector<1x640x128xbf16>
    %75 = vector.shape_cast %74 : vector<1x640x128xbf16> to vector<640x128xbf16>
    %cst_40 = arith.constant dense<0.000000e+00> : vector<16x128xf32>
    %76 = tpu.matmul %73, %75, %cst_40 {dimension_numbers = #tpu.dot_dimension_numbers<[1], [0], [0], [1], [0, 0, 1, 1], [], []>} : vector<16x640xbf16>, vector<640x128xbf16>, vector<16x128xf32> -> vector<16x128xf32>
    %c3 = arith.constant 3 : index
    %c0_41 = arith.constant 0 : index
    %c0_42 = arith.constant 0 : index
    %77 = vector.load %arg6[%c3, %c0_41, %c0_42] : memref<7x1x128xf32, #tpu.memory_space<vmem>>, vector<1x1x128xf32>
    %78 = vector.shape_cast %77 : vector<1x1x128xf32> to vector<1x128xf32>
    %79 = vector.broadcast %78 : vector<1x128xf32> to vector<16x128xf32>
    %80 = arith.addf %76, %79 : vector<16x128xf32>
    %cst_43 = arith.constant 0.000000e+00 : f32
    %81 = vector.broadcast %cst_43 : f32 to vector<16x128xf32>
    %82 = arith.maximumf %80, %81 : vector<16x128xf32>
    %83 = arith.truncf %82 : vector<16x128xf32> to vector<16x128xbf16>
    %cst_44 = arith.constant 0.000000e+00 : bf16
    %84 = vector.broadcast %cst_44 : bf16 to vector<16x128xbf16>
    %cst_45 = arith.constant 0.000000e+00 : bf16
    %85 = vector.broadcast %cst_45 : bf16 to vector<16x128xbf16>
    %cst_46 = arith.constant 0.000000e+00 : bf16
    %86 = vector.broadcast %cst_46 : bf16 to vector<16x128xbf16>
    %cst_47 = arith.constant 0.000000e+00 : bf16
    %87 = vector.broadcast %cst_47 : bf16 to vector<16x128xbf16>
    %88 = tpu.concatenate %84, %85, %86, %87, %83 in 1 : vector<16x128xbf16>, vector<16x128xbf16>, vector<16x128xbf16>, vector<16x128xbf16>, vector<16x128xbf16> -> vector<16x640xbf16>
    %c3_48 = arith.constant 3 : index
    %c0_49 = arith.constant 0 : index
    %c0_50 = arith.constant 0 : index
    %89 = vector.load %arg5[%c3_48, %c0_49, %c0_50] : memref<6x640x128xbf16, #tpu.memory_space<vmem>>, vector<1x640x128xbf16>
    %90 = vector.shape_cast %89 : vector<1x640x128xbf16> to vector<640x128xbf16>
    %cst_51 = arith.constant dense<0.000000e+00> : vector<16x128xf32>
    %91 = tpu.matmul %88, %90, %cst_51 {dimension_numbers = #tpu.dot_dimension_numbers<[1], [0], [0], [1], [0, 0, 1, 1], [], []>} : vector<16x640xbf16>, vector<640x128xbf16>, vector<16x128xf32> -> vector<16x128xf32>
    %c4 = arith.constant 4 : index
    %c0_52 = arith.constant 0 : index
    %c0_53 = arith.constant 0 : index
    %92 = vector.load %arg6[%c4, %c0_52, %c0_53] : memref<7x1x128xf32, #tpu.memory_space<vmem>>, vector<1x1x128xf32>
    %93 = vector.shape_cast %92 : vector<1x1x128xf32> to vector<1x128xf32>
    %94 = vector.broadcast %93 : vector<1x128xf32> to vector<16x128xf32>
    %95 = arith.addf %91, %94 : vector<16x128xf32>
    %cst_54 = arith.constant 0.000000e+00 : f32
    %96 = vector.broadcast %cst_54 : f32 to vector<16x128xf32>
    %97 = arith.maximumf %95, %96 : vector<16x128xf32>
    %98 = arith.truncf %97 : vector<16x128xf32> to vector<16x128xbf16>
    %cst_55 = arith.constant 0.000000e+00 : bf16
    %99 = vector.broadcast %cst_55 : bf16 to vector<16x128xbf16>
    %cst_56 = arith.constant 0.000000e+00 : bf16
    %100 = vector.broadcast %cst_56 : bf16 to vector<16x128xbf16>
    %cst_57 = arith.constant 0.000000e+00 : bf16
    %101 = vector.broadcast %cst_57 : bf16 to vector<16x128xbf16>
    %cst_58 = arith.constant 0.000000e+00 : bf16
    %102 = vector.broadcast %cst_58 : bf16 to vector<16x128xbf16>
    %103 = tpu.concatenate %99, %100, %101, %102, %98 in 1 : vector<16x128xbf16>, vector<16x128xbf16>, vector<16x128xbf16>, vector<16x128xbf16>, vector<16x128xbf16> -> vector<16x640xbf16>
    %c4_59 = arith.constant 4 : index
    %c0_60 = arith.constant 0 : index
    %c0_61 = arith.constant 0 : index
    %104 = vector.load %arg5[%c4_59, %c0_60, %c0_61] : memref<6x640x128xbf16, #tpu.memory_space<vmem>>, vector<1x640x128xbf16>
    %105 = vector.shape_cast %104 : vector<1x640x128xbf16> to vector<640x128xbf16>
    %cst_62 = arith.constant dense<0.000000e+00> : vector<16x128xf32>
    %106 = tpu.matmul %103, %105, %cst_62 {dimension_numbers = #tpu.dot_dimension_numbers<[1], [0], [0], [1], [0, 0, 1, 1], [], []>} : vector<16x640xbf16>, vector<640x128xbf16>, vector<16x128xf32> -> vector<16x128xf32>
    %c5 = arith.constant 5 : index
    %c0_63 = arith.constant 0 : index
    %c0_64 = arith.constant 0 : index
    %107 = vector.load %arg6[%c5, %c0_63, %c0_64] : memref<7x1x128xf32, #tpu.memory_space<vmem>>, vector<1x1x128xf32>
    %108 = vector.shape_cast %107 : vector<1x1x128xf32> to vector<1x128xf32>
    %109 = vector.broadcast %108 : vector<1x128xf32> to vector<16x128xf32>
    %110 = arith.addf %106, %109 : vector<16x128xf32>
    %cst_65 = arith.constant 0.000000e+00 : f32
    %111 = vector.broadcast %cst_65 : f32 to vector<16x128xf32>
    %112 = arith.maximumf %110, %111 : vector<16x128xf32>
    %113 = arith.truncf %112 : vector<16x128xf32> to vector<16x128xbf16>
    %cst_66 = arith.constant 0.000000e+00 : bf16
    %114 = vector.broadcast %cst_66 : bf16 to vector<16x128xbf16>
    %cst_67 = arith.constant 0.000000e+00 : bf16
    %115 = vector.broadcast %cst_67 : bf16 to vector<16x128xbf16>
    %cst_68 = arith.constant 0.000000e+00 : bf16
    %116 = vector.broadcast %cst_68 : bf16 to vector<16x128xbf16>
    %cst_69 = arith.constant 0.000000e+00 : bf16
    %117 = vector.broadcast %cst_69 : bf16 to vector<16x128xbf16>
    %118 = tpu.concatenate %114, %115, %116, %117, %113 in 1 : vector<16x128xbf16>, vector<16x128xbf16>, vector<16x128xbf16>, vector<16x128xbf16>, vector<16x128xbf16> -> vector<16x640xbf16>
    %c5_70 = arith.constant 5 : index
    %c0_71 = arith.constant 0 : index
    %c0_72 = arith.constant 0 : index
    %119 = vector.load %arg5[%c5_70, %c0_71, %c0_72] : memref<6x640x128xbf16, #tpu.memory_space<vmem>>, vector<1x640x128xbf16>
    %120 = vector.shape_cast %119 : vector<1x640x128xbf16> to vector<640x128xbf16>
    %cst_73 = arith.constant dense<0.000000e+00> : vector<16x128xf32>
    %121 = tpu.matmul %118, %120, %cst_73 {dimension_numbers = #tpu.dot_dimension_numbers<[1], [0], [0], [1], [0, 0, 1, 1], [], []>} : vector<16x640xbf16>, vector<640x128xbf16>, vector<16x128xf32> -> vector<16x128xf32>
    %c6 = arith.constant 6 : index
    %c0_74 = arith.constant 0 : index
    %c0_75 = arith.constant 0 : index
    %122 = vector.load %arg6[%c6, %c0_74, %c0_75] : memref<7x1x128xf32, #tpu.memory_space<vmem>>, vector<1x1x128xf32>
    %123 = vector.shape_cast %122 : vector<1x1x128xf32> to vector<1x128xf32>
    %124 = vector.broadcast %123 : vector<1x128xf32> to vector<16x128xf32>
    %125 = arith.addf %121, %124 : vector<16x128xf32>
    %cst_76 = arith.constant 0.000000e+00 : f32
    %126 = vector.broadcast %cst_76 : f32 to vector<16x128xf32>
    %127 = arith.maximumf %125, %126 : vector<16x128xf32>
    %128 = vector.extract_strided_slice %127 {offsets = [15, 0], sizes = [1, 128], strides = [1, 1]} : vector<16x128xf32> to vector<1x128xf32>
    %c0_77 = arith.constant 0 : index
    %c0_78 = arith.constant 0 : index
    %129 = vector.load %arg7[%c0_77, %c0_78] : memref<128x64xf32, #tpu.memory_space<vmem>>, vector<128x64xf32>
    %cst_79 = arith.constant dense<0.000000e+00> : vector<1x64xf32>
    %130 = tpu.matmul %128, %129, %cst_79 {dimension_numbers = #tpu.dot_dimension_numbers<[1], [0], [0], [1], [0, 0, 1, 1], [], []>} : vector<1x128xf32>, vector<128x64xf32>, vector<1x64xf32> -> vector<1x64xf32>
    %c0_80 = arith.constant 0 : index
    %c0_81 = arith.constant 0 : index
    %c0_82 = arith.constant 0 : index
    %131 = vector.load %arg3[%c0_80, %c0_81, %c0_82] : memref<1x1x64xf32, #tpu.memory_space<vmem>>, vector<1x1x64xf32>
    %132 = vector.shape_cast %131 : vector<1x1x64xf32> to vector<1x64xf32>
    %133 = arith.addf %130, %132 : vector<1x64xf32>
    %cst_83 = arith.constant 0.000000e+00 : f32
    %134 = vector.broadcast %cst_83 : f32 to vector<1x64xf32>
    %135 = arith.maximumf %133, %134 : vector<1x64xf32>
    %c0_84 = arith.constant 0 : index
    %c0_85 = arith.constant 0 : index
    %136 = vector.load %arg8[%c0_84, %c0_85] : memref<64x32xf32, #tpu.memory_space<vmem>>, vector<64x32xf32>
    %cst_86 = arith.constant dense<0.000000e+00> : vector<1x32xf32>
    %137 = tpu.matmul %135, %136, %cst_86 {dimension_numbers = #tpu.dot_dimension_numbers<[1], [0], [0], [1], [0, 0, 1, 1], [], []>} : vector<1x64xf32>, vector<64x32xf32>, vector<1x32xf32> -> vector<1x32xf32>
    %c0_87 = arith.constant 0 : index
    %c0_88 = arith.constant 0 : index
    %138 = vector.load %arg9[%c0_87, %c0_88] : memref<1x32xf32, #tpu.memory_space<vmem>>, vector<1x32xf32>
    %139 = arith.addf %137, %138 : vector<1x32xf32>
    %cst_89 = arith.constant 0.000000e+00 : f32
    %140 = vector.broadcast %cst_89 : f32 to vector<1x32xf32>
    %141 = arith.maximumf %139, %140 : vector<1x32xf32>
    %c0_90 = arith.constant 0 : index
    %c0_91 = arith.constant 0 : index
    %142 = vector.load %arg10[%c0_90, %c0_91] : memref<32x128xf32, #tpu.memory_space<vmem>>, vector<32x128xf32>
    %cst_92 = arith.constant dense<0.000000e+00> : vector<1x128xf32>
    %143 = tpu.matmul %141, %142, %cst_92 {dimension_numbers = #tpu.dot_dimension_numbers<[1], [0], [0], [1], [0, 0, 1, 1], [], []>} : vector<1x32xf32>, vector<32x128xf32>, vector<1x128xf32> -> vector<1x128xf32>
    %c0_93 = arith.constant 0 : index
    %c0_94 = arith.constant 0 : index
    %144 = vector.load %arg11[%c0_93, %c0_94] : memref<1x128xf32, #tpu.memory_space<vmem>>, vector<1x128xf32>
    %145 = arith.addf %143, %144 : vector<1x128xf32>
    %c0_95 = arith.constant 0 : index
    %c0_96 = arith.constant 0 : index
    %c0_97 = arith.constant 0 : index
    %146 = vector.load %arg12[%c0_95, %c0_96, %c0_97] : memref<1x1x128xf32, #tpu.memory_space<vmem>>, vector<1x1x128xf32>
    %147 = vector.shape_cast %146 : vector<1x1x128xf32> to vector<1x128xf32>
    %148 = vector.shape_cast %145 : vector<1x128xf32> to vector<1x1x128xf32>
    tpu.vector_store %arg12[%c0_95, %c0_96, %c0_97], %148 {strides = array<i32>} : memref<1x1x128xf32, #tpu.memory_space<vmem>>, vector<1x1x128xf32>,
    return
  }
  func.func @transform_0(%arg0: i32) -> (i32, i32) {
    %c0_i32 = arith.constant 0 : i32
    %c0_i32_0 = arith.constant 0 : i32
    return %arg0, %c0_i32 : i32, i32
  }
  func.func @transform_1(%arg0: i32) -> (i32, i32) {
    %c0_i32 = arith.constant 0 : i32
    %c0_i32_0 = arith.constant 0 : i32
    %c0_i32_1 = arith.constant 0 : i32
    return %c0_i32, %c0_i32_0 : i32, i32
  }
  func.func @transform_2(%arg0: i32) -> (i32, i32, i32) {
    %c0_i32 = arith.constant 0 : i32
    %c0_i32_0 = arith.constant 0 : i32
    %c0_i32_1 = arith.constant 0 : i32
    return %arg0, %c0_i32, %c0_i32_0 : i32, i32, i32
  }
  func.func @transform_3(%arg0: i32) -> (i32, i32) {
    %c0_i32 = arith.constant 0 : i32
    %c0_i32_0 = arith.constant 0 : i32
    %c0_i32_1 = arith.constant 0 : i32
    return %c0_i32, %c0_i32_0 : i32, i32
  }
  func.func @transform_4(%arg0: i32) -> (i32, i32, i32) {
    %c0_i32 = arith.constant 0 : i32
    %c0_i32_0 = arith.constant 0 : i32
    %c0_i32_1 = arith.constant 0 : i32
    %c0_i32_2 = arith.constant 0 : i32
    return %c0_i32, %c0_i32_0, %c0_i32_1 : i32, i32, i32
  }
  func.func @transform_5(%arg0: i32) -> (i32, i32, i32) {
    %c0_i32 = arith.constant 0 : i32
    %c0_i32_0 = arith.constant 0 : i32
    %c0_i32_1 = arith.constant 0 : i32
    %c0_i32_2 = arith.constant 0 : i32
    return %c0_i32, %c0_i32_0, %c0_i32_1 : i32, i32, i32
  }
  func.func @transform_6(%arg0: i32) -> (i32, i32) {
    %c0_i32 = arith.constant 0 : i32
    %c0_i32_0 = arith.constant 0 : i32
    %c0_i32_1 = arith.constant 0 : i32
    return %c0_i32, %c0_i32_0 : i32, i32
  }
  func.func @transform_7(%arg0: i32) -> (i32, i32) {
    %c0_i32 = arith.constant 0 : i32
    %c0_i32_0 = arith.constant 0 : i32
    %c0_i32_1 = arith.constant 0 : i32
    return %c0_i32, %c0_i32_0 : i32, i32
  }
  func.func @transform_8(%arg0: i32) -> (i32, i32) {
    %c0_i32 = arith.constant 0 : i32
    %c0_i32_0 = arith.constant 0 : i32
    %c0_i32_1 = arith.constant 0 : i32
    return %c0_i32, %c0_i32_0 : i32, i32
  }
  func.func @transform_9(%arg0: i32) -> (i32, i32) {
    %c0_i32 = arith.constant 0 : i32
    %c0_i32_0 = arith.constant 0 : i32
    %c0_i32_1 = arith.constant 0 : i32
    return %c0_i32, %c0_i32_0 : i32, i32
  }
  func.func @transform_10(%arg0: i32) -> (i32, i32) {
    %c0_i32 = arith.constant 0 : i32
    %c0_i32_0 = arith.constant 0 : i32
    %c0_i32_1 = arith.constant 0 : i32
    return %c0_i32, %c0_i32_0 : i32, i32
  }
  func.func @transform_11(%arg0: i32) -> (i32, i32, i32) {
    %c0_i32 = arith.constant 0 : i32
    %c0_i32_0 = arith.constant 0 : i32
    %c0_i32_1 = arith.constant 0 : i32
    return %arg0, %c0_i32, %c0_i32_0 : i32, i32, i32
  }
}

</mosaic_0001>

<llo_original>
// kernel: tpu_custom_call.1
$region0: #{tpu_custom_call.1}
  #allocation0 [shape = 'u32[]', space=smem, size = 0x4, offset = 0x4, fixed_abs, tag = 'smem constant byte address 0x4 - core index']
  #allocation1 [shape = 'u32[144,128]{1,0:T(1,128)}', space=vmem, size = 0x12000, scoped, tag = 'internal scratch']
  %s0 = inlined_call_operand.vmem [shape: bf16[32,384], index: 0, kind: input, shape index: {}]
  %s1 = inlined_call_operand.vmem [shape: s32[16,1], index: 1, kind: input, shape index: {}]
  %s2 = inlined_call_operand.vmem [shape: f32[2,1,64], index: 2, kind: input, shape index: {}]
  %s3 = inlined_call_operand.hbm [shape: bf16[1920,128], index: 3, kind: input, shape index: {}]
  %s4 = inlined_call_operand.hbm [shape: bf16[6,640,128], index: 4, kind: input, shape index: {}]
  %s5 = inlined_call_operand.vmem [shape: f32[7,1,128], index: 5, kind: input, shape index: {}]
  %s6 = inlined_call_operand.vmem [shape: f32[128,64], index: 6, kind: input, shape index: {}]
  %s7 = inlined_call_operand.vmem [shape: f32[64,32], index: 7, kind: input, shape index: {}]
  %s8 = inlined_call_operand.vmem [shape: f32[1,32], index: 8, kind: input, shape index: {}]
  %s9 = inlined_call_operand.vmem [shape: f32[32,128], index: 9, kind: input, shape index: {}]
  %s10 = inlined_call_operand.vmem [shape: f32[1,128], index: 10, kind: input, shape index: {}]
  %s11 = inlined_call_operand.hbm [shape: f32[2,1,128], index: 11, kind: output, shape index: {}]
  %s12 = sld [smem:[#allocation0]]
  $region85: #{tpu_custom_call.1} parent=0
    _
  %s14 = ssub.s32 1, %s12
  %s15 = scalar_select 0, %s14, %s12
  $region1: #{tpu_custom_call.1} parent=0
    #allocation2 [shape = 'u8[491520]{0}', space=vmem, size = 0x78000, scoped, tag = 'input window, operand 3, single buffered']
    #allocation3 [shape = 's32[2]{0}', space=sflag, size = 0x8, scoped, tag = 'scoped memory for tpu_custom_call.1']
    #allocation4 [shape = 's32[2]{0}', space=sflag, size = 0x8, scoped, tag = 'scoped memory for tpu_custom_call.1']
    #allocation5 [shape = 'u8[983040]{0}', space=vmem, size = 0xf0000, scoped, tag = 'input window, operand 4, single buffered']
    #allocation6 [shape = 's32[1]{0}', space=sflag, size = 0x4, scoped, tag = 'scoped memory for tpu_custom_call.1']
    #allocation7 [shape = 'u8[1024]{0}', space=vmem, size = 0x400, scoped, tag = 'output window, operand 0']
    %16 = vsyncpa [#allocation3], 0
    %17 = vsyncpa [#allocation6], 0
    %18 = vsyncpa [#allocation4], 0
    %s19 = scalar_lea.sflag [#allocation4], 1
    %20 = vsyncpa %s19, 0
    loop: start=0, step=1, limit=4
    $region2: #{tpu_custom_call.1} parent=1 // loop_pre_header
      _
    $region3: #{tpu_custom_call.1} parent=1 // loop_header
      %s22 = sphi 0, %s26
      %p23 = scmp.ge.s32.totalorder %s22, 4
      %s32 = sphi 0, %s34
      %s35 = sphi 0, %s32
      %s36 = sphi 0, %s35
      %s52 = sphi 0, %s36
      %s56 = sphi 0, %s56
      %s58 = sphi 0, %s56
      %s59 = sphi 0, %s58
      %s73 = sphi 0, %s59
      %s79 = sphi 0, %s81
      %s82 = sphi 0, %s79
      %s83 = sphi 0, %s82
      %s99 = sphi 0, %s83
      %s103 = sphi 0, %s103
      %s105 = sphi 0, %s103
      %s106 = sphi 0, %s105
      %s120 = sphi 0, %s106
      %s124 = sphi 0, %s124
      %s126 = sphi 0, %s124
      %s127 = sphi 0, %s126
      %s141 = sphi 0, %s127
      %s145 = sphi 0, %s145
      %s147 = sphi 0, %s145
      %s148 = sphi 0, %s147
      %s162 = sphi 0, %s148
      %s166 = sphi 0, %s166
      %s168 = sphi 0, %s166
      %s169 = sphi 0, %s168
      %s183 = sphi 0, %s169
      %s187 = sphi 0, %s187
      %s189 = sphi 0, %s187
      %s190 = sphi 0, %s189
      %s204 = sphi 0, %s190
      %s208 = sphi 0, %s208
      %s210 = sphi 0, %s208
      %s211 = sphi 0, %s210
      %s225 = sphi 0, %s211
      %s229 = sphi 0, %s229
      %s231 = sphi 0, %s229
      %s232 = sphi 0, %s231
      %s246 = sphi 0, %s232
      %s250 = sphi 0, %s250
      %s252 = sphi 0, %s250
      %s253 = sphi 0, %s252
      %s267 = sphi 0, %s253
      %s273 = sphi 0, %s275
      %s276 = sphi 0, %s273
      %s277 = sphi 0, %s276
      %s293 = sphi 0, %s277
    $region4: #{tpu_custom_call.1} parent=1 // loop_header_branch
      %25 = sbr.rel (%p23) target = $region8
    $region5: #{tpu_custom_call.1} parent=1 // loop_body
      %s27 = ssub.s32 %s22, 1
      %s28 = ssub.s32 %s22, 2
      %s29 = sadd.s32 %s22, 1
      %s30 = ssub.s32 %s22, %s29
      %p31 = scmp.eq.s32.totalorder %s30, 0
      %s33 = sadd.s32 %s32, 1
      %s34 = scalar_select %p31, %s32, %s33
      %p37 = pneg %p31
      %p38 = scmp.eq.s32.totalorder %s22, 1
      %p39 = por %p37, %p38
      %p40 = scmp.ne.s32.totalorder %s32, %s35
      %p41 = scmp.eq.s32.totalorder %s22, 0
      %p42 = por %p40, %p41
      %p43 = scmp.ne.s32.totalorder %s32, %s35
      %p44 = scmp.eq.s32.totalorder %s27, 1
      %p45 = por %p43, %p44
      %p46 = scmp.ne.s32.totalorder %s35, %s36
      %p47 = scmp.eq.s32.totalorder %s27, 0
      %p48 = por %p46, %p47
      %p49 = scmp.ne.s32.totalorder %s35, %s36
      %p50 = scmp.eq.s32.totalorder %s28, 1
      %p51 = por %p49, %p50
      %p53 = scmp.ne.s32.totalorder %s36, %s52
      %p54 = scmp.eq.s32.totalorder %s28, 0
      %p55 = por %p53, %p54
      %s57 = sadd.s32 %s56, 1
      %p60 = scmp.eq.s32.totalorder %s22, 1
      %p61 = scmp.ne.s32.totalorder %s56, %s58
      %p62 = scmp.eq.s32.totalorder %s22, 0
      %p63 = por %p61, %p62
      %p64 = scmp.ne.s32.totalorder %s56, %s58
      %p65 = scmp.eq.s32.totalorder %s27, 1
      %p66 = por %p64, %p65
      %p67 = scmp.ne.s32.totalorder %s58, %s59
      %p68 = scmp.eq.s32.totalorder %s27, 0
      %p69 = por %p67, %p68
      %p70 = scmp.ne.s32.totalorder %s58, %s59
      %p71 = scmp.eq.s32.totalorder %s28, 1
      %p72 = por %p70, %p71
      %p74 = scmp.ne.s32.totalorder %s59, %s73
      %p75 = scmp.eq.s32.totalorder %s28, 0
      %p76 = por %p74, %p75
      %s77 = ssub.s32 %s22, %s29
      %p78 = scmp.eq.s32.totalorder %s77, 0
      %s80 = sadd.s32 %s79, 1
      %s81 = scalar_select %p78, %s79, %s80
      %p84 = pneg %p78
      %p85 = scmp.eq.s32.totalorder %s22, 1
      %p86 = por %p84, %p85
      %p87 = scmp.ne.s32.totalorder %s79, %s82
      %p88 = scmp.eq.s32.totalorder %s22, 0
      %p89 = por %p87, %p88
      %p90 = scmp.ne.s32.totalorder %s79, %s82
      %p91 = scmp.eq.s32.totalorder %s27, 1
      %p92 = por %p90, %p91
      %p93 = scmp.ne.s32.totalorder %s82, %s83
      %p94 = scmp.eq.s32.totalorder %s27, 0
      %p95 = por %p93, %p94
      %p96 = scmp.ne.s32.totalorder %s82, %s83
      %p97 = scmp.eq.s32.totalorder %s28, 1
      %p98 = por %p96, %p97
      %p100 = scmp.ne.s32.totalorder %s83, %s99
      %p101 = scmp.eq.s32.totalorder %s28, 0
      %p102 = por %p100, %p101
      %s104 = sadd.s32 %s103, 1
      %p107 = scmp.eq.s32.totalorder %s22, 1
      %p108 = scmp.ne.s32.totalorder %s103, %s105
      %p109 = scmp.eq.s32.totalorder %s22, 0
      %p110 = por %p108, %p109
      %p111 = scmp.ne.s32.totalorder %s103, %s105
      %p112 = scmp.eq.s32.totalorder %s27, 1
      %p113 = por %p111, %p112
      %p114 = scmp.ne.s32.totalorder %s105, %s106
      %p115 = scmp.eq.s32.totalorder %s27, 0
      %p116 = por %p114, %p115
      %p117 = scmp.ne.s32.totalorder %s105, %s106
      %p118 = scmp.eq.s32.totalorder %s28, 1
      %p119 = por %p117, %p118
      %p121 = scmp.ne.s32.totalorder %s106, %s120
      %p122 = scmp.eq.s32.totalorder %s28, 0
      %p123 = por %p121, %p122
      %s125 = sadd.s32 %s124, 1
      %p128 = scmp.eq.s32.totalorder %s22, 1
      %p129 = scmp.ne.s32.totalorder %s124, %s126
      %p130 = scmp.eq.s32.totalorder %s22, 0
      %p131 = por %p129, %p130
      %p132 = scmp.ne.s32.totalorder %s124, %s126
      %p133 = scmp.eq.s32.totalorder %s27, 1
      %p134 = por %p132, %p133
      %p135 = scmp.ne.s32.totalorder %s126, %s127
      %p136 = scmp.eq.s32.totalorder %s27, 0
      %p137 = por %p135, %p136
      %p138 = scmp.ne.s32.totalorder %s126, %s127
      %p139 = scmp.eq.s32.totalorder %s28, 1
      %p140 = por %p138, %p139
      %p142 = scmp.ne.s32.totalorder %s127, %s141
      %p143 = scmp.eq.s32.totalorder %s28, 0
      %p144 = por %p142, %p143
      %s146 = sadd.s32 %s145, 1
      %p149 = scmp.eq.s32.totalorder %s22, 1
      %p150 = scmp.ne.s32.totalorder %s145, %s147
      %p151 = scmp.eq.s32.totalorder %s22, 0
      %p152 = por %p150, %p151
      %p153 = scmp.ne.s32.totalorder %s145, %s147
      %p154 = scmp.eq.s32.totalorder %s27, 1
      %p155 = por %p153, %p154
      %p156 = scmp.ne.s32.totalorder %s147, %s148
      %p157 = scmp.eq.s32.totalorder %s27, 0
      %p158 = por %p156, %p157
      %p159 = scmp.ne.s32.totalorder %s147, %s148
      %p160 = scmp.eq.s32.totalorder %s28, 1
      %p161 = por %p159, %p160
      %p163 = scmp.ne.s32.totalorder %s148, %s162
      %p164 = scmp.eq.s32.totalorder %s28, 0
      %p165 = por %p163, %p164
      %s167 = sadd.s32 %s166, 1
      %p170 = scmp.eq.s32.totalorder %s22, 1
      %p171 = scmp.ne.s32.totalorder %s166, %s168
      %p172 = scmp.eq.s32.totalorder %s22, 0
      %p173 = por %p171, %p172
      %p174 = scmp.ne.s32.totalorder %s166, %s168
      %p175 = scmp.eq.s32.totalorder %s27, 1
      %p176 = por %p174, %p175
      %p177 = scmp.ne.s32.totalorder %s168, %s169
      %p178 = scmp.eq.s32.totalorder %s27, 0
      %p179 = por %p177, %p178
      %p180 = scmp.ne.s32.totalorder %s168, %s169
      %p181 = scmp.eq.s32.totalorder %s28, 1
      %p182 = por %p180, %p181
      %p184 = scmp.ne.s32.totalorder %s169, %s183
      %p185 = scmp.eq.s32.totalorder %s28, 0
      %p186 = por %p184, %p185
      %s188 = sadd.s32 %s187, 1
      %p191 = scmp.eq.s32.totalorder %s22, 1
      %p192 = scmp.ne.s32.totalorder %s187, %s189
      %p193 = scmp.eq.s32.totalorder %s22, 0
      %p194 = por %p192, %p193
      %p195 = scmp.ne.s32.totalorder %s187, %s189
      %p196 = scmp.eq.s32.totalorder %s27, 1
      %p197 = por %p195, %p196
      %p198 = scmp.ne.s32.totalorder %s189, %s190
      %p199 = scmp.eq.s32.totalorder %s27, 0
      %p200 = por %p198, %p199
      %p201 = scmp.ne.s32.totalorder %s189, %s190
      %p202 = scmp.eq.s32.totalorder %s28, 1
      %p203 = por %p201, %p202
      %p205 = scmp.ne.s32.totalorder %s190, %s204
      %p206 = scmp.eq.s32.totalorder %s28, 0
      %p207 = por %p205, %p206
      %s209 = sadd.s32 %s208, 1
      %p212 = scmp.eq.s32.totalorder %s22, 1
      %p213 = scmp.ne.s32.totalorder %s208, %s210
      %p214 = scmp.eq.s32.totalorder %s22, 0
      %p215 = por %p213, %p214
      %p216 = scmp.ne.s32.totalorder %s208, %s210
      %p217 = scmp.eq.s32.totalorder %s27, 1
      %p218 = por %p216, %p217
      %p219 = scmp.ne.s32.totalorder %s210, %s211
      %p220 = scmp.eq.s32.totalorder %s27, 0
      %p221 = por %p219, %p220
      %p222 = scmp.ne.s32.totalorder %s210, %s211
      %p223 = scmp.eq.s32.totalorder %s28, 1
      %p224 = por %p222, %p223
      %p226 = scmp.ne.s32.totalorder %s211, %s225
      %p227 = scmp.eq.s32.totalorder %s28, 0
      %p228 = por %p226, %p227
      %s230 = sadd.s32 %s229, 1
      %p233 = scmp.eq.s32.totalorder %s22, 1
      %p234 = scmp.ne.s32.totalorder %s229, %s231
      %p235 = scmp.eq.s32.totalorder %s22, 0
      %p236 = por %p234, %p235
      %p237 = scmp.ne.s32.totalorder %s229, %s231
      %p238 = scmp.eq.s32.totalorder %s27, 1
      %p239 = por %p237, %p238
      %p240 = scmp.ne.s32.totalorder %s231, %s232
      %p241 = scmp.eq.s32.totalorder %s27, 0
      %p242 = por %p240, %p241
      %p243 = scmp.ne.s32.totalorder %s231, %s232
      %p244 = scmp.eq.s32.totalorder %s28, 1
      %p245 = por %p243, %p244
      %p247 = scmp.ne.s32.totalorder %s232, %s246
      %p248 = scmp.eq.s32.totalorder %s28, 0
      %p249 = por %p247, %p248
      %s251 = sadd.s32 %s250, 1
      %p254 = scmp.eq.s32.totalorder %s22, 1
      %p255 = scmp.ne.s32.totalorder %s250, %s252
      %p256 = scmp.eq.s32.totalorder %s22, 0
      %p257 = por %p255, %p256
      %p258 = scmp.ne.s32.totalorder %s250, %s252
      %p259 = scmp.eq.s32.totalorder %s27, 1
      %p260 = por %p258, %p259
      %p261 = scmp.ne.s32.totalorder %s252, %s253
      %p262 = scmp.eq.s32.totalorder %s27, 0
      %p263 = por %p261, %p262
      %p264 = scmp.ne.s32.totalorder %s252, %s253
      %p265 = scmp.eq.s32.totalorder %s28, 1
      %p266 = por %p264, %p265
      %p268 = scmp.ne.s32.totalorder %s253, %s267
      %p269 = scmp.eq.s32.totalorder %s28, 0
      %p270 = por %p268, %p269
      %s271 = ssub.s32 %s22, %s29
      %p272 = scmp.eq.s32.totalorder %s271, 0
      %s274 = sadd.s32 %s273, 1
      %s275 = scalar_select %p272, %s273, %s274
      %p278 = pneg %p272
      %p279 = scmp.eq.s32.totalorder %s22, 1
      %p280 = por %p278, %p279
      %p281 = scmp.ne.s32.totalorder %s273, %s276
      %p282 = scmp.eq.s32.totalorder %s22, 0
      %p283 = por %p281, %p282
      %p284 = scmp.ne.s32.totalorder %s273, %s276
      %p285 = scmp.eq.s32.totalorder %s27, 1
      %p286 = por %p284, %p285
      %p287 = scmp.ne.s32.totalorder %s276, %s277
      %p288 = scmp.eq.s32.totalorder %s27, 0
      %p289 = por %p287, %p288
      %p290 = scmp.ne.s32.totalorder %s276, %s277
      %p291 = scmp.eq.s32.totalorder %s28, 1
      %p292 = por %p290, %p291
      %p294 = scmp.ne.s32.totalorder %s277, %s293
      %p295 = scmp.eq.s32.totalorder %s28, 0
      %p296 = por %p294, %p295
      %p297 = scmp.le.s32.totalorder 1, %s22
      %p298 = scmp.lt.s32.totalorder %s22, 3
      %p299 = pnand %p297, %p298
      %p300 = pneg %p299
      // Predicated region
      $region9: #{tpu_custom_call.1} parent=5 // pred_check
        _
      $region10: #{tpu_custom_call.1} parent=5 // pred_check_branch
        %302 = sbr.rel (%p299) target = $region12
      $region11: #{tpu_custom_call.1} parent=5 // pred_region
        %s303 = ssub.s32 %s22, 1
        // Predicated region
        $region13: #{tpu_custom_call.1} parent=11 // pred_check
          %p304 = pneg %p69
        $region14: #{tpu_custom_call.1} parent=11 // pred_check_branch
          %306 = sbr.rel (%p304) target = $region16
        $region15: #{tpu_custom_call.1} parent=11 // pred_region
          _
        $region16: #{tpu_custom_call.1} parent=11 // pred_fallthru
          _
        // Predicated region
        $region17: #{tpu_custom_call.1} parent=11 // pred_check
          %p307 = pneg %p116
        $region18: #{tpu_custom_call.1} parent=11 // pred_check_branch
          %309 = sbr.rel (%p307) target = $region20
        $region19: #{tpu_custom_call.1} parent=11 // pred_region
          %s311 = ssub.s32 15360, 15360
          %312 = vsyncadd [#allocation3], %s311
          %s313 = sshll.u32 [#allocation2], 4
          %s314 = int_to_ptr.vmem [resolvable:$true] %s313
          %319 = dma.hbm_to_vmem [thread:$0]  %s3, 15360, %s314, [#allocation3], 64, 64, 4
        $region20: #{tpu_custom_call.1} parent=11 // pred_fallthru
          _
        // Predicated region
        $region21: #{tpu_custom_call.1} parent=11 // pred_check
          %p320 = pneg %p137
        $region22: #{tpu_custom_call.1} parent=11 // pred_check_branch
          %322 = sbr.rel (%p320) target = $region24
        $region23: #{tpu_custom_call.1} parent=11 // pred_region
          %s324 = ssub.s32 30720, 30720
          %325 = vsyncadd [#allocation6], %s324
          %s326 = sshll.u32 [#allocation5], 4
          %s327 = int_to_ptr.vmem [resolvable:$true] %s326
          %332 = dma.hbm_to_vmem [thread:$0]  %s4, 30720, %s327, [#allocation6], 64, 64, 4
        $region24: #{tpu_custom_call.1} parent=11 // pred_fallthru
          _
        // Predicated region
        $region25: #{tpu_custom_call.1} parent=11 // pred_check
          %p333 = pneg %p158
        $region26: #{tpu_custom_call.1} parent=11 // pred_check_branch
          %335 = sbr.rel (%p333) target = $region28
        $region27: #{tpu_custom_call.1} parent=11 // pred_region
          _
        $region28: #{tpu_custom_call.1} parent=11 // pred_fallthru
          _
        // Predicated region
        $region29: #{tpu_custom_call.1} parent=11 // pred_check
          %p336 = pneg %p179
        $region30: #{tpu_custom_call.1} parent=11 // pred_check_branch
          %338 = sbr.rel (%p336) target = $region32
        $region31: #{tpu_custom_call.1} parent=11 // pred_region
          _
        $region32: #{tpu_custom_call.1} parent=11 // pred_fallthru
          _
        // Predicated region
        $region33: #{tpu_custom_call.1} parent=11 // pred_check
          %p339 = pneg %p200
        $region34: #{tpu_custom_call.1} parent=11 // pred_check_branch
          %341 = sbr.rel (%p339) target = $region36
        $region35: #{tpu_custom_call.1} parent=11 // pred_region
          _
        $region36: #{tpu_custom_call.1} parent=11 // pred_fallthru
          _
        // Predicated region
        $region37: #{tpu_custom_call.1} parent=11 // pred_check
          %p342 = pneg %p221
        $region38: #{tpu_custom_call.1} parent=11 // pred_check_branch
          %344 = sbr.rel (%p342) target = $region40
        $region39: #{tpu_custom_call.1} parent=11 // pred_region
          _
        $region40: #{tpu_custom_call.1} parent=11 // pred_fallthru
          _
        // Predicated region
        $region41: #{tpu_custom_call.1} parent=11 // pred_check
          %p345 = pneg %p242
        $region42: #{tpu_custom_call.1} parent=11 // pred_check_branch
          %347 = sbr.rel (%p345) target = $region44
        $region43: #{tpu_custom_call.1} parent=11 // pred_region
          _
        $region44: #{tpu_custom_call.1} parent=11 // pred_fallthru
          _
        // Predicated region
        $region45: #{tpu_custom_call.1} parent=11 // pred_check
          %p348 = pneg %p263
        $region46: #{tpu_custom_call.1} parent=11 // pred_check_branch
          %350 = sbr.rel (%p348) target = $region48
        $region47: #{tpu_custom_call.1} parent=11 // pred_region
          _
        $region48: #{tpu_custom_call.1} parent=11 // pred_fallthru
          _
      $region12: #{tpu_custom_call.1} parent=5 // pred_fallthru
        _
      %p351 = scmp.lt.s32.totalorder %s22, 2
      // Predicated region
      $region49: #{tpu_custom_call.1} parent=5 // pred_check
        %p352 = pneg %p351
      $region50: #{tpu_custom_call.1} parent=5 // pred_check_branch
        %354 = sbr.rel (%p352) target = $region52
      $region51: #{tpu_custom_call.1} parent=5 // pred_region
        // Predicated region
        $region53: #{tpu_custom_call.1} parent=51 // pred_check
          %p355 = pneg %p42
        $region54: #{tpu_custom_call.1} parent=51 // pred_check_branch
          %357 = sbr.rel (%p355) target = $region56
        $region55: #{tpu_custom_call.1} parent=51 // pred_region
          %s358 = smul.u32 2, %s22
          %p359 = scmp.lt.s32.totalorder %s358, 3
          %s360 = scalar_select %p359, %s358, 3
          %s361 = smul.addr %s360, 3
          %s362 = smul.addr %s361, 4
          %s363 = scalar_lea.vmem %s0, %s362
          %s364 = smul.u32 2, %s22
        $region56: #{tpu_custom_call.1} parent=51 // pred_fallthru
          _
        // Predicated region
        $region57: #{tpu_custom_call.1} parent=51 // pred_check
          %p365 = pneg %p89
        $region58: #{tpu_custom_call.1} parent=51 // pred_check_branch
          %367 = sbr.rel (%p365) target = $region60
        $region59: #{tpu_custom_call.1} parent=51 // pred_region
          %p368 = scmp.lt.s32.totalorder %s22, 1
          %s369 = scalar_select %p368, %s22, 1
          %s370 = scalar_lea.vmem %s2, %s369
        $region60: #{tpu_custom_call.1} parent=51 // pred_fallthru
          _
      $region52: #{tpu_custom_call.1} parent=5 // pred_fallthru
        _
      %p371 = scmp.le.s32.totalorder 1, %s22
      %p372 = scmp.lt.s32.totalorder %s22, 3
      %p373 = pnand %p371, %p372
      %p374 = pneg %p373
      // Predicated region
      $region61: #{tpu_custom_call.1} parent=5 // pred_check
        _
      $region62: #{tpu_custom_call.1} parent=5 // pred_check_branch
        %376 = sbr.rel (%p373) target = $region64
      $region63: #{tpu_custom_call.1} parent=5 // pred_region
        %s377 = ssub.s32 %s22, 1
        // Predicated region
        $region65: #{tpu_custom_call.1} parent=63 // pred_check
          %p378 = pneg %p116
        $region66: #{tpu_custom_call.1} parent=63 // pred_check_branch
          %380 = sbr.rel (%p378) target = $region68
        $region67: #{tpu_custom_call.1} parent=63 // pred_region
          %381 = dma.done [#allocation3], 15360
        $region68: #{tpu_custom_call.1} parent=63 // pred_fallthru
          _
        // Predicated region
        $region69: #{tpu_custom_call.1} parent=63 // pred_check
          %p382 = pneg %p137
        $region70: #{tpu_custom_call.1} parent=63 // pred_check_branch
          %384 = sbr.rel (%p382) target = $region72
        $region71: #{tpu_custom_call.1} parent=63 // pred_region
          %385 = dma.done [#allocation6], 30720
        $region72: #{tpu_custom_call.1} parent=63 // pred_fallthru
          _
        %s386 = smul.u32 2, %s27
        %p387 = scmp.lt.s32.totalorder %s386, 3
        %s388 = scalar_select %p387, %s386, 3
        %s389 = smul.addr %s388, 3
        %s390 = smul.addr %s389, 4
        %s391 = scalar_lea.vmem %s0, %s390
        %p392 = pneg %p48
        %p393 = pneg %p45
        %p394 = pneg %p69
        %p395 = pneg %p66
        %p396 = scmp.lt.s32.totalorder %s27, 1
        %s397 = scalar_select %p396, %s27, 1
        %s398 = scalar_lea.vmem %s2, %s397
        %p399 = pneg %p95
        %p400 = pneg %p92
        %p401 = pneg %p116
        %p402 = pneg %p113
        %p403 = pneg %p137
        %p404 = pneg %p134
        %p405 = pneg %p158
        %p406 = pneg %p155
        %p407 = pneg %p179
        %p408 = pneg %p176
        %p409 = pneg %p200
        %p410 = pneg %p197
        %p411 = pneg %p221
        %p412 = pneg %p218
        %p413 = pneg %p242
        %p414 = pneg %p239
        %p415 = pneg %p263
        %p416 = pneg %p260
        %p417 = pneg %p289
        %p418 = pneg %p286
        %s419 = sand.u32 %s276, 1
        %s420 = scalar_lea.sflag [#allocation4], %s419
        %s421 = sand.u32 %s276, 1
        %s422 = scalar_lea.vmem [#allocation7], %s421
        %s423 = smul.u32 2, %s27
        %p424 = scmp.lt.s32.totalorder %s423, 3
        %s425 = scalar_select %p424, %s423, 3
        %s426 = smul.addr %s425, 3
        %s427 = smul.addr %s426, 4
        %s428 = scalar_lea.vmem %s0, %s427
        %s429 = smul.u32 2, %s27
        %p430 = scmp.lt.s32.totalorder %s27, 1
        %s431 = scalar_select %p430, %s27, 1
        %s432 = scalar_lea.vmem %s2, %s431
        %v434 = vld [vmem:[%s428] sm:$0xff]
        %v435 = vld [vmem:[%s428 + $0x8] sm:$0xf]
        %v436 = vld [vmem:[%s428 + $0xc] sm:$0xff]
        %v437 = vld [vmem:[%s428 + $0x14] sm:$0xf]
        %v442 = vunpack.c.l.b16 %v434
        %v443 = vunpack.c.h.b16 %v434
        %v444 = vunpack.c.l.b16 %v435
        %v445 = vunpack.c.l.b16 %v436
        %v446 = vunpack.c.h.b16 %v436
        %v447 = vunpack.c.l.b16 %v437
        %v448 = vpack.c.b16 %v445, %v442
        %v449 = vpack.c.b16 %v446, %v443
        %v450 = vpack.c.b16 %v447, %v444
        %v451 = vrot.slane %v448, 6
        %v452 = vrot.slane %v449, 6
        %v453 = vrot.slane %v450, 6
        %vm454 = vcmask 1041408
        %v457 = vsel %vm454, 0, %v451
        %v460 = vsel %vm454, 0, %v452
        %v463 = vsel %vm454, 0, %v453
        %v466 = vshrl.u32 %v448, 16
        %v468 = vrot.slane %v466, 6
        %v469 = vshll.u32 %v448, 16
        %v471 = vrot.slane %v469, 7
        %v472 = vor.u32 %v468, %v471
        %v474 = vshrl.u32 %v449, 16
        %v476 = vrot.slane %v474, 6
        %v477 = vshll.u32 %v449, 16
        %v479 = vrot.slane %v477, 7
        %v480 = vor.u32 %v476, %v479
        %v482 = vshrl.u32 %v450, 16
        %v484 = vrot.slane %v482, 6
        %v485 = vshll.u32 %v450, 16
        %v487 = vrot.slane %v485, 7
        %v488 = vor.u32 %v484, %v487
        %vm492 = vcmask 1041408
        %vm493 = vsmask.f32 1280
        %vm494 = vmand %vm492, %vm493
        %v495 = vsel %vm494, 0, %v472
        %v496 = vsel %vm494, 0, %v480
        %v497 = vsel %vm494, 0, %v488
        %v498 = vrot.slane %v448, 7
        %v499 = vrot.slane %v449, 7
        %v500 = vrot.slane %v450, 7
        %vm501 = vcmask 1040384
        %v503 = vsel %vm501, 0, %v498
        %v506 = vsel %vm501, 0, %v499
        %v509 = vsel %vm501, 0, %v500
        %v511 = vrot.slane %v466, 7
        %v512 = vor.u32 %v511, %v469
        %v513 = vrot.slane %v474, 7
        %v514 = vor.u32 %v513, %v477
        %v515 = vrot.slane %v482, 7
        %v516 = vor.u32 %v515, %v485
        %vm520 = vcmask 1040384
        %vm521 = vsmask.f32 256
        %vm522 = vmand %vm520, %vm521
        %v523 = vsel %vm522, 0, %v512
        %v524 = vsel %vm522, 0, %v514
        %v525 = vsel %vm522, 0, %v516
        %v529 = vld [vmem:[#allocation2] sm:$0xf]
        %v530 = vld [vmem:[#allocation2 + $0x4] sm:$0xf]
        %v531 = vld [vmem:[#allocation2 + $0x8] sm:$0xf]
        %v532 = vld [vmem:[#allocation2 + $0xc] sm:$0xf]
        %v533 = vld [vmem:[#allocation2 + $0x10] sm:$0xf]
        %v534 = vld [vmem:[#allocation2 + $0x14] sm:$0xf]
        %v535 = vld [vmem:[#allocation2 + $0x18] sm:$0xf]
        %v536 = vld [vmem:[#allocation2 + $0x1c] sm:$0xf]
        %v537 = vld [vmem:[#allocation2 + $0x20] sm:$0xf]
        %v538 = vld [vmem:[#allocation2 + $0x24] sm:$0xf]
        %v539 = vld [vmem:[#allocation2 + $0x28] sm:$0xf]
        %v540 = vld [vmem:[#allocation2 + $0x2c] sm:$0xf]
        %v541 = vld [vmem:[#allocation2 + $0x30] sm:$0xf]
        %v542 = vld [vmem:[#allocation2 + $0x34] sm:$0xf]
        %v543 = vld [vmem:[#allocation2 + $0x38] sm:$0xf]
        %v544 = vld [vmem:[#allocation2 + $0x3c] sm:$0xf]
        %v545 = vld [vmem:[#allocation2 + $0x40] sm:$0xf]
        %v546 = vld [vmem:[#allocation2 + $0x44] sm:$0xf]
        %v547 = vld [vmem:[#allocation2 + $0x48] sm:$0xf]
        %v548 = vld [vmem:[#allocation2 + $0x4c] sm:$0xf]
        %v549 = vld [vmem:[#allocation2 + $0x50] sm:$0xf]
        %v550 = vld [vmem:[#allocation2 + $0x54] sm:$0xf]
        %v551 = vld [vmem:[#allocation2 + $0x58] sm:$0xf]
        %v552 = vld [vmem:[#allocation2 + $0x5c] sm:$0xf]
        %v553 = vld [vmem:[#allocation2 + $0x60] sm:$0xf]
        %v554 = vld [vmem:[#allocation2 + $0x64] sm:$0xf]
        %v555 = vld [vmem:[#allocation2 + $0x68] sm:$0xf]
        %v556 = vld [vmem:[#allocation2 + $0x6c] sm:$0xf]
        %v557 = vld [vmem:[#allocation2 + $0x70] sm:$0xf]
        %v558 = vld [vmem:[#allocation2 + $0x74] sm:$0xf]
        %v559 = vld [vmem:[#allocation2 + $0x78] sm:$0xf]
        %v560 = vld [vmem:[#allocation2 + $0x7c] sm:$0xf]
        %v561 = vld [vmem:[#allocation2 + $0x80] sm:$0xf]
        %v562 = vld [vmem:[#allocation2 + $0x84] sm:$0xf]
        %v563 = vld [vmem:[#allocation2 + $0x88] sm:$0xf]
        %v564 = vld [vmem:[#allocation2 + $0x8c] sm:$0xf]
        %v565 = vld [vmem:[#allocation2 + $0x90] sm:$0xf]
        %v566 = vld [vmem:[#allocation2 + $0x94] sm:$0xf]
        %v567 = vld [vmem:[#allocation2 + $0x98] sm:$0xf]
        %v568 = vld [vmem:[#allocation2 + $0x9c] sm:$0xf]
        %v569 = vld [vmem:[#allocation2 + $0xa0] sm:$0xf]
        %v570 = vld [vmem:[#allocation2 + $0xa4] sm:$0xf]
        %v571 = vld [vmem:[#allocation2 + $0xa8] sm:$0xf]
        %v572 = vld [vmem:[#allocation2 + $0xac] sm:$0xf]
        %v573 = vld [vmem:[#allocation2 + $0xb0] sm:$0xf]
        %v574 = vld [vmem:[#allocation2 + $0xb4] sm:$0xf]
        %v575 = vld [vmem:[#allocation2 + $0xb8] sm:$0xf]
        %v576 = vld [vmem:[#allocation2 + $0xbc] sm:$0xf]
        %v577 = vld [vmem:[#allocation2 + $0xc0] sm:$0xf]
        %v578 = vld [vmem:[#allocation2 + $0xc4] sm:$0xf]
        %v579 = vld [vmem:[#allocation2 + $0xc8] sm:$0xf]
        %v580 = vld [vmem:[#allocation2 + $0xcc] sm:$0xf]
        %v581 = vld [vmem:[#allocation2 + $0xd0] sm:$0xf]
        %v582 = vld [vmem:[#allocation2 + $0xd4] sm:$0xf]
        %v583 = vld [vmem:[#allocation2 + $0xd8] sm:$0xf]
        %v584 = vld [vmem:[#allocation2 + $0xdc] sm:$0xf]
        %v585 = vld [vmem:[#allocation2 + $0xe0] sm:$0xf]
        %v586 = vld [vmem:[#allocation2 + $0xe4] sm:$0xf]
        %v587 = vld [vmem:[#allocation2 + $0xe8] sm:$0xf]
        %v588 = vld [vmem:[#allocation2 + $0xec] sm:$0xf]
        %v589 = vld [vmem:[#allocation2 + $0xf0] sm:$0xf]
        %v590 = vld [vmem:[#allocation2 + $0xf4] sm:$0xf]
        %v591 = vld [vmem:[#allocation2 + $0xf8] sm:$0xf]
        %v592 = vld [vmem:[#allocation2 + $0xfc] sm:$0xf]
        %v593 = vld [vmem:[#allocation2 + $0x100] sm:$0xf]
        %v594 = vld [vmem:[#allocation2 + $0x104] sm:$0xf]
        %v595 = vld [vmem:[#allocation2 + $0x108] sm:$0xf]
        %v596 = vld [vmem:[#allocation2 + $0x10c] sm:$0xf]
        %v597 = vld [vmem:[#allocation2 + $0x110] sm:$0xf]
        %v598 = vld [vmem:[#allocation2 + $0x114] sm:$0xf]
        %v599 = vld [vmem:[#allocation2 + $0x118] sm:$0xf]
        %v600 = vld [vmem:[#allocation2 + $0x11c] sm:$0xf]
        %v601 = vld [vmem:[#allocation2 + $0x120] sm:$0xf]
        %v602 = vld [vmem:[#allocation2 + $0x124] sm:$0xf]
        %v603 = vld [vmem:[#allocation2 + $0x128] sm:$0xf]
        %v604 = vld [vmem:[#allocation2 + $0x12c] sm:$0xf]
        %v605 = vld [vmem:[#allocation2 + $0x130] sm:$0xf]
        %v606 = vld [vmem:[#allocation2 + $0x134] sm:$0xf]
        %v607 = vld [vmem:[#allocation2 + $0x138] sm:$0xf]
        %v608 = vld [vmem:[#allocation2 + $0x13c] sm:$0xf]
        %v609 = vld [vmem:[#allocation2 + $0x140] sm:$0xf]
        %v610 = vld [vmem:[#allocation2 + $0x144] sm:$0xf]
        %v611 = vld [vmem:[#allocation2 + $0x148] sm:$0xf]
        %v612 = vld [vmem:[#allocation2 + $0x14c] sm:$0xf]
        %v613 = vld [vmem:[#allocation2 + $0x150] sm:$0xf]
        %v614 = vld [vmem:[#allocation2 + $0x154] sm:$0xf]
        %v615 = vld [vmem:[#allocation2 + $0x158] sm:$0xf]
        %v616 = vld [vmem:[#allocation2 + $0x15c] sm:$0xf]
        %v617 = vld [vmem:[#allocation2 + $0x160] sm:$0xf]
        %v618 = vld [vmem:[#allocation2 + $0x164] sm:$0xf]
        %v619 = vld [vmem:[#allocation2 + $0x168] sm:$0xf]
        %v620 = vld [vmem:[#allocation2 + $0x16c] sm:$0xf]
        %v621 = vld [vmem:[#allocation2 + $0x170] sm:$0xf]
        %v622 = vld [vmem:[#allocation2 + $0x174] sm:$0xf]
        %v623 = vld [vmem:[#allocation2 + $0x178] sm:$0xf]
        %v624 = vld [vmem:[#allocation2 + $0x17c] sm:$0xf]
        %v625 = vld [vmem:[#allocation2 + $0x180] sm:$0xf]
        %v626 = vld [vmem:[#allocation2 + $0x184] sm:$0xf]
        %v627 = vld [vmem:[#allocation2 + $0x188] sm:$0xf]
        %v628 = vld [vmem:[#allocation2 + $0x18c] sm:$0xf]
        %v629 = vld [vmem:[#allocation2 + $0x190] sm:$0xf]
        %v630 = vld [vmem:[#allocation2 + $0x194] sm:$0xf]
        %v631 = vld [vmem:[#allocation2 + $0x198] sm:$0xf]
        %v632 = vld [vmem:[#allocation2 + $0x19c] sm:$0xf]
        %v633 = vld [vmem:[#allocation2 + $0x1a0] sm:$0xf]
        %v634 = vld [vmem:[#allocation2 + $0x1a4] sm:$0xf]
        %v635 = vld [vmem:[#allocation2 + $0x1a8] sm:$0xf]
        %v636 = vld [vmem:[#allocation2 + $0x1ac] sm:$0xf]
        %v637 = vld [vmem:[#allocation2 + $0x1b0] sm:$0xf]
        %v638 = vld [vmem:[#allocation2 + $0x1b4] sm:$0xf]
        %v639 = vld [vmem:[#allocation2 + $0x1b8] sm:$0xf]
        %v640 = vld [vmem:[#allocation2 + $0x1bc] sm:$0xf]
        %v641 = vld [vmem:[#allocation2 + $0x1c0] sm:$0xf]
        %v642 = vld [vmem:[#allocation2 + $0x1c4] sm:$0xf]
        %v643 = vld [vmem:[#allocation2 + $0x1c8] sm:$0xf]
        %v644 = vld [vmem:[#allocation2 + $0x1cc] sm:$0xf]
        %v645 = vld [vmem:[#allocation2 + $0x1d0] sm:$0xf]
        %v646 = vld [vmem:[#allocation2 + $0x1d4] sm:$0xf]
        %v647 = vld [vmem:[#allocation2 + $0x1d8] sm:$0xf]
        %v648 = vld [vmem:[#allocation2 + $0x1dc] sm:$0xf]
        %v649 = vld [vmem:[#allocation2 + $0x1e0] sm:$0xf]
        %v650 = vld [vmem:[#allocation2 + $0x1e4] sm:$0xf]
        %v651 = vld [vmem:[#allocation2 + $0x1e8] sm:$0xf]
        %v652 = vld [vmem:[#allocation2 + $0x1ec] sm:$0xf]
        %v653 = vld [vmem:[#allocation2 + $0x1f0] sm:$0xf]
        %v654 = vld [vmem:[#allocation2 + $0x1f4] sm:$0xf]
        %v655 = vld [vmem:[#allocation2 + $0x1f8] sm:$0xf]
        %v656 = vld [vmem:[#allocation2 + $0x1fc] sm:$0xf]
        %v657 = vld [vmem:[#allocation2 + $0x200] sm:$0xf]
        %v658 = vld [vmem:[#allocation2 + $0x204] sm:$0xf]
        %v659 = vld [vmem:[#allocation2 + $0x208] sm:$0xf]
        %v660 = vld [vmem:[#allocation2 + $0x20c] sm:$0xf]
        %v661 = vld [vmem:[#allocation2 + $0x210] sm:$0xf]
        %v662 = vld [vmem:[#allocation2 + $0x214] sm:$0xf]
        %v663 = vld [vmem:[#allocation2 + $0x218] sm:$0xf]
        %v664 = vld [vmem:[#allocation2 + $0x21c] sm:$0xf]
        %v665 = vld [vmem:[#allocation2 + $0x220] sm:$0xf]
        %v666 = vld [vmem:[#allocation2 + $0x224] sm:$0xf]
        %v667 = vld [vmem:[#allocation2 + $0x228] sm:$0xf]
        %v668 = vld [vmem:[#allocation2 + $0x22c] sm:$0xf]
        %v669 = vld [vmem:[#allocation2 + $0x230] sm:$0xf]
        %v670 = vld [vmem:[#allocation2 + $0x234] sm:$0xf]
        %v671 = vld [vmem:[#allocation2 + $0x238] sm:$0xf]
        %v672 = vld [vmem:[#allocation2 + $0x23c] sm:$0xf]
        %v673 = vld [vmem:[#allocation2 + $0x240] sm:$0xf]
        %v674 = vld [vmem:[#allocation2 + $0x244] sm:$0xf]
        %v675 = vld [vmem:[#allocation2 + $0x248] sm:$0xf]
        %v676 = vld [vmem:[#allocation2 + $0x24c] sm:$0xf]
        %v677 = vld [vmem:[#allocation2 + $0x250] sm:$0xf]
        %v678 = vld [vmem:[#allocation2 + $0x254] sm:$0xf]
        %v679 = vld [vmem:[#allocation2 + $0x258] sm:$0xf]
        %v680 = vld [vmem:[#allocation2 + $0x25c] sm:$0xf]
        %v681 = vld [vmem:[#allocation2 + $0x260] sm:$0xf]
        %v682 = vld [vmem:[#allocation2 + $0x264] sm:$0xf]
        %v683 = vld [vmem:[#allocation2 + $0x268] sm:$0xf]
        %v684 = vld [vmem:[#allocation2 + $0x26c] sm:$0xf]
        %v685 = vld [vmem:[#allocation2 + $0x270] sm:$0xf]
        %v686 = vld [vmem:[#allocation2 + $0x274] sm:$0xf]
        %v687 = vld [vmem:[#allocation2 + $0x278] sm:$0xf]
        %v688 = vld [vmem:[#allocation2 + $0x27c] sm:$0xf]
        %v689 = vld [vmem:[#allocation2 + $0x280] sm:$0xf]
        %v690 = vld [vmem:[#allocation2 + $0x284] sm:$0xf]
        %v691 = vld [vmem:[#allocation2 + $0x288] sm:$0xf]
        %v692 = vld [vmem:[#allocation2 + $0x28c] sm:$0xf]
        %v693 = vld [vmem:[#allocation2 + $0x290] sm:$0xf]
        %v694 = vld [vmem:[#allocation2 + $0x294] sm:$0xf]
        %v695 = vld [vmem:[#allocation2 + $0x298] sm:$0xf]
        %v696 = vld [vmem:[#allocation2 + $0x29c] sm:$0xf]
        %v697 = vld [vmem:[#allocation2 + $0x2a0] sm:$0xf]
        %v698 = vld [vmem:[#allocation2 + $0x2a4] sm:$0xf]
        %v699 = vld [vmem:[#allocation2 + $0x2a8] sm:$0xf]
        %v700 = vld [vmem:[#allocation2 + $0x2ac] sm:$0xf]
        %v701 = vld [vmem:[#allocation2 + $0x2b0] sm:$0xf]
        %v702 = vld [vmem:[#allocation2 + $0x2b4] sm:$0xf]
        %v703 = vld [vmem:[#allocation2 + $0x2b8] sm:$0xf]
        %v704 = vld [vmem:[#allocation2 + $0x2bc] sm:$0xf]
        %v705 = vld [vmem:[#allocation2 + $0x2c0] sm:$0xf]
        %v706 = vld [vmem:[#allocation2 + $0x2c4] sm:$0xf]
        %v707 = vld [vmem:[#allocation2 + $0x2c8] sm:$0xf]
        %v708 = vld [vmem:[#allocation2 + $0x2cc] sm:$0xf]
        %v709 = vld [vmem:[#allocation2 + $0x2d0] sm:$0xf]
        %v710 = vld [vmem:[#allocation2 + $0x2d4] sm:$0xf]
        %v711 = vld [vmem:[#allocation2 + $0x2d8] sm:$0xf]
        %v712 = vld [vmem:[#allocation2 + $0x2dc] sm:$0xf]
        %v713 = vld [vmem:[#allocation2 + $0x2e0] sm:$0xf]
        %v714 = vld [vmem:[#allocation2 + $0x2e4] sm:$0xf]
        %v715 = vld [vmem:[#allocation2 + $0x2e8] sm:$0xf]
        %v716 = vld [vmem:[#allocation2 + $0x2ec] sm:$0xf]
        %v717 = vld [vmem:[#allocation2 + $0x2f0] sm:$0xf]
        %v718 = vld [vmem:[#allocation2 + $0x2f4] sm:$0xf]
        %v719 = vld [vmem:[#allocation2 + $0x2f8] sm:$0xf]
        %v720 = vld [vmem:[#allocation2 + $0x2fc] sm:$0xf]
        %v721 = vld [vmem:[#allocation2 + $0x300] sm:$0xf]
        %v722 = vld [vmem:[#allocation2 + $0x304] sm:$0xf]
        %v723 = vld [vmem:[#allocation2 + $0x308] sm:$0xf]
        %v724 = vld [vmem:[#allocation2 + $0x30c] sm:$0xf]
        %v725 = vld [vmem:[#allocation2 + $0x310] sm:$0xf]
        %v726 = vld [vmem:[#allocation2 + $0x314] sm:$0xf]
        %v727 = vld [vmem:[#allocation2 + $0x318] sm:$0xf]
        %v728 = vld [vmem:[#allocation2 + $0x31c] sm:$0xf]
        %v729 = vld [vmem:[#allocation2 + $0x320] sm:$0xf]
        %v730 = vld [vmem:[#allocation2 + $0x324] sm:$0xf]
        %v731 = vld [vmem:[#allocation2 + $0x328] sm:$0xf]
        %v732 = vld [vmem:[#allocation2 + $0x32c] sm:$0xf]
        %v733 = vld [vmem:[#allocation2 + $0x330] sm:$0xf]
        %v734 = vld [vmem:[#allocation2 + $0x334] sm:$0xf]
        %v735 = vld [vmem:[#allocation2 + $0x338] sm:$0xf]
        %v736 = vld [vmem:[#allocation2 + $0x33c] sm:$0xf]
        %v737 = vld [vmem:[#allocation2 + $0x340] sm:$0xf]
        %v738 = vld [vmem:[#allocation2 + $0x344] sm:$0xf]
        %v739 = vld [vmem:[#allocation2 + $0x348] sm:$0xf]
        %v740 = vld [vmem:[#allocation2 + $0x34c] sm:$0xf]
        %v741 = vld [vmem:[#allocation2 + $0x350] sm:$0xf]
        %v742 = vld [vmem:[#allocation2 + $0x354] sm:$0xf]
        %v743 = vld [vmem:[#allocation2 + $0x358] sm:$0xf]
        %v744 = vld [vmem:[#allocation2 + $0x35c] sm:$0xf]
        %v745 = vld [vmem:[#allocation2 + $0x360] sm:$0xf]
        %v746 = vld [vmem:[#allocation2 + $0x364] sm:$0xf]
        %v747 = vld [vmem:[#allocation2 + $0x368] sm:$0xf]
        %v748 = vld [vmem:[#allocation2 + $0x36c] sm:$0xf]
        %v749 = vld [vmem:[#allocation2 + $0x370] sm:$0xf]
        %v750 = vld [vmem:[#allocation2 + $0x374] sm:$0xf]
        %v751 = vld [vmem:[#allocation2 + $0x378] sm:$0xf]
        %v752 = vld [vmem:[#allocation2 + $0x37c] sm:$0xf]
        %v753 = vld [vmem:[#allocation2 + $0x380] sm:$0xf]
        %v754 = vld [vmem:[#allocation2 + $0x384] sm:$0xf]
        %v755 = vld [vmem:[#allocation2 + $0x388] sm:$0xf]
        %v756 = vld [vmem:[#allocation2 + $0x38c] sm:$0xf]
        %v757 = vld [vmem:[#allocation2 + $0x390] sm:$0xf]
        %v758 = vld [vmem:[#allocation2 + $0x394] sm:$0xf]
        %v759 = vld [vmem:[#allocation2 + $0x398] sm:$0xf]
        %v760 = vld [vmem:[#allocation2 + $0x39c] sm:$0xf]
        %v761 = vld [vmem:[#allocation2 + $0x3a0] sm:$0xf]
        %v762 = vld [vmem:[#allocation2 + $0x3a4] sm:$0xf]
        %v763 = vld [vmem:[#allocation2 + $0x3a8] sm:$0xf]
        %v764 = vld [vmem:[#allocation2 + $0x3ac] sm:$0xf]
        %v765 = vld [vmem:[#allocation2 + $0x3b0] sm:$0xf]
        %v766 = vld [vmem:[#allocation2 + $0x3b4] sm:$0xf]
        %v767 = vld [vmem:[#allocation2 + $0x3b8] sm:$0xf]
        %v768 = vld [vmem:[#allocation2 + $0x3bc] sm:$0xf]
        %v769 = vld [vmem:[%s5] sm:$0x1]
        %v771 = vlaneseq
        %v772 = vshrl.u32 %v771, 7
        %v773 = vsub.s32 0, %v772
        %v774 = vrot.slane %v769, %v773
        %v1016 = vunpack.c.l.b16 %v529
        %v1017 = vunpack.c.l.b16 %v530
        %v1018 = vunpack.c.l.b16 %v531
        %v1019 = vunpack.c.l.b16 %v532
        %v1020 = vunpack.c.l.b16 %v533
        %v1021 = vunpack.c.l.b16 %v534
        %v1022 = vunpack.c.l.b16 %v535
        %v1023 = vunpack.c.l.b16 %v536
        %v1024 = vunpack.c.l.b16 %v537
        %v1025 = vunpack.c.l.b16 %v538
        %v1026 = vunpack.c.l.b16 %v539
        %v1027 = vunpack.c.l.b16 %v540
        %v1028 = vunpack.c.l.b16 %v541
        %v1029 = vunpack.c.l.b16 %v542
        %v1030 = vunpack.c.l.b16 %v543
        %v1031 = vunpack.c.l.b16 %v544
        %v1032 = vunpack.c.l.b16 %v545
        %v1033 = vunpack.c.l.b16 %v546
        %v1034 = vunpack.c.l.b16 %v547
        %v1035 = vunpack.c.l.b16 %v548
        %v1036 = vunpack.c.l.b16 %v549
        %v1037 = vunpack.c.l.b16 %v550
        %v1038 = vunpack.c.l.b16 %v551
        %v1039 = vunpack.c.l.b16 %v552
        %v1040 = vunpack.c.l.b16 %v553
        %v1041 = vunpack.c.l.b16 %v554
        %v1042 = vunpack.c.l.b16 %v555
        %v1043 = vunpack.c.l.b16 %v556
        %v1044 = vunpack.c.l.b16 %v557
        %v1045 = vunpack.c.l.b16 %v558
        %v1046 = vunpack.c.l.b16 %v559
        %v1047 = vunpack.c.l.b16 %v560
        %v1048 = vunpack.c.l.b16 %v561
        %v1049 = vunpack.c.l.b16 %v562
        %v1050 = vunpack.c.l.b16 %v563
        %v1051 = vunpack.c.l.b16 %v564
        %v1052 = vunpack.c.l.b16 %v565
        %v1053 = vunpack.c.l.b16 %v566
        %v1054 = vunpack.c.l.b16 %v567
        %v1055 = vunpack.c.l.b16 %v568
        %v1056 = vunpack.c.l.b16 %v569
        %v1057 = vunpack.c.l.b16 %v570
        %v1058 = vunpack.c.l.b16 %v571
        %v1059 = vunpack.c.l.b16 %v572
        %v1060 = vunpack.c.l.b16 %v573
        %v1061 = vunpack.c.l.b16 %v574
        %v1062 = vunpack.c.l.b16 %v575
        %v1063 = vunpack.c.l.b16 %v576
        %v1064 = vunpack.c.l.b16 %v577
        %v1065 = vunpack.c.l.b16 %v578
        %v1066 = vunpack.c.l.b16 %v579
        %v1067 = vunpack.c.l.b16 %v580
        %v1068 = vunpack.c.l.b16 %v581
        %v1069 = vunpack.c.l.b16 %v582
        %v1070 = vunpack.c.l.b16 %v583
        %v1071 = vunpack.c.l.b16 %v584
        %v1072 = vunpack.c.l.b16 %v585
        %v1073 = vunpack.c.l.b16 %v586
        %v1074 = vunpack.c.l.b16 %v587
        %v1075 = vunpack.c.l.b16 %v588
        %v1076 = vunpack.c.l.b16 %v589
        %v1077 = vunpack.c.l.b16 %v590
        %v1078 = vunpack.c.l.b16 %v591
        %v1079 = vunpack.c.l.b16 %v592
        %v1080 = vunpack.c.l.b16 %v593
        %v1081 = vunpack.c.l.b16 %v594
        %v1082 = vunpack.c.l.b16 %v595
        %v1083 = vunpack.c.l.b16 %v596
        %v1084 = vunpack.c.l.b16 %v597
        %v1085 = vunpack.c.l.b16 %v598
        %v1086 = vunpack.c.l.b16 %v599
        %v1087 = vunpack.c.l.b16 %v600
        %v1088 = vunpack.c.l.b16 %v601
        %v1089 = vunpack.c.l.b16 %v602
        %v1090 = vunpack.c.l.b16 %v603
        %v1091 = vunpack.c.l.b16 %v604
        %v1092 = vunpack.c.l.b16 %v605
        %v1093 = vunpack.c.l.b16 %v606
        %v1094 = vunpack.c.l.b16 %v607
        %v1095 = vunpack.c.l.b16 %v608
        %v1096 = vunpack.c.l.b16 %v609
        %v1097 = vunpack.c.l.b16 %v610
        %v1098 = vunpack.c.l.b16 %v611
        %v1099 = vunpack.c.l.b16 %v612
        %v1100 = vunpack.c.l.b16 %v613
        %v1101 = vunpack.c.l.b16 %v614
        %v1102 = vunpack.c.l.b16 %v615
        %v1103 = vunpack.c.l.b16 %v616
        %v1104 = vunpack.c.l.b16 %v617
        %v1105 = vunpack.c.l.b16 %v618
        %v1106 = vunpack.c.l.b16 %v619
        %v1107 = vunpack.c.l.b16 %v620
        %v1108 = vunpack.c.l.b16 %v621
        %v1109 = vunpack.c.l.b16 %v622
        %v1110 = vunpack.c.l.b16 %v623
        %v1111 = vunpack.c.l.b16 %v624
        %v1112 = vunpack.c.l.b16 %v625
        %v1113 = vunpack.c.l.b16 %v626
        %v1114 = vunpack.c.l.b16 %v627
        %v1115 = vunpack.c.l.b16 %v628
        %v1116 = vunpack.c.l.b16 %v629
        %v1117 = vunpack.c.l.b16 %v630
        %v1118 = vunpack.c.l.b16 %v631
        %v1119 = vunpack.c.l.b16 %v632
        %v1120 = vunpack.c.l.b16 %v633
        %v1121 = vunpack.c.l.b16 %v634
        %v1122 = vunpack.c.l.b16 %v635
        %v1123 = vunpack.c.l.b16 %v636
        %v1124 = vunpack.c.l.b16 %v637
        %v1125 = vunpack.c.l.b16 %v638
        %v1126 = vunpack.c.l.b16 %v639
        %v1127 = vunpack.c.l.b16 %v640
        %v1128 = vunpack.c.l.b16 %v641
        %v1129 = vunpack.c.l.b16 %v642
        %v1130 = vunpack.c.l.b16 %v643
        %v1131 = vunpack.c.l.b16 %v644
        %v1132 = vunpack.c.l.b16 %v645
        %v1133 = vunpack.c.l.b16 %v646
        %v1134 = vunpack.c.l.b16 %v647
        %v1135 = vunpack.c.l.b16 %v648
        %v1136 = vunpack.c.l.b16 %v649
        %v1137 = vunpack.c.l.b16 %v650
        %v1138 = vunpack.c.l.b16 %v651
        %v1139 = vunpack.c.l.b16 %v652
        %v1140 = vunpack.c.l.b16 %v653
        %v1141 = vunpack.c.l.b16 %v654
        %v1142 = vunpack.c.l.b16 %v655
        %v1143 = vunpack.c.l.b16 %v656
        %v1144 = vunpack.c.l.b16 %v657
        %v1145 = vunpack.c.l.b16 %v658
        %v1146 = vunpack.c.l.b16 %v659
        %v1147 = vunpack.c.l.b16 %v660
        %v1148 = vunpack.c.l.b16 %v661
        %v1149 = vunpack.c.l.b16 %v662
        %v1150 = vunpack.c.l.b16 %v663
        %v1151 = vunpack.c.l.b16 %v664
        %v1152 = vunpack.c.l.b16 %v665
        %v1153 = vunpack.c.l.b16 %v666
        %v1154 = vunpack.c.l.b16 %v667
        %v1155 = vunpack.c.l.b16 %v668
        %v1156 = vunpack.c.l.b16 %v669
        %v1157 = vunpack.c.l.b16 %v670
        %v1158 = vunpack.c.l.b16 %v671
        %v1159 = vunpack.c.l.b16 %v672
        %v1160 = vunpack.c.l.b16 %v673
        %v1161 = vunpack.c.l.b16 %v674
        %v1162 = vunpack.c.l.b16 %v675
        %v1163 = vunpack.c.l.b16 %v676
        %v1164 = vunpack.c.l.b16 %v677
        %v1165 = vunpack.c.l.b16 %v678
        %v1166 = vunpack.c.l.b16 %v679
        %v1167 = vunpack.c.l.b16 %v680
        %v1168 = vunpack.c.l.b16 %v681
        %v1169 = vunpack.c.l.b16 %v682
        %v1170 = vunpack.c.l.b16 %v683
        %v1171 = vunpack.c.l.b16 %v684
        %v1172 = vunpack.c.l.b16 %v685
        %v1173 = vunpack.c.l.b16 %v686
        %v1174 = vunpack.c.l.b16 %v687
        %v1175 = vunpack.c.l.b16 %v688
        %v1176 = vunpack.c.l.b16 %v689
        %v1177 = vunpack.c.l.b16 %v690
        %v1178 = vunpack.c.l.b16 %v691
        %v1179 = vunpack.c.l.b16 %v692
        %v1180 = vunpack.c.l.b16 %v693
        %v1181 = vunpack.c.l.b16 %v694
        %v1182 = vunpack.c.l.b16 %v695
        %v1183 = vunpack.c.l.b16 %v696
        %v1184 = vunpack.c.l.b16 %v697
        %v1185 = vunpack.c.l.b16 %v698
        %v1186 = vunpack.c.l.b16 %v699
        %v1187 = vunpack.c.l.b16 %v700
        %v1188 = vunpack.c.l.b16 %v701
        %v1189 = vunpack.c.l.b16 %v702
        %v1190 = vunpack.c.l.b16 %v703
        %v1191 = vunpack.c.l.b16 %v704
        %v1192 = vunpack.c.l.b16 %v705
        %v1193 = vunpack.c.l.b16 %v706
        %v1194 = vunpack.c.l.b16 %v707
        %v1195 = vunpack.c.l.b16 %v708
        %v1196 = vunpack.c.l.b16 %v709
        %v1197 = vunpack.c.l.b16 %v710
        %v1198 = vunpack.c.l.b16 %v711
        %v1199 = vunpack.c.l.b16 %v712
        %v1200 = vunpack.c.l.b16 %v713
        %v1201 = vunpack.c.l.b16 %v714
        %v1202 = vunpack.c.l.b16 %v715
        %v1203 = vunpack.c.l.b16 %v716
        %v1204 = vunpack.c.l.b16 %v717
        %v1205 = vunpack.c.l.b16 %v718
        %v1206 = vunpack.c.l.b16 %v719
        %v1207 = vunpack.c.l.b16 %v720
        %v1208 = vunpack.c.l.b16 %v721
        %v1209 = vunpack.c.l.b16 %v722
        %v1210 = vunpack.c.l.b16 %v723
        %v1211 = vunpack.c.l.b16 %v724
        %v1212 = vunpack.c.l.b16 %v725
        %v1213 = vunpack.c.l.b16 %v726
        %v1214 = vunpack.c.l.b16 %v727
        %v1215 = vunpack.c.l.b16 %v728
        %v1216 = vunpack.c.l.b16 %v729
        %v1217 = vunpack.c.l.b16 %v730
        %v1218 = vunpack.c.l.b16 %v731
        %v1219 = vunpack.c.l.b16 %v732
        %v1220 = vunpack.c.l.b16 %v733
        %v1221 = vunpack.c.l.b16 %v734
        %v1222 = vunpack.c.l.b16 %v735
        %v1223 = vunpack.c.l.b16 %v736
        %v1224 = vunpack.c.l.b16 %v737
        %v1225 = vunpack.c.l.b16 %v738
        %v1226 = vunpack.c.l.b16 %v739
        %v1227 = vunpack.c.l.b16 %v740
        %v1228 = vunpack.c.l.b16 %v741
        %v1229 = vunpack.c.l.b16 %v742
        %v1230 = vunpack.c.l.b16 %v743
        %v1231 = vunpack.c.l.b16 %v744
        %v1232 = vunpack.c.l.b16 %v745
        %v1233 = vunpack.c.l.b16 %v746
        %v1234 = vunpack.c.l.b16 %v747
        %v1235 = vunpack.c.l.b16 %v748
        %v1236 = vunpack.c.l.b16 %v749
        %v1237 = vunpack.c.l.b16 %v750
        %v1238 = vunpack.c.l.b16 %v751
        %v1239 = vunpack.c.l.b16 %v752
        %v1240 = vunpack.c.l.b16 %v753
        %v1241 = vunpack.c.l.b16 %v754
        %v1242 = vunpack.c.l.b16 %v755
        %v1243 = vunpack.c.l.b16 %v756
        %v1244 = vunpack.c.l.b16 %v757
        %v1245 = vunpack.c.l.b16 %v758
        %v1246 = vunpack.c.l.b16 %v759
        %v1247 = vunpack.c.l.b16 %v760
        %v1248 = vunpack.c.l.b16 %v761
        %v1249 = vunpack.c.l.b16 %v762
        %v1250 = vunpack.c.l.b16 %v763
        %v1251 = vunpack.c.l.b16 %v764
        %v1252 = vunpack.c.l.b16 %v765
        %v1253 = vunpack.c.l.b16 %v766
        %v1254 = vunpack.c.l.b16 %v767
        %v1255 = vunpack.c.l.b16 %v768
        %v1256 = vpack.c.b16 %v1017, %v1016
        %v1257 = vpack.c.b16 %v1019, %v1018
        %v1258 = vpack.c.b16 %v1021, %v1020
        %v1259 = vpack.c.b16 %v1023, %v1022
        %v1260 = vpack.c.b16 %v1025, %v1024
        %v1261 = vpack.c.b16 %v1027, %v1026
        %v1262 = vpack.c.b16 %v1029, %v1028
        %v1263 = vpack.c.b16 %v1031, %v1030
        %v1264 = vpack.c.b16 %v1033, %v1032
        %v1265 = vpack.c.b16 %v1035, %v1034
        %v1266 = vpack.c.b16 %v1037, %v1036
        %v1267 = vpack.c.b16 %v1039, %v1038
        %v1268 = vpack.c.b16 %v1041, %v1040
        %v1269 = vpack.c.b16 %v1043, %v1042
        %v1270 = vpack.c.b16 %v1045, %v1044
        %v1271 = vpack.c.b16 %v1047, %v1046
        %v1272 = vpack.c.b16 %v1049, %v1048
        %v1273 = vpack.c.b16 %v1051, %v1050
        %v1274 = vpack.c.b16 %v1053, %v1052
        %v1275 = vpack.c.b16 %v1055, %v1054
        %v1276 = vpack.c.b16 %v1057, %v1056
        %v1277 = vpack.c.b16 %v1059, %v1058
        %v1278 = vpack.c.b16 %v1061, %v1060
        %v1279 = vpack.c.b16 %v1063, %v1062
        %v1280 = vpack.c.b16 %v1065, %v1064
        %v1281 = vpack.c.b16 %v1067, %v1066
        %v1282 = vpack.c.b16 %v1069, %v1068
        %v1283 = vpack.c.b16 %v1071, %v1070
        %v1284 = vpack.c.b16 %v1073, %v1072
        %v1285 = vpack.c.b16 %v1075, %v1074
        %v1286 = vpack.c.b16 %v1077, %v1076
        %v1287 = vpack.c.b16 %v1079, %v1078
        %v1288 = vpack.c.b16 %v1081, %v1080
        %v1289 = vpack.c.b16 %v1083, %v1082
        %v1290 = vpack.c.b16 %v1085, %v1084
        %v1291 = vpack.c.b16 %v1087, %v1086
        %v1292 = vpack.c.b16 %v1089, %v1088
        %v1293 = vpack.c.b16 %v1091, %v1090
        %v1294 = vpack.c.b16 %v1093, %v1092
        %v1295 = vpack.c.b16 %v1095, %v1094
        %v1296 = vpack.c.b16 %v1097, %v1096
        %v1297 = vpack.c.b16 %v1099, %v1098
        %v1298 = vpack.c.b16 %v1101, %v1100
        %v1299 = vpack.c.b16 %v1103, %v1102
        %v1300 = vpack.c.b16 %v1105, %v1104
        %v1301 = vpack.c.b16 %v1107, %v1106
        %v1302 = vpack.c.b16 %v1109, %v1108
        %v1303 = vpack.c.b16 %v1111, %v1110
        %v1304 = vpack.c.b16 %v1113, %v1112
        %v1305 = vpack.c.b16 %v1115, %v1114
        %v1306 = vpack.c.b16 %v1117, %v1116
        %v1307 = vpack.c.b16 %v1119, %v1118
        %v1308 = vpack.c.b16 %v1121, %v1120
        %v1309 = vpack.c.b16 %v1123, %v1122
        %v1310 = vpack.c.b16 %v1125, %v1124
        %v1311 = vpack.c.b16 %v1127, %v1126
        %v1312 = vpack.c.b16 %v1129, %v1128
        %v1313 = vpack.c.b16 %v1131, %v1130
        %v1314 = vpack.c.b16 %v1133, %v1132
        %v1315 = vpack.c.b16 %v1135, %v1134
        %v1316 = vpack.c.b16 %v1137, %v1136
        %v1317 = vpack.c.b16 %v1139, %v1138
        %v1318 = vpack.c.b16 %v1141, %v1140
        %v1319 = vpack.c.b16 %v1143, %v1142
        %v1320 = vpack.c.b16 %v1145, %v1144
        %v1321 = vpack.c.b16 %v1147, %v1146
        %v1322 = vpack.c.b16 %v1149, %v1148
        %v1323 = vpack.c.b16 %v1151, %v1150
        %v1324 = vpack.c.b16 %v1153, %v1152
        %v1325 = vpack.c.b16 %v1155, %v1154
        %v1326 = vpack.c.b16 %v1157, %v1156
        %v1327 = vpack.c.b16 %v1159, %v1158
        %v1328 = vpack.c.b16 %v1161, %v1160
        %v1329 = vpack.c.b16 %v1163, %v1162
        %v1330 = vpack.c.b16 %v1165, %v1164
        %v1331 = vpack.c.b16 %v1167, %v1166
        %v1332 = vpack.c.b16 %v1169, %v1168
        %v1333 = vpack.c.b16 %v1171, %v1170
        %v1334 = vpack.c.b16 %v1173, %v1172
        %v1335 = vpack.c.b16 %v1175, %v1174
        %v1336 = vpack.c.b16 %v1177, %v1176
        %v1337 = vpack.c.b16 %v1179, %v1178
        %v1338 = vpack.c.b16 %v1181, %v1180
        %v1339 = vpack.c.b16 %v1183, %v1182
        %v1340 = vpack.c.b16 %v1185, %v1184
        %v1341 = vpack.c.b16 %v1187, %v1186
        %v1342 = vpack.c.b16 %v1189, %v1188
        %v1343 = vpack.c.b16 %v1191, %v1190
        %v1344 = vpack.c.b16 %v1193, %v1192
        %v1345 = vpack.c.b16 %v1195, %v1194
        %v1346 = vpack.c.b16 %v1197, %v1196
        %v1347 = vpack.c.b16 %v1199, %v1198
        %v1348 = vpack.c.b16 %v1201, %v1200
        %v1349 = vpack.c.b16 %v1203, %v1202
        %v1350 = vpack.c.b16 %v1205, %v1204
        %v1351 = vpack.c.b16 %v1207, %v1206
        %v1352 = vpack.c.b16 %v1209, %v1208
        %v1353 = vpack.c.b16 %v1211, %v1210
        %v1354 = vpack.c.b16 %v1213, %v1212
        %v1355 = vpack.c.b16 %v1215, %v1214
        %v1356 = vpack.c.b16 %v1217, %v1216
        %v1357 = vpack.c.b16 %v1219, %v1218
        %v1358 = vpack.c.b16 %v1221, %v1220
        %v1359 = vpack.c.b16 %v1223, %v1222
        %v1360 = vpack.c.b16 %v1225, %v1224
        %v1361 = vpack.c.b16 %v1227, %v1226
        %v1362 = vpack.c.b16 %v1229, %v1228
        %v1363 = vpack.c.b16 %v1231, %v1230
        %v1364 = vpack.c.b16 %v1233, %v1232
        %v1365 = vpack.c.b16 %v1235, %v1234
        %v1366 = vpack.c.b16 %v1237, %v1236
        %v1367 = vpack.c.b16 %v1239, %v1238
        %v1368 = vpack.c.b16 %v1241, %v1240
        %v1369 = vpack.c.b16 %v1243, %v1242
        %v1370 = vpack.c.b16 %v1245, %v1244
        %v1371 = vpack.c.b16 %v1247, %v1246
        %v1372 = vpack.c.b16 %v1249, %v1248
        %v1373 = vpack.c.b16 %v1251, %v1250
        %v1374 = vpack.c.b16 %v1253, %v1252
        %v1375 = vpack.c.b16 %v1255, %v1254
        %1496 = vmatprep.subr.bf16.mxu0 0
        %1497 = vmatpush1.bf16.msra.mxu0 %v1256
        %1498 = vmatprep.subr.bf16.mxu0 0
        %1499 = vmatpush1.bf16.msra.mxu0 %v1257
        %1500 = vmatprep.subr.bf16.mxu0 0
        %1501 = vmatpush1.bf16.msra.mxu0 %v1258
        %1502 = vmatprep.subr.bf16.mxu0 0
        %1503 = vmatpush1.bf16.msra.mxu0 %v1259
        %1504 = vmatprep.subr.bf16.mxu0 0
        %1505 = vmatpush1.bf16.msra.mxu0 %v1260
        %1506 = vmatprep.subr.bf16.mxu0 0
        %1507 = vmatpush1.bf16.msra.mxu0 %v1261
        %1508 = vmatprep.subr.bf16.mxu0 0
        %1509 = vmatpush1.bf16.msra.mxu0 %v1262
        %1510 = vmatprep.subr.bf16.mxu0 0
        %1511 = vmatpush1.bf16.msra.mxu0 %v1263
        %1512 = vmatprep.subr.bf16.mxu0 0
        %1513 = vmatpush1.bf16.msra.mxu0 %v1264
        %1514 = vmatprep.subr.bf16.mxu0 0
        %1515 = vmatpush1.bf16.msra.mxu0 %v1265
        %1516 = vmatprep.subr.bf16.mxu0 0
        %1517 = vmatpush1.bf16.msra.mxu0 %v1266
        %1518 = vmatprep.subr.bf16.mxu0 0
        %1519 = vmatpush1.bf16.msra.mxu0 %v1267
        %1520 = vmatprep.subr.bf16.mxu0 0
        %1521 = vmatpush1.bf16.msra.mxu0 %v1268
        %1522 = vmatprep.subr.bf16.mxu0 0
        %1523 = vmatpush1.bf16.msra.mxu0 %v1269
        %1524 = vmatprep.subr.bf16.mxu0 0
        %1525 = vmatpush1.bf16.msra.mxu0 %v1270
        %1526 = vmatprep.subr.bf16.mxu0 0
        %1527 = vmatpush1.bf16.msra.mxu0 %v1271
        %1528 = vmatprep.mubr.bf16.mxu0 %v460
        %1529 = vmatmul.mubr.bf16.gmra.mrb[0].mxu0 %v457
        %v1530 = vpop.f32.mrb[0].mxu0
        %v1531 = vadd.f32 %v774, %v1530
        %v1532 = vpop.f32.mrb[0].mxu0
        %v1533 = vpop.f32.mrb[0].mxu0
        %v1534 = vadd.f32 %v774, %v1533
        %v1535 = vpop.f32.mrb[0].mxu0
        %1536 = vdwg.mxu0
        %1537 = vmatprep.subr.bf16.mxu0 0
        %1538 = vmatpush1.bf16.msra.mxu0 %v1272
        %1539 = vmatprep.subr.bf16.mxu0 0
        %1540 = vmatpush1.bf16.msra.mxu0 %v1273
        %1541 = vmatprep.subr.bf16.mxu0 0
        %1542 = vmatpush1.bf16.msra.mxu0 %v1274
        %1543 = vmatprep.subr.bf16.mxu0 0
        %1544 = vmatpush1.bf16.msra.mxu0 %v1275
        %1545 = vmatprep.subr.bf16.mxu0 0
        %1546 = vmatpush1.bf16.msra.mxu0 %v1276
        %1547 = vmatprep.subr.bf16.mxu0 0
        %1548 = vmatpush1.bf16.msra.mxu0 %v1277
        %1549 = vmatprep.subr.bf16.mxu0 0
        %1550 = vmatpush1.bf16.msra.mxu0 %v1278
        %1551 = vmatprep.subr.bf16.mxu0 0
        %1552 = vmatpush1.bf16.msra.mxu0 %v1279
        %1553 = vmatprep.subr.bf16.mxu0 0
        %1554 = vmatpush1.bf16.msra.mxu0 %v1280
        %1555 = vmatprep.subr.bf16.mxu0 0
        %1556 = vmatpush1.bf16.msra.mxu0 %v1281
        %1557 = vmatprep.subr.bf16.mxu0 0
        %1558 = vmatpush1.bf16.msra.mxu0 %v1282
        %1559 = vmatprep.subr.bf16.mxu0 0
        %1560 = vmatpush1.bf16.msra.mxu0 %v1283
        %1561 = vmatprep.subr.bf16.mxu0 0
        %1562 = vmatpush1.bf16.msra.mxu0 %v1284
        %1563 = vmatprep.subr.bf16.mxu0 0
        %1564 = vmatpush1.bf16.msra.mxu0 %v1285
        %1565 = vmatprep.subr.bf16.mxu0 0
        %1566 = vmatpush1.bf16.msra.mxu0 %v1286
        %1567 = vmatprep.subr.bf16.mxu0 0
        %1568 = vmatpush1.bf16.msra.mxu0 %v1287
        %1569 = vmatprep.mubr.bf16.mxu0 %v495
        %1570 = vmatmul.mubr.bf16.gmra.mrb[0].mxu0 %v463
        %v1571 = vpop.f32.mrb[0].mxu0
        %v1572 = vadd.f32 %v1531, %v1571
        %v1573 = vpop.f32.mrb[0].mxu0
        %v1574 = vpop.f32.mrb[0].mxu0
        %v1575 = vadd.f32 %v1534, %v1574
        %v1576 = vpop.f32.mrb[0].mxu0
        %1577 = vdwg.mxu0
        %1578 = vmatprep.subr.bf16.mxu0 0
        %1579 = vmatpush1.bf16.msra.mxu0 %v1288
        %1580 = vmatprep.subr.bf16.mxu0 0
        %1581 = vmatpush1.bf16.msra.mxu0 %v1289
        %1582 = vmatprep.subr.bf16.mxu0 0
        %1583 = vmatpush1.bf16.msra.mxu0 %v1290
        %1584 = vmatprep.subr.bf16.mxu0 0
        %1585 = vmatpush1.bf16.msra.mxu0 %v1291
        %1586 = vmatprep.subr.bf16.mxu0 0
        %1587 = vmatpush1.bf16.msra.mxu0 %v1292
        %1588 = vmatprep.subr.bf16.mxu0 0
        %1589 = vmatpush1.bf16.msra.mxu0 %v1293
        %1590 = vmatprep.subr.bf16.mxu0 0
        %1591 = vmatpush1.bf16.msra.mxu0 %v1294
        %1592 = vmatprep.subr.bf16.mxu0 0
        %1593 = vmatpush1.bf16.msra.mxu0 %v1295
        %1594 = vmatprep.subr.bf16.mxu0 0
        %1595 = vmatpush1.bf16.msra.mxu0 %v1296
        %1596 = vmatprep.subr.bf16.mxu0 0
        %1597 = vmatpush1.bf16.msra.mxu0 %v1297
        %1598 = vmatprep.subr.bf16.mxu0 0
        %1599 = vmatpush1.bf16.msra.mxu0 %v1298
        %1600 = vmatprep.subr.bf16.mxu0 0
        %1601 = vmatpush1.bf16.msra.mxu0 %v1299
        %1602 = vmatprep.subr.bf16.mxu0 0
        %1603 = vmatpush1.bf16.msra.mxu0 %v1300
        %1604 = vmatprep.subr.bf16.mxu0 0
        %1605 = vmatpush1.bf16.msra.mxu0 %v1301
        %1606 = vmatprep.subr.bf16.mxu0 0
        %1607 = vmatpush1.bf16.msra.mxu0 %v1302
        %1608 = vmatprep.subr.bf16.mxu0 0
        %1609 = vmatpush1.bf16.msra.mxu0 %v1303
        %1610 = vmatprep.mubr.bf16.mxu0 %v497
        %1611 = vmatmul.mubr.bf16.gmra.mrb[0].mxu0 %v496
        %v1612 = vpop.f32.mrb[0].mxu0
        %v1613 = vadd.f32 %v1572, %v1612
        %v1614 = vpop.f32.mrb[0].mxu0
        %v1615 = vpop.f32.mrb[0].mxu0
        %v1616 = vadd.f32 %v1575, %v1615
        %v1617 = vpop.f32.mrb[0].mxu0
        %1618 = vdwg.mxu0
        %1619 = vmatprep.subr.bf16.mxu0 0
        %1620 = vmatpush1.bf16.msra.mxu0 %v1304
        %1621 = vmatprep.subr.bf16.mxu0 0
        %1622 = vmatpush1.bf16.msra.mxu0 %v1305
        %1623 = vmatprep.subr.bf16.mxu0 0
        %1624 = vmatpush1.bf16.msra.mxu0 %v1306
        %1625 = vmatprep.subr.bf16.mxu0 0
        %1626 = vmatpush1.bf16.msra.mxu0 %v1307
        %1627 = vmatprep.subr.bf16.mxu0 0
        %1628 = vmatpush1.bf16.msra.mxu0 %v1308
        %1629 = vmatprep.subr.bf16.mxu0 0
        %1630 = vmatpush1.bf16.msra.mxu0 %v1309
        %1631 = vmatprep.subr.bf16.mxu0 0
        %1632 = vmatpush1.bf16.msra.mxu0 %v1310
        %1633 = vmatprep.subr.bf16.mxu0 0
        %1634 = vmatpush1.bf16.msra.mxu0 %v1311
        %1635 = vmatprep.subr.bf16.mxu0 0
        %1636 = vmatpush1.bf16.msra.mxu0 %v1312
        %1637 = vmatprep.subr.bf16.mxu0 0
        %1638 = vmatpush1.bf16.msra.mxu0 %v1313
        %1639 = vmatprep.subr.bf16.mxu0 0
        %1640 = vmatpush1.bf16.msra.mxu0 %v1314
        %1641 = vmatprep.subr.bf16.mxu0 0
        %1642 = vmatpush1.bf16.msra.mxu0 %v1315
        %1643 = vmatprep.subr.bf16.mxu0 0
        %1644 = vmatpush1.bf16.msra.mxu0 %v1316
        %1645 = vmatprep.subr.bf16.mxu0 0
        %1646 = vmatpush1.bf16.msra.mxu0 %v1317
        %1647 = vmatprep.subr.bf16.mxu0 0
        %1648 = vmatpush1.bf16.msra.mxu0 %v1318
        %1649 = vmatprep.subr.bf16.mxu0 0
        %1650 = vmatpush1.bf16.msra.mxu0 %v1319
        %1651 = vmatprep.mubr.bf16.mxu0 %v506
        %1652 = vmatmul.mubr.bf16.gmra.mrb[0].mxu0 %v503
        %v1653 = vpop.f32.mrb[0].mxu0
        %v1654 = vadd.f32 %v1613, %v1653
        %v1655 = vpop.f32.mrb[0].mxu0
        %v1656 = vpop.f32.mrb[0].mxu0
        %v1657 = vadd.f32 %v1616, %v1656
        %v1658 = vpop.f32.mrb[0].mxu0
        %1659 = vdwg.mxu0
        %1660 = vmatprep.subr.bf16.mxu0 0
        %1661 = vmatpush1.bf16.msra.mxu0 %v1320
        %1662 = vmatprep.subr.bf16.mxu0 0
        %1663 = vmatpush1.bf16.msra.mxu0 %v1321
        %1664 = vmatprep.subr.bf16.mxu0 0
        %1665 = vmatpush1.bf16.msra.mxu0 %v1322
        %1666 = vmatprep.subr.bf16.mxu0 0
        %1667 = vmatpush1.bf16.msra.mxu0 %v1323
        %1668 = vmatprep.subr.bf16.mxu0 0
        %1669 = vmatpush1.bf16.msra.mxu0 %v1324
        %1670 = vmatprep.subr.bf16.mxu0 0
        %1671 = vmatpush1.bf16.msra.mxu0 %v1325
        %1672 = vmatprep.subr.bf16.mxu0 0
        %1673 = vmatpush1.bf16.msra.mxu0 %v1326
        %1674 = vmatprep.subr.bf16.mxu0 0
        %1675 = vmatpush1.bf16.msra.mxu0 %v1327
        %1676 = vmatprep.subr.bf16.mxu0 0
        %1677 = vmatpush1.bf16.msra.mxu0 %v1328
        %1678 = vmatprep.subr.bf16.mxu0 0
        %1679 = vmatpush1.bf16.msra.mxu0 %v1329
        %1680 = vmatprep.subr.bf16.mxu0 0
        %1681 = vmatpush1.bf16.msra.mxu0 %v1330
        %1682 = vmatprep.subr.bf16.mxu0 0
        %1683 = vmatpush1.bf16.msra.mxu0 %v1331
        %1684 = vmatprep.subr.bf16.mxu0 0
        %1685 = vmatpush1.bf16.msra.mxu0 %v1332
        %1686 = vmatprep.subr.bf16.mxu0 0
        %1687 = vmatpush1.bf16.msra.mxu0 %v1333
        %1688 = vmatprep.subr.bf16.mxu0 0
        %1689 = vmatpush1.bf16.msra.mxu0 %v1334
        %1690 = vmatprep.subr.bf16.mxu0 0
        %1691 = vmatpush1.bf16.msra.mxu0 %v1335
        %1692 = vmatprep.mubr.bf16.mxu0 %v523
        %1693 = vmatmul.mubr.bf16.gmra.mrb[0].mxu0 %v509
        %v1694 = vpop.f32.mrb[0].mxu0
        %v1695 = vadd.f32 %v1654, %v1694
        %v1696 = vpop.f32.mrb[0].mxu0
        %v1697 = vpop.f32.mrb[0].mxu0
        %v1698 = vadd.f32 %v1657, %v1697
        %v1699 = vpop.f32.mrb[0].mxu0
        %1700 = vdwg.mxu0
        %1701 = vmatprep.subr.bf16.mxu0 0
        %1702 = vmatpush1.bf16.msra.mxu0 %v1336
        %1703 = vmatprep.subr.bf16.mxu0 0
        %1704 = vmatpush1.bf16.msra.mxu0 %v1337
        %1705 = vmatprep.subr.bf16.mxu0 0
        %1706 = vmatpush1.bf16.msra.mxu0 %v1338
        %1707 = vmatprep.subr.bf16.mxu0 0
        %1708 = vmatpush1.bf16.msra.mxu0 %v1339
        %1709 = vmatprep.subr.bf16.mxu0 0
        %1710 = vmatpush1.bf16.msra.mxu0 %v1340
        %1711 = vmatprep.subr.bf16.mxu0 0
        %1712 = vmatpush1.bf16.msra.mxu0 %v1341
        %1713 = vmatprep.subr.bf16.mxu0 0
        %1714 = vmatpush1.bf16.msra.mxu0 %v1342
        %1715 = vmatprep.subr.bf16.mxu0 0
        %1716 = vmatpush1.bf16.msra.mxu0 %v1343
        %1717 = vmatprep.subr.bf16.mxu0 0
        %1718 = vmatpush1.bf16.msra.mxu0 %v1344
        %1719 = vmatprep.subr.bf16.mxu0 0
        %1720 = vmatpush1.bf16.msra.mxu0 %v1345
        %1721 = vmatprep.subr.bf16.mxu0 0
        %1722 = vmatpush1.bf16.msra.mxu0 %v1346
        %1723 = vmatprep.subr.bf16.mxu0 0
        %1724 = vmatpush1.bf16.msra.mxu0 %v1347
        %1725 = vmatprep.subr.bf16.mxu0 0
        %1726 = vmatpush1.bf16.msra.mxu0 %v1348
        %1727 = vmatprep.subr.bf16.mxu0 0
        %1728 = vmatpush1.bf16.msra.mxu0 %v1349
        %1729 = vmatprep.subr.bf16.mxu0 0
        %1730 = vmatpush1.bf16.msra.mxu0 %v1350
        %1731 = vmatprep.subr.bf16.mxu0 0
        %1732 = vmatpush1.bf16.msra.mxu0 %v1351
        %1733 = vmatprep.mubr.bf16.mxu0 %v525
        %1734 = vmatmul.mubr.bf16.gmra.mrb[0].mxu0 %v524
        %v1735 = vpop.f32.mrb[0].mxu0
        %v1736 = vadd.f32 %v1695, %v1735
        %v1737 = vpop.f32.mrb[0].mxu0
        %v1738 = vpop.f32.mrb[0].mxu0
        %v1739 = vadd.f32 %v1698, %v1738
        %v1740 = vpop.f32.mrb[0].mxu0
        %1741 = vdwg.mxu0
        %1742 = vmatprep.subr.bf16.mxu0 0
        %1743 = vmatpush1.bf16.msra.mxu0 %v1352
        %1744 = vmatprep.subr.bf16.mxu0 0
        %1745 = vmatpush1.bf16.msra.mxu0 %v1353
        %1746 = vmatprep.subr.bf16.mxu0 0
        %1747 = vmatpush1.bf16.msra.mxu0 %v1354
        %1748 = vmatprep.subr.bf16.mxu0 0
        %1749 = vmatpush1.bf16.msra.mxu0 %v1355
        %1750 = vmatprep.subr.bf16.mxu0 0
        %1751 = vmatpush1.bf16.msra.mxu0 %v1356
        %1752 = vmatprep.subr.bf16.mxu0 0
        %1753 = vmatpush1.bf16.msra.mxu0 %v1357
        %1754 = vmatprep.subr.bf16.mxu0 0
        %1755 = vmatpush1.bf16.msra.mxu0 %v1358
        %1756 = vmatprep.subr.bf16.mxu0 0
        %1757 = vmatpush1.bf16.msra.mxu0 %v1359
        %1758 = vmatprep.subr.bf16.mxu0 0
        %1759 = vmatpush1.bf16.msra.mxu0 %v1360
        %1760 = vmatprep.subr.bf16.mxu0 0
        %1761 = vmatpush1.bf16.msra.mxu0 %v1361
        %1762 = vmatprep.subr.bf16.mxu0 0
        %1763 = vmatpush1.bf16.msra.mxu0 %v1362
        %1764 = vmatprep.subr.bf16.mxu0 0
        %1765 = vmatpush1.bf16.msra.mxu0 %v1363
        %1766 = vmatprep.subr.bf16.mxu0 0
        %1767 = vmatpush1.bf16.msra.mxu0 %v1364
        %1768 = vmatprep.subr.bf16.mxu0 0
        %1769 = vmatpush1.bf16.msra.mxu0 %v1365
        %1770 = vmatprep.subr.bf16.mxu0 0
        %1771 = vmatpush1.bf16.msra.mxu0 %v1366
        %1772 = vmatprep.subr.bf16.mxu0 0
        %1773 = vmatpush1.bf16.msra.mxu0 %v1367
        %1774 = vmatprep.mubr.bf16.mxu0 %v449
        %1775 = vmatmul.mubr.bf16.gmra.mrb[0].mxu0 %v448
        %v1776 = vpop.f32.mrb[0].mxu0
        %v1777 = vadd.f32 %v1736, %v1776
        %v1778 = vpop.f32.mrb[0].mxu0
        %v1779 = vpop.f32.mrb[0].mxu0
        %v1780 = vadd.f32 %v1739, %v1779
        %v1781 = vpop.f32.mrb[0].mxu0
        %1782 = vdwg.mxu0
        %1783 = vmatprep.subr.bf16.mxu0 0
        %1784 = vmatpush1.bf16.msra.mxu0 %v1368
        %1785 = vmatprep.subr.bf16.mxu0 0
        %1786 = vmatpush1.bf16.msra.mxu0 %v1369
        %1787 = vmatprep.subr.bf16.mxu0 0
        %1788 = vmatpush1.bf16.msra.mxu0 %v1370
        %1789 = vmatprep.subr.bf16.mxu0 0
        %1790 = vmatpush1.bf16.msra.mxu0 %v1371
        %1791 = vmatprep.subr.bf16.mxu0 0
        %1792 = vmatpush1.bf16.msra.mxu0 %v1372
        %1793 = vmatprep.subr.bf16.mxu0 0
        %1794 = vmatpush1.bf16.msra.mxu0 %v1373
        %1795 = vmatprep.subr.bf16.mxu0 0
        %1796 = vmatpush1.bf16.msra.mxu0 %v1374
        %1797 = vmatprep.subr.bf16.mxu0 0
        %1798 = vmatpush1.bf16.msra.mxu0 %v1375
        %1799 = vmatprep.subr.bf16.mxu0 0
        %1800 = vmatpush1.bf16.msra.mxu0 0
        %1801 = vmatprep.subr.bf16.mxu0 0
        %1802 = vmatpush1.bf16.msra.mxu0 0
        %1803 = vmatprep.subr.bf16.mxu0 0
        %1804 = vmatpush1.bf16.msra.mxu0 0
        %1805 = vmatprep.subr.bf16.mxu0 0
        %1806 = vmatpush1.bf16.msra.mxu0 0
        %1807 = vmatprep.subr.bf16.mxu0 0
        %1808 = vmatpush1.bf16.msra.mxu0 0
        %1809 = vmatprep.subr.bf16.mxu0 0
        %1810 = vmatpush1.bf16.msra.mxu0 0
        %1811 = vmatprep.subr.bf16.mxu0 0
        %1812 = vmatpush1.bf16.msra.mxu0 0
        %1813 = vmatprep.subr.bf16.mxu0 0
        %1814 = vmatpush1.bf16.msra.mxu0 0
        %1815 = vmatprep.mubr.bf16.mxu0 0
        %1816 = vmatmul.mubr.bf16.gmra.mrb[0].mxu0 %v450
        %v1817 = vpop.f32.mrb[0].mxu0
        %v1818 = vadd.f32 %v1777, %v1817
        %v1819 = vpop.f32.mrb[0].mxu0
        %v1820 = vpop.f32.mrb[0].mxu0
        %v1821 = vadd.f32 %v1780, %v1820
        %v1822 = vpop.f32.mrb[0].mxu0
        %1823 = vdwg.mxu0
        %v1824 = vmax.f32 %v1818, 0.0
        %v1825 = vmax.f32 %v1821, 0.0
        %v1826 = vpack.c.bf16 %v1825, %v1824
        %v1828 = vrot.slane %v1826, 4
        %vm1829 = vcmask 1043456
        %v1831 = vsel %vm1829, 0, %v1828
        %v1833 = vrot.slane %v1826, 5
        %vm1834 = vcmask 1042432
        %v1836 = vsel %vm1834, 0, %v1833
        %v1838 = vrot.slane %v1826, 6
        %v1840 = vsel %vm454, 0, %v1838
        %v1842 = vrot.slane %v1826, 7
        %v1844 = vsel %vm501, 0, %v1842
        %v1846 = vld [vmem:[#allocation5] sm:$0xf]
        %v1847 = vld [vmem:[#allocation5 + $0x4] sm:$0xf]
        %v1848 = vld [vmem:[#allocation5 + $0x8] sm:$0xf]
        %v1849 = vld [vmem:[#allocation5 + $0xc] sm:$0xf]
        %v1850 = vld [vmem:[#allocation5 + $0x10] sm:$0xf]
        %v1851 = vld [vmem:[#allocation5 + $0x14] sm:$0xf]
        %v1852 = vld [vmem:[#allocation5 + $0x18] sm:$0xf]
        %v1853 = vld [vmem:[#allocation5 + $0x1c] sm:$0xf]
        %v1854 = vld [vmem:[#allocation5 + $0x20] sm:$0xf]
        %v1855 = vld [vmem:[#allocation5 + $0x24] sm:$0xf]
        %v1856 = vld [vmem:[#allocation5 + $0x28] sm:$0xf]
        %v1857 = vld [vmem:[#allocation5 + $0x2c] sm:$0xf]
        %v1858 = vld [vmem:[#allocation5 + $0x30] sm:$0xf]
        %v1859 = vld [vmem:[#allocation5 + $0x34] sm:$0xf]
        %v1860 = vld [vmem:[#allocation5 + $0x38] sm:$0xf]
        %v1861 = vld [vmem:[#allocation5 + $0x3c] sm:$0xf]
        %v1862 = vld [vmem:[#allocation5 + $0x40] sm:$0xf]
        %v1863 = vld [vmem:[#allocation5 + $0x44] sm:$0xf]
        %v1864 = vld [vmem:[#allocation5 + $0x48] sm:$0xf]
        %v1865 = vld [vmem:[#allocation5 + $0x4c] sm:$0xf]
        %v1866 = vld [vmem:[#allocation5 + $0x50] sm:$0xf]
        %v1867 = vld [vmem:[#allocation5 + $0x54] sm:$0xf]
        %v1868 = vld [vmem:[#allocation5 + $0x58] sm:$0xf]
        %v1869 = vld [vmem:[#allocation5 + $0x5c] sm:$0xf]
        %v1870 = vld [vmem:[#allocation5 + $0x60] sm:$0xf]
        %v1871 = vld [vmem:[#allocation5 + $0x64] sm:$0xf]
        %v1872 = vld [vmem:[#allocation5 + $0x68] sm:$0xf]
        %v1873 = vld [vmem:[#allocation5 + $0x6c] sm:$0xf]
        %v1874 = vld [vmem:[#allocation5 + $0x70] sm:$0xf]
        %v1875 = vld [vmem:[#allocation5 + $0x74] sm:$0xf]
        %v1876 = vld [vmem:[#allocation5 + $0x78] sm:$0xf]
        %v1877 = vld [vmem:[#allocation5 + $0x7c] sm:$0xf]
        %v1878 = vld [vmem:[#allocation5 + $0x80] sm:$0xf]
        %v1879 = vld [vmem:[#allocation5 + $0x84] sm:$0xf]
        %v1880 = vld [vmem:[#allocation5 + $0x88] sm:$0xf]
        %v1881 = vld [vmem:[#allocation5 + $0x8c] sm:$0xf]
        %v1882 = vld [vmem:[#allocation5 + $0x90] sm:$0xf]
        %v1883 = vld [vmem:[#allocation5 + $0x94] sm:$0xf]
        %v1884 = vld [vmem:[#allocation5 + $0x98] sm:$0xf]
        %v1885 = vld [vmem:[#allocation5 + $0x9c] sm:$0xf]
        %v1886 = vld [vmem:[#allocation5 + $0xa0] sm:$0xf]
        %v1887 = vld [vmem:[#allocation5 + $0xa4] sm:$0xf]
        %v1888 = vld [vmem:[#allocation5 + $0xa8] sm:$0xf]
        %v1889 = vld [vmem:[#allocation5 + $0xac] sm:$0xf]
        %v1890 = vld [vmem:[#allocation5 + $0xb0] sm:$0xf]
        %v1891 = vld [vmem:[#allocation5 + $0xb4] sm:$0xf]
        %v1892 = vld [vmem:[#allocation5 + $0xb8] sm:$0xf]
        %v1893 = vld [vmem:[#allocation5 + $0xbc] sm:$0xf]
        %v1894 = vld [vmem:[#allocation5 + $0xc0] sm:$0xf]
        %v1895 = vld [vmem:[#allocation5 + $0xc4] sm:$0xf]
        %v1896 = vld [vmem:[#allocation5 + $0xc8] sm:$0xf]
        %v1897 = vld [vmem:[#allocation5 + $0xcc] sm:$0xf]
        %v1898 = vld [vmem:[#allocation5 + $0xd0] sm:$0xf]
        %v1899 = vld [vmem:[#allocation5 + $0xd4] sm:$0xf]
        %v1900 = vld [vmem:[#allocation5 + $0xd8] sm:$0xf]
        %v1901 = vld [vmem:[#allocation5 + $0xdc] sm:$0xf]
        %v1902 = vld [vmem:[#allocation5 + $0xe0] sm:$0xf]
        %v1903 = vld [vmem:[#allocation5 + $0xe4] sm:$0xf]
        %v1904 = vld [vmem:[#allocation5 + $0xe8] sm:$0xf]
        %v1905 = vld [vmem:[#allocation5 + $0xec] sm:$0xf]
        %v1906 = vld [vmem:[#allocation5 + $0xf0] sm:$0xf]
        %v1907 = vld [vmem:[#allocation5 + $0xf4] sm:$0xf]
        %v1908 = vld [vmem:[#allocation5 + $0xf8] sm:$0xf]
        %v1909 = vld [vmem:[#allocation5 + $0xfc] sm:$0xf]
        %v1910 = vld [vmem:[#allocation5 + $0x100] sm:$0xf]
        %v1911 = vld [vmem:[#allocation5 + $0x104] sm:$0xf]
        %v1912 = vld [vmem:[#allocation5 + $0x108] sm:$0xf]
        %v1913 = vld [vmem:[#allocation5 + $0x10c] sm:$0xf]
        %v1914 = vld [vmem:[#allocation5 + $0x110] sm:$0xf]
        %v1915 = vld [vmem:[#allocation5 + $0x114] sm:$0xf]
        %v1916 = vld [vmem:[#allocation5 + $0x118] sm:$0xf]
        %v1917 = vld [vmem:[#allocation5 + $0x11c] sm:$0xf]
        %v1918 = vld [vmem:[#allocation5 + $0x120] sm:$0xf]
        %v1919 = vld [vmem:[#allocation5 + $0x124] sm:$0xf]
        %v1920 = vld [vmem:[#allocation5 + $0x128] sm:$0xf]
        %v1921 = vld [vmem:[#allocation5 + $0x12c] sm:$0xf]
        %v1922 = vld [vmem:[#allocation5 + $0x130] sm:$0xf]
        %v1923 = vld [vmem:[#allocation5 + $0x134] sm:$0xf]
        %v1924 = vld [vmem:[#allocation5 + $0x138] sm:$0xf]
        %v1925 = vld [vmem:[#allocation5 + $0x13c] sm:$0xf]
        %s1926 = scalar_lea.vmem %s5, 1
        %v1927 = vld [vmem:[%s1926] sm:$0x1]
        %v1929 = vlaneseq
        %v1930 = vshrl.u32 %v1929, 7
        %v1931 = vsub.s32 0, %v1930
        %v1932 = vrot.slane %v1927, %v1931
        %v2014 = vunpack.c.l.b16 %v1846
        %v2015 = vunpack.c.l.b16 %v1847
        %v2016 = vunpack.c.l.b16 %v1848
        %v2017 = vunpack.c.l.b16 %v1849
        %v2018 = vunpack.c.l.b16 %v1850
        %v2019 = vunpack.c.l.b16 %v1851
        %v2020 = vunpack.c.l.b16 %v1852
        %v2021 = vunpack.c.l.b16 %v1853
        %v2022 = vunpack.c.l.b16 %v1854
        %v2023 = vunpack.c.l.b16 %v1855
        %v2024 = vunpack.c.l.b16 %v1856
        %v2025 = vunpack.c.l.b16 %v1857
        %v2026 = vunpack.c.l.b16 %v1858
        %v2027 = vunpack.c.l.b16 %v1859
        %v2028 = vunpack.c.l.b16 %v1860
        %v2029 = vunpack.c.l.b16 %v1861
        %v2030 = vunpack.c.l.b16 %v1862
        %v2031 = vunpack.c.l.b16 %v1863
        %v2032 = vunpack.c.l.b16 %v1864
        %v2033 = vunpack.c.l.b16 %v1865
        %v2034 = vunpack.c.l.b16 %v1866
        %v2035 = vunpack.c.l.b16 %v1867
        %v2036 = vunpack.c.l.b16 %v1868
        %v2037 = vunpack.c.l.b16 %v1869
        %v2038 = vunpack.c.l.b16 %v1870
        %v2039 = vunpack.c.l.b16 %v1871
        %v2040 = vunpack.c.l.b16 %v1872
        %v2041 = vunpack.c.l.b16 %v1873
        %v2042 = vunpack.c.l.b16 %v1874
        %v2043 = vunpack.c.l.b16 %v1875
        %v2044 = vunpack.c.l.b16 %v1876
        %v2045 = vunpack.c.l.b16 %v1877
        %v2046 = vunpack.c.l.b16 %v1878
        %v2047 = vunpack.c.l.b16 %v1879
        %v2048 = vunpack.c.l.b16 %v1880
        %v2049 = vunpack.c.l.b16 %v1881
        %v2050 = vunpack.c.l.b16 %v1882
        %v2051 = vunpack.c.l.b16 %v1883
        %v2052 = vunpack.c.l.b16 %v1884
        %v2053 = vunpack.c.l.b16 %v1885
        %v2054 = vunpack.c.l.b16 %v1886
        %v2055 = vunpack.c.l.b16 %v1887
        %v2056 = vunpack.c.l.b16 %v1888
        %v2057 = vunpack.c.l.b16 %v1889
        %v2058 = vunpack.c.l.b16 %v1890
        %v2059 = vunpack.c.l.b16 %v1891
        %v2060 = vunpack.c.l.b16 %v1892
        %v2061 = vunpack.c.l.b16 %v1893
        %v2062 = vunpack.c.l.b16 %v1894
        %v2063 = vunpack.c.l.b16 %v1895
        %v2064 = vunpack.c.l.b16 %v1896
        %v2065 = vunpack.c.l.b16 %v1897
        %v2066 = vunpack.c.l.b16 %v1898
        %v2067 = vunpack.c.l.b16 %v1899
        %v2068 = vunpack.c.l.b16 %v1900
        %v2069 = vunpack.c.l.b16 %v1901
        %v2070 = vunpack.c.l.b16 %v1902
        %v2071 = vunpack.c.l.b16 %v1903
        %v2072 = vunpack.c.l.b16 %v1904
        %v2073 = vunpack.c.l.b16 %v1905
        %v2074 = vunpack.c.l.b16 %v1906
        %v2075 = vunpack.c.l.b16 %v1907
        %v2076 = vunpack.c.l.b16 %v1908
        %v2077 = vunpack.c.l.b16 %v1909
        %v2078 = vunpack.c.l.b16 %v1910
        %v2079 = vunpack.c.l.b16 %v1911
        %v2080 = vunpack.c.l.b16 %v1912
        %v2081 = vunpack.c.l.b16 %v1913
        %v2082 = vunpack.c.l.b16 %v1914
        %v2083 = vunpack.c.l.b16 %v1915
        %v2084 = vunpack.c.l.b16 %v1916
        %v2085 = vunpack.c.l.b16 %v1917
        %v2086 = vunpack.c.l.b16 %v1918
        %v2087 = vunpack.c.l.b16 %v1919
        %v2088 = vunpack.c.l.b16 %v1920
        %v2089 = vunpack.c.l.b16 %v1921
        %v2090 = vunpack.c.l.b16 %v1922
        %v2091 = vunpack.c.l.b16 %v1923
        %v2092 = vunpack.c.l.b16 %v1924
        %v2093 = vunpack.c.l.b16 %v1925
        %v2094 = vpack.c.b16 %v2015, %v2014
        %v2095 = vpack.c.b16 %v2017, %v2016
        %v2096 = vpack.c.b16 %v2019, %v2018
        %v2097 = vpack.c.b16 %v2021, %v2020
        %v2098 = vpack.c.b16 %v2023, %v2022
        %v2099 = vpack.c.b16 %v2025, %v2024
        %v2100 = vpack.c.b16 %v2027, %v2026
        %v2101 = vpack.c.b16 %v2029, %v2028
        %v2102 = vpack.c.b16 %v2031, %v2030
        %v2103 = vpack.c.b16 %v2033, %v2032
        %v2104 = vpack.c.b16 %v2035, %v2034
        %v2105 = vpack.c.b16 %v2037, %v2036
        %v2106 = vpack.c.b16 %v2039, %v2038
        %v2107 = vpack.c.b16 %v2041, %v2040
        %v2108 = vpack.c.b16 %v2043, %v2042
        %v2109 = vpack.c.b16 %v2045, %v2044
        %v2110 = vpack.c.b16 %v2047, %v2046
        %v2111 = vpack.c.b16 %v2049, %v2048
        %v2112 = vpack.c.b16 %v2051, %v2050
        %v2113 = vpack.c.b16 %v2053, %v2052
        %v2114 = vpack.c.b16 %v2055, %v2054
        %v2115 = vpack.c.b16 %v2057, %v2056
        %v2116 = vpack.c.b16 %v2059, %v2058
        %v2117 = vpack.c.b16 %v2061, %v2060
        %v2118 = vpack.c.b16 %v2063, %v2062
        %v2119 = vpack.c.b16 %v2065, %v2064
        %v2120 = vpack.c.b16 %v2067, %v2066
        %v2121 = vpack.c.b16 %v2069, %v2068
        %v2122 = vpack.c.b16 %v2071, %v2070
        %v2123 = vpack.c.b16 %v2073, %v2072
        %v2124 = vpack.c.b16 %v2075, %v2074
        %v2125 = vpack.c.b16 %v2077, %v2076
        %v2126 = vpack.c.b16 %v2079, %v2078
        %v2127 = vpack.c.b16 %v2081, %v2080
        %v2128 = vpack.c.b16 %v2083, %v2082
        %v2129 = vpack.c.b16 %v2085, %v2084
        %v2130 = vpack.c.b16 %v2087, %v2086
        %v2131 = vpack.c.b16 %v2089, %v2088
        %v2132 = vpack.c.b16 %v2091, %v2090
        %v2133 = vpack.c.b16 %v2093, %v2092
        %2174 = vmatprep.subr.bf16.mxu0 0
        %2175 = vmatpush1.bf16.msra.mxu0 %v2094
        %2176 = vmatprep.subr.bf16.mxu0 0
        %2177 = vmatpush1.bf16.msra.mxu0 %v2095
        %2178 = vmatprep.subr.bf16.mxu0 0
        %2179 = vmatpush1.bf16.msra.mxu0 %v2096
        %2180 = vmatprep.subr.bf16.mxu0 0
        %2181 = vmatpush1.bf16.msra.mxu0 %v2097
        %2182 = vmatprep.subr.bf16.mxu0 0
        %2183 = vmatpush1.bf16.msra.mxu0 %v2098
        %2184 = vmatprep.subr.bf16.mxu0 0
        %2185 = vmatpush1.bf16.msra.mxu0 %v2099
        %2186 = vmatprep.subr.bf16.mxu0 0
        %2187 = vmatpush1.bf16.msra.mxu0 %v2100
        %2188 = vmatprep.subr.bf16.mxu0 0
        %2189 = vmatpush1.bf16.msra.mxu0 %v2101
        %2190 = vmatprep.subr.bf16.mxu0 0
        %2191 = vmatpush1.bf16.msra.mxu0 %v2102
        %2192 = vmatprep.subr.bf16.mxu0 0
        %2193 = vmatpush1.bf16.msra.mxu0 %v2103
        %2194 = vmatprep.subr.bf16.mxu0 0
        %2195 = vmatpush1.bf16.msra.mxu0 %v2104
        %2196 = vmatprep.subr.bf16.mxu0 0
        %2197 = vmatpush1.bf16.msra.mxu0 %v2105
        %2198 = vmatprep.subr.bf16.mxu0 0
        %2199 = vmatpush1.bf16.msra.mxu0 %v2106
        %2200 = vmatprep.subr.bf16.mxu0 0
        %2201 = vmatpush1.bf16.msra.mxu0 %v2107
        %2202 = vmatprep.subr.bf16.mxu0 0
        %2203 = vmatpush1.bf16.msra.mxu0 %v2108
        %2204 = vmatprep.subr.bf16.mxu0 0
        %2205 = vmatpush1.bf16.msra.mxu0 %v2109
        %2206 = vmatprep.mubr.bf16.mxu0 %v1836
        %2207 = vmatmul.mubr.bf16.gmra.mrb[0].mxu0 %v1831
        %v2208 = vpop.f32.mrb[0].mxu0
        %v2209 = vadd.f32 %v1932, %v2208
        %v2210 = vpop.f32.mrb[0].mxu0
        %v2211 = vpop.f32.mrb[0].mxu0
        %v2212 = vadd.f32 %v1932, %v2211
        %v2213 = vpop.f32.mrb[0].mxu0
        %2214 = vdwg.mxu0
        %2215 = vmatprep.subr.bf16.mxu0 0
        %2216 = vmatpush1.bf16.msra.mxu0 %v2110
        %2217 = vmatprep.subr.bf16.mxu0 0
        %2218 = vmatpush1.bf16.msra.mxu0 %v2111
        %2219 = vmatprep.subr.bf16.mxu0 0
        %2220 = vmatpush1.bf16.msra.mxu0 %v2112
        %2221 = vmatprep.subr.bf16.mxu0 0
        %2222 = vmatpush1.bf16.msra.mxu0 %v2113
        %2223 = vmatprep.subr.bf16.mxu0 0
        %2224 = vmatpush1.bf16.msra.mxu0 %v2114
        %2225 = vmatprep.subr.bf16.mxu0 0
        %2226 = vmatpush1.bf16.msra.mxu0 %v2115
        %2227 = vmatprep.subr.bf16.mxu0 0
        %2228 = vmatpush1.bf16.msra.mxu0 %v2116
        %2229 = vmatprep.subr.bf16.mxu0 0
        %2230 = vmatpush1.bf16.msra.mxu0 %v2117
        %2231 = vmatprep.subr.bf16.mxu0 0
        %2232 = vmatpush1.bf16.msra.mxu0 %v2118
        %2233 = vmatprep.subr.bf16.mxu0 0
        %2234 = vmatpush1.bf16.msra.mxu0 %v2119
        %2235 = vmatprep.subr.bf16.mxu0 0
        %2236 = vmatpush1.bf16.msra.mxu0 %v2120
        %2237 = vmatprep.subr.bf16.mxu0 0
        %2238 = vmatpush1.bf16.msra.mxu0 %v2121
        %2239 = vmatprep.subr.bf16.mxu0 0
        %2240 = vmatpush1.bf16.msra.mxu0 %v2122
        %2241 = vmatprep.subr.bf16.mxu0 0
        %2242 = vmatpush1.bf16.msra.mxu0 %v2123
        %2243 = vmatprep.subr.bf16.mxu0 0
        %2244 = vmatpush1.bf16.msra.mxu0 %v2124
        %2245 = vmatprep.subr.bf16.mxu0 0
        %2246 = vmatpush1.bf16.msra.mxu0 %v2125
        %2247 = vmatprep.mubr.bf16.mxu0 %v1844
        %2248 = vmatmul.mubr.bf16.gmra.mrb[0].mxu0 %v1840
        %v2249 = vpop.f32.mrb[0].mxu0
        %v2250 = vadd.f32 %v2209, %v2249
        %v2251 = vpop.f32.mrb[0].mxu0
        %v2252 = vpop.f32.mrb[0].mxu0
        %v2253 = vadd.f32 %v2212, %v2252
        %v2254 = vpop.f32.mrb[0].mxu0
        %2255 = vdwg.mxu0
        %2256 = vmatprep.subr.bf16.mxu0 0
        %2257 = vmatpush1.bf16.msra.mxu0 %v2126
        %2258 = vmatprep.subr.bf16.mxu0 0
        %2259 = vmatpush1.bf16.msra.mxu0 %v2127
        %2260 = vmatprep.subr.bf16.mxu0 0
        %2261 = vmatpush1.bf16.msra.mxu0 %v2128
        %2262 = vmatprep.subr.bf16.mxu0 0
        %2263 = vmatpush1.bf16.msra.mxu0 %v2129
        %2264 = vmatprep.subr.bf16.mxu0 0
        %2265 = vmatpush1.bf16.msra.mxu0 %v2130
        %2266 = vmatprep.subr.bf16.mxu0 0
        %2267 = vmatpush1.bf16.msra.mxu0 %v2131
        %2268 = vmatprep.subr.bf16.mxu0 0
        %2269 = vmatpush1.bf16.msra.mxu0 %v2132
        %2270 = vmatprep.subr.bf16.mxu0 0
        %2271 = vmatpush1.bf16.msra.mxu0 %v2133
        %2272 = vmatprep.subr.bf16.mxu0 0
        %2273 = vmatpush1.bf16.msra.mxu0 0
        %2274 = vmatprep.subr.bf16.mxu0 0
        %2275 = vmatpush1.bf16.msra.mxu0 0
        %2276 = vmatprep.subr.bf16.mxu0 0
        %2277 = vmatpush1.bf16.msra.mxu0 0
        %2278 = vmatprep.subr.bf16.mxu0 0
        %2279 = vmatpush1.bf16.msra.mxu0 0
        %2280 = vmatprep.subr.bf16.mxu0 0
        %2281 = vmatpush1.bf16.msra.mxu0 0
        %2282 = vmatprep.subr.bf16.mxu0 0
        %2283 = vmatpush1.bf16.msra.mxu0 0
        %2284 = vmatprep.subr.bf16.mxu0 0
        %2285 = vmatpush1.bf16.msra.mxu0 0
        %2286 = vmatprep.subr.bf16.mxu0 0
        %2287 = vmatpush1.bf16.msra.mxu0 0
        %2288 = vmatprep.mubr.bf16.mxu0 0
        %2289 = vmatmul.mubr.bf16.gmra.mrb[0].mxu0 %v1826
        %v2290 = vpop.f32.mrb[0].mxu0
        %v2291 = vadd.f32 %v2250, %v2290
        %v2292 = vpop.f32.mrb[0].mxu0
        %v2293 = vpop.f32.mrb[0].mxu0
        %v2294 = vadd.f32 %v2253, %v2293
        %v2295 = vpop.f32.mrb[0].mxu0
        %2296 = vdwg.mxu0
        %v2297 = vmax.f32 %v2291, 0.0
        %v2298 = vmax.f32 %v2294, 0.0
        %v2299 = vpack.c.bf16 %v2298, %v2297
        %v2301 = vrot.slane %v2299, 2
        %vm2302 = vcmask 1045504
        %v2304 = vsel %vm2302, 0, %v2301
        %v2306 = vrot.slane %v2299, 4
        %v2308 = vsel %vm1829, 0, %v2306
        %v2310 = vrot.slane %v2299, 6
        %v2312 = vsel %vm454, 0, %v2310
        %s2314 = scalar_lea.vmem [#allocation5], 320
        %v2315 = vld [vmem:[%s2314] sm:$0xf]
        %v2316 = vld [vmem:[%s2314 + $0x4] sm:$0xf]
        %v2317 = vld [vmem:[%s2314 + $0x8] sm:$0xf]
        %v2318 = vld [vmem:[%s2314 + $0xc] sm:$0xf]
        %v2319 = vld [vmem:[%s2314 + $0x10] sm:$0xf]
        %v2320 = vld [vmem:[%s2314 + $0x14] sm:$0xf]
        %v2321 = vld [vmem:[%s2314 + $0x18] sm:$0xf]
        %v2322 = vld [vmem:[%s2314 + $0x1c] sm:$0xf]
        %v2323 = vld [vmem:[%s2314 + $0x20] sm:$0xf]
        %v2324 = vld [vmem:[%s2314 + $0x24] sm:$0xf]
        %v2325 = vld [vmem:[%s2314 + $0x28] sm:$0xf]
        %v2326 = vld [vmem:[%s2314 + $0x2c] sm:$0xf]
        %v2327 = vld [vmem:[%s2314 + $0x30] sm:$0xf]
        %v2328 = vld [vmem:[%s2314 + $0x34] sm:$0xf]
        %v2329 = vld [vmem:[%s2314 + $0x38] sm:$0xf]
        %v2330 = vld [vmem:[%s2314 + $0x3c] sm:$0xf]
        %v2331 = vld [vmem:[%s2314 + $0x40] sm:$0xf]
        %v2332 = vld [vmem:[%s2314 + $0x44] sm:$0xf]
        %v2333 = vld [vmem:[%s2314 + $0x48] sm:$0xf]
        %v2334 = vld [vmem:[%s2314 + $0x4c] sm:$0xf]
        %v2335 = vld [vmem:[%s2314 + $0x50] sm:$0xf]
        %v2336 = vld [vmem:[%s2314 + $0x54] sm:$0xf]
        %v2337 = vld [vmem:[%s2314 + $0x58] sm:$0xf]
        %v2338 = vld [vmem:[%s2314 + $0x5c] sm:$0xf]
        %v2339 = vld [vmem:[%s2314 + $0x60] sm:$0xf]
        %v2340 = vld [vmem:[%s2314 + $0x64] sm:$0xf]
        %v2341 = vld [vmem:[%s2314 + $0x68] sm:$0xf]
        %v2342 = vld [vmem:[%s2314 + $0x6c] sm:$0xf]
        %v2343 = vld [vmem:[%s2314 + $0x70] sm:$0xf]
        %v2344 = vld [vmem:[%s2314 + $0x74] sm:$0xf]
        %v2345 = vld [vmem:[%s2314 + $0x78] sm:$0xf]
        %v2346 = vld [vmem:[%s2314 + $0x7c] sm:$0xf]
        %v2347 = vld [vmem:[%s2314 + $0x80] sm:$0xf]
        %v2348 = vld [vmem:[%s2314 + $0x84] sm:$0xf]
        %v2349 = vld [vmem:[%s2314 + $0x88] sm:$0xf]
        %v2350 = vld [vmem:[%s2314 + $0x8c] sm:$0xf]
        %v2351 = vld [vmem:[%s2314 + $0x90] sm:$0xf]
        %v2352 = vld [vmem:[%s2314 + $0x94] sm:$0xf]
        %v2353 = vld [vmem:[%s2314 + $0x98] sm:$0xf]
        %v2354 = vld [vmem:[%s2314 + $0x9c] sm:$0xf]
        %v2355 = vld [vmem:[%s2314 + $0xa0] sm:$0xf]
        %v2356 = vld [vmem:[%s2314 + $0xa4] sm:$0xf]
        %v2357 = vld [vmem:[%s2314 + $0xa8] sm:$0xf]
        %v2358 = vld [vmem:[%s2314 + $0xac] sm:$0xf]
        %v2359 = vld [vmem:[%s2314 + $0xb0] sm:$0xf]
        %v2360 = vld [vmem:[%s2314 + $0xb4] sm:$0xf]
        %v2361 = vld [vmem:[%s2314 + $0xb8] sm:$0xf]
        %v2362 = vld [vmem:[%s2314 + $0xbc] sm:$0xf]
        %v2363 = vld [vmem:[%s2314 + $0xc0] sm:$0xf]
        %v2364 = vld [vmem:[%s2314 + $0xc4] sm:$0xf]
        %v2365 = vld [vmem:[%s2314 + $0xc8] sm:$0xf]
        %v2366 = vld [vmem:[%s2314 + $0xcc] sm:$0xf]
        %v2367 = vld [vmem:[%s2314 + $0xd0] sm:$0xf]
        %v2368 = vld [vmem:[%s2314 + $0xd4] sm:$0xf]
        %v2369 = vld [vmem:[%s2314 + $0xd8] sm:$0xf]
        %v2370 = vld [vmem:[%s2314 + $0xdc] sm:$0xf]
        %v2371 = vld [vmem:[%s2314 + $0xe0] sm:$0xf]
        %v2372 = vld [vmem:[%s2314 + $0xe4] sm:$0xf]
        %v2373 = vld [vmem:[%s2314 + $0xe8] sm:$0xf]
        %v2374 = vld [vmem:[%s2314 + $0xec] sm:$0xf]
        %v2375 = vld [vmem:[%s2314 + $0xf0] sm:$0xf]
        %v2376 = vld [vmem:[%s2314 + $0xf4] sm:$0xf]
        %v2377 = vld [vmem:[%s2314 + $0xf8] sm:$0xf]
        %v2378 = vld [vmem:[%s2314 + $0xfc] sm:$0xf]
        %v2379 = vld [vmem:[%s2314 + $0x100] sm:$0xf]
        %v2380 = vld [vmem:[%s2314 + $0x104] sm:$0xf]
        %v2381 = vld [vmem:[%s2314 + $0x108] sm:$0xf]
        %v2382 = vld [vmem:[%s2314 + $0x10c] sm:$0xf]
        %v2383 = vld [vmem:[%s2314 + $0x110] sm:$0xf]
        %v2384 = vld [vmem:[%s2314 + $0x114] sm:$0xf]
        %v2385 = vld [vmem:[%s2314 + $0x118] sm:$0xf]
        %v2386 = vld [vmem:[%s2314 + $0x11c] sm:$0xf]
        %v2387 = vld [vmem:[%s2314 + $0x120] sm:$0xf]
        %v2388 = vld [vmem:[%s2314 + $0x124] sm:$0xf]
        %v2389 = vld [vmem:[%s2314 + $0x128] sm:$0xf]
        %v2390 = vld [vmem:[%s2314 + $0x12c] sm:$0xf]
        %v2391 = vld [vmem:[%s2314 + $0x130] sm:$0xf]
        %v2392 = vld [vmem:[%s2314 + $0x134] sm:$0xf]
        %v2393 = vld [vmem:[%s2314 + $0x138] sm:$0xf]
        %v2394 = vld [vmem:[%s2314 + $0x13c] sm:$0xf]
        %s2395 = scalar_lea.vmem %s5, 2
        %v2396 = vld [vmem:[%s2395] sm:$0x1]
        %v2398 = vlaneseq
        %v2399 = vshrl.u32 %v2398, 7
        %v2400 = vsub.s32 0, %v2399
        %v2401 = vrot.slane %v2396, %v2400
        %v2483 = vunpack.c.l.b16 %v2315
        %v2484 = vunpack.c.l.b16 %v2316
        %v2485 = vunpack.c.l.b16 %v2317
        %v2486 = vunpack.c.l.b16 %v2318
        %v2487 = vunpack.c.l.b16 %v2319
        %v2488 = vunpack.c.l.b16 %v2320
        %v2489 = vunpack.c.l.b16 %v2321
        %v2490 = vunpack.c.l.b16 %v2322
        %v2491 = vunpack.c.l.b16 %v2323
        %v2492 = vunpack.c.l.b16 %v2324
        %v2493 = vunpack.c.l.b16 %v2325
        %v2494 = vunpack.c.l.b16 %v2326
        %v2495 = vunpack.c.l.b16 %v2327
        %v2496 = vunpack.c.l.b16 %v2328
        %v2497 = vunpack.c.l.b16 %v2329
        %v2498 = vunpack.c.l.b16 %v2330
        %v2499 = vunpack.c.l.b16 %v2331
        %v2500 = vunpack.c.l.b16 %v2332
        %v2501 = vunpack.c.l.b16 %v2333
        %v2502 = vunpack.c.l.b16 %v2334
        %v2503 = vunpack.c.l.b16 %v2335
        %v2504 = vunpack.c.l.b16 %v2336
        %v2505 = vunpack.c.l.b16 %v2337
        %v2506 = vunpack.c.l.b16 %v2338
        %v2507 = vunpack.c.l.b16 %v2339
        %v2508 = vunpack.c.l.b16 %v2340
        %v2509 = vunpack.c.l.b16 %v2341
        %v2510 = vunpack.c.l.b16 %v2342
        %v2511 = vunpack.c.l.b16 %v2343
        %v2512 = vunpack.c.l.b16 %v2344
        %v2513 = vunpack.c.l.b16 %v2345
        %v2514 = vunpack.c.l.b16 %v2346
        %v2515 = vunpack.c.l.b16 %v2347
        %v2516 = vunpack.c.l.b16 %v2348
        %v2517 = vunpack.c.l.b16 %v2349
        %v2518 = vunpack.c.l.b16 %v2350
        %v2519 = vunpack.c.l.b16 %v2351
        %v2520 = vunpack.c.l.b16 %v2352
        %v2521 = vunpack.c.l.b16 %v2353
        %v2522 = vunpack.c.l.b16 %v2354
        %v2523 = vunpack.c.l.b16 %v2355
        %v2524 = vunpack.c.l.b16 %v2356
        %v2525 = vunpack.c.l.b16 %v2357
        %v2526 = vunpack.c.l.b16 %v2358
        %v2527 = vunpack.c.l.b16 %v2359
        %v2528 = vunpack.c.l.b16 %v2360
        %v2529 = vunpack.c.l.b16 %v2361
        %v2530 = vunpack.c.l.b16 %v2362
        %v2531 = vunpack.c.l.b16 %v2363
        %v2532 = vunpack.c.l.b16 %v2364
        %v2533 = vunpack.c.l.b16 %v2365
        %v2534 = vunpack.c.l.b16 %v2366
        %v2535 = vunpack.c.l.b16 %v2367
        %v2536 = vunpack.c.l.b16 %v2368
        %v2537 = vunpack.c.l.b16 %v2369
        %v2538 = vunpack.c.l.b16 %v2370
        %v2539 = vunpack.c.l.b16 %v2371
        %v2540 = vunpack.c.l.b16 %v2372
        %v2541 = vunpack.c.l.b16 %v2373
        %v2542 = vunpack.c.l.b16 %v2374
        %v2543 = vunpack.c.l.b16 %v2375
        %v2544 = vunpack.c.l.b16 %v2376
        %v2545 = vunpack.c.l.b16 %v2377
        %v2546 = vunpack.c.l.b16 %v2378
        %v2547 = vunpack.c.l.b16 %v2379
        %v2548 = vunpack.c.l.b16 %v2380
        %v2549 = vunpack.c.l.b16 %v2381
        %v2550 = vunpack.c.l.b16 %v2382
        %v2551 = vunpack.c.l.b16 %v2383
        %v2552 = vunpack.c.l.b16 %v2384
        %v2553 = vunpack.c.l.b16 %v2385
        %v2554 = vunpack.c.l.b16 %v2386
        %v2555 = vunpack.c.l.b16 %v2387
        %v2556 = vunpack.c.l.b16 %v2388
        %v2557 = vunpack.c.l.b16 %v2389
        %v2558 = vunpack.c.l.b16 %v2390
        %v2559 = vunpack.c.l.b16 %v2391
        %v2560 = vunpack.c.l.b16 %v2392
        %v2561 = vunpack.c.l.b16 %v2393
        %v2562 = vunpack.c.l.b16 %v2394
        %v2563 = vpack.c.b16 %v2484, %v2483
        %v2564 = vpack.c.b16 %v2486, %v2485
        %v2565 = vpack.c.b16 %v2488, %v2487
        %v2566 = vpack.c.b16 %v2490, %v2489
        %v2567 = vpack.c.b16 %v2492, %v2491
        %v2568 = vpack.c.b16 %v2494, %v2493
        %v2569 = vpack.c.b16 %v2496, %v2495
        %v2570 = vpack.c.b16 %v2498, %v2497
        %v2571 = vpack.c.b16 %v2500, %v2499
        %v2572 = vpack.c.b16 %v2502, %v2501
        %v2573 = vpack.c.b16 %v2504, %v2503
        %v2574 = vpack.c.b16 %v2506, %v2505
        %v2575 = vpack.c.b16 %v2508, %v2507
        %v2576 = vpack.c.b16 %v2510, %v2509
        %v2577 = vpack.c.b16 %v2512, %v2511
        %v2578 = vpack.c.b16 %v2514, %v2513
        %v2579 = vpack.c.b16 %v2516, %v2515
        %v2580 = vpack.c.b16 %v2518, %v2517
        %v2581 = vpack.c.b16 %v2520, %v2519
        %v2582 = vpack.c.b16 %v2522, %v2521
        %v2583 = vpack.c.b16 %v2524, %v2523
        %v2584 = vpack.c.b16 %v2526, %v2525
        %v2585 = vpack.c.b16 %v2528, %v2527
        %v2586 = vpack.c.b16 %v2530, %v2529
        %v2587 = vpack.c.b16 %v2532, %v2531
        %v2588 = vpack.c.b16 %v2534, %v2533
        %v2589 = vpack.c.b16 %v2536, %v2535
        %v2590 = vpack.c.b16 %v2538, %v2537
        %v2591 = vpack.c.b16 %v2540, %v2539
        %v2592 = vpack.c.b16 %v2542, %v2541
        %v2593 = vpack.c.b16 %v2544, %v2543
        %v2594 = vpack.c.b16 %v2546, %v2545
        %v2595 = vpack.c.b16 %v2548, %v2547
        %v2596 = vpack.c.b16 %v2550, %v2549
        %v2597 = vpack.c.b16 %v2552, %v2551
        %v2598 = vpack.c.b16 %v2554, %v2553
        %v2599 = vpack.c.b16 %v2556, %v2555
        %v2600 = vpack.c.b16 %v2558, %v2557
        %v2601 = vpack.c.b16 %v2560, %v2559
        %v2602 = vpack.c.b16 %v2562, %v2561
        %2643 = vmatprep.subr.bf16.mxu0 0
        %2644 = vmatpush1.bf16.msra.mxu0 %v2563
        %2645 = vmatprep.subr.bf16.mxu0 0
        %2646 = vmatpush1.bf16.msra.mxu0 %v2564
        %2647 = vmatprep.subr.bf16.mxu0 0
        %2648 = vmatpush1.bf16.msra.mxu0 %v2565
        %2649 = vmatprep.subr.bf16.mxu0 0
        %2650 = vmatpush1.bf16.msra.mxu0 %v2566
        %2651 = vmatprep.subr.bf16.mxu0 0
        %2652 = vmatpush1.bf16.msra.mxu0 %v2567
        %2653 = vmatprep.subr.bf16.mxu0 0
        %2654 = vmatpush1.bf16.msra.mxu0 %v2568
        %2655 = vmatprep.subr.bf16.mxu0 0
        %2656 = vmatpush1.bf16.msra.mxu0 %v2569
        %2657 = vmatprep.subr.bf16.mxu0 0
        %2658 = vmatpush1.bf16.msra.mxu0 %v2570
        %2659 = vmatprep.subr.bf16.mxu0 0
        %2660 = vmatpush1.bf16.msra.mxu0 %v2571
        %2661 = vmatprep.subr.bf16.mxu0 0
        %2662 = vmatpush1.bf16.msra.mxu0 %v2572
        %2663 = vmatprep.subr.bf16.mxu0 0
        %2664 = vmatpush1.bf16.msra.mxu0 %v2573
        %2665 = vmatprep.subr.bf16.mxu0 0
        %2666 = vmatpush1.bf16.msra.mxu0 %v2574
        %2667 = vmatprep.subr.bf16.mxu0 0
        %2668 = vmatpush1.bf16.msra.mxu0 %v2575
        %2669 = vmatprep.subr.bf16.mxu0 0
        %2670 = vmatpush1.bf16.msra.mxu0 %v2576
        %2671 = vmatprep.subr.bf16.mxu0 0
        %2672 = vmatpush1.bf16.msra.mxu0 %v2577
        %2673 = vmatprep.subr.bf16.mxu0 0
        %2674 = vmatpush1.bf16.msra.mxu0 %v2578
        %2675 = vmatprep.mubr.bf16.mxu0 %v2304
        %2676 = vmatmul.mubr.bf16.gmra.mrb[0].mxu0 0
        %v2677 = vpop.f32.mrb[0].mxu0
        %v2678 = vadd.f32 %v2401, %v2677
        %v2679 = vpop.f32.mrb[0].mxu0
        %v2680 = vpop.f32.mrb[0].mxu0
        %v2681 = vadd.f32 %v2401, %v2680
        %v2682 = vpop.f32.mrb[0].mxu0
        %2683 = vdwg.mxu0
        %2684 = vmatprep.subr.bf16.mxu0 0
        %2685 = vmatpush1.bf16.msra.mxu0 %v2579
        %2686 = vmatprep.subr.bf16.mxu0 0
        %2687 = vmatpush1.bf16.msra.mxu0 %v2580
        %2688 = vmatprep.subr.bf16.mxu0 0
        %2689 = vmatpush1.bf16.msra.mxu0 %v2581
        %2690 = vmatprep.subr.bf16.mxu0 0
        %2691 = vmatpush1.bf16.msra.mxu0 %v2582
        %2692 = vmatprep.subr.bf16.mxu0 0
        %2693 = vmatpush1.bf16.msra.mxu0 %v2583
        %2694 = vmatprep.subr.bf16.mxu0 0
        %2695 = vmatpush1.bf16.msra.mxu0 %v2584
        %2696 = vmatprep.subr.bf16.mxu0 0
        %2697 = vmatpush1.bf16.msra.mxu0 %v2585
        %2698 = vmatprep.subr.bf16.mxu0 0
        %2699 = vmatpush1.bf16.msra.mxu0 %v2586
        %2700 = vmatprep.subr.bf16.mxu0 0
        %2701 = vmatpush1.bf16.msra.mxu0 %v2587
        %2702 = vmatprep.subr.bf16.mxu0 0
        %2703 = vmatpush1.bf16.msra.mxu0 %v2588
        %2704 = vmatprep.subr.bf16.mxu0 0
        %2705 = vmatpush1.bf16.msra.mxu0 %v2589
        %2706 = vmatprep.subr.bf16.mxu0 0
        %2707 = vmatpush1.bf16.msra.mxu0 %v2590
        %2708 = vmatprep.subr.bf16.mxu0 0
        %2709 = vmatpush1.bf16.msra.mxu0 %v2591
        %2710 = vmatprep.subr.bf16.mxu0 0
        %2711 = vmatpush1.bf16.msra.mxu0 %v2592
        %2712 = vmatprep.subr.bf16.mxu0 0
        %2713 = vmatpush1.bf16.msra.mxu0 %v2593
        %2714 = vmatprep.subr.bf16.mxu0 0
        %2715 = vmatpush1.bf16.msra.mxu0 %v2594
        %2716 = vmatprep.mubr.bf16.mxu0 %v2312
        %2717 = vmatmul.mubr.bf16.gmra.mrb[0].mxu0 %v2308
        %v2718 = vpop.f32.mrb[0].mxu0
        %v2719 = vadd.f32 %v2678, %v2718
        %v2720 = vpop.f32.mrb[0].mxu0
        %v2721 = vpop.f32.mrb[0].mxu0
        %v2722 = vadd.f32 %v2681, %v2721
        %v2723 = vpop.f32.mrb[0].mxu0
        %2724 = vdwg.mxu0
        %2725 = vmatprep.subr.bf16.mxu0 0
        %2726 = vmatpush1.bf16.msra.mxu0 %v2595
        %2727 = vmatprep.subr.bf16.mxu0 0
        %2728 = vmatpush1.bf16.msra.mxu0 %v2596
        %2729 = vmatprep.subr.bf16.mxu0 0
        %2730 = vmatpush1.bf16.msra.mxu0 %v2597
        %2731 = vmatprep.subr.bf16.mxu0 0
        %2732 = vmatpush1.bf16.msra.mxu0 %v2598
        %2733 = vmatprep.subr.bf16.mxu0 0
        %2734 = vmatpush1.bf16.msra.mxu0 %v2599
        %2735 = vmatprep.subr.bf16.mxu0 0
        %2736 = vmatpush1.bf16.msra.mxu0 %v2600
        %2737 = vmatprep.subr.bf16.mxu0 0
        %2738 = vmatpush1.bf16.msra.mxu0 %v2601
        %2739 = vmatprep.subr.bf16.mxu0 0
        %2740 = vmatpush1.bf16.msra.mxu0 %v2602
        %2741 = vmatprep.subr.bf16.mxu0 0
        %2742 = vmatpush1.bf16.msra.mxu0 0
        %2743 = vmatprep.subr.bf16.mxu0 0
        %2744 = vmatpush1.bf16.msra.mxu0 0
        %2745 = vmatprep.subr.bf16.mxu0 0
        %2746 = vmatpush1.bf16.msra.mxu0 0
        %2747 = vmatprep.subr.bf16.mxu0 0
        %2748 = vmatpush1.bf16.msra.mxu0 0
        %2749 = vmatprep.subr.bf16.mxu0 0
        %2750 = vmatpush1.bf16.msra.mxu0 0
        %2751 = vmatprep.subr.bf16.mxu0 0
        %2752 = vmatpush1.bf16.msra.mxu0 0
        %2753 = vmatprep.subr.bf16.mxu0 0
        %2754 = vmatpush1.bf16.msra.mxu0 0
        %2755 = vmatprep.subr.bf16.mxu0 0
        %2756 = vmatpush1.bf16.msra.mxu0 0
        %2757 = vmatprep.mubr.bf16.mxu0 0
        %2758 = vmatmul.mubr.bf16.gmra.mrb[0].mxu0 %v2299
        %v2759 = vpop.f32.mrb[0].mxu0
        %v2760 = vadd.f32 %v2719, %v2759
        %v2761 = vpop.f32.mrb[0].mxu0
        %v2762 = vpop.f32.mrb[0].mxu0
        %v2763 = vadd.f32 %v2722, %v2762
        %v2764 = vpop.f32.mrb[0].mxu0
        %2765 = vdwg.mxu0
        %v2766 = vmax.f32 %v2760, 0.0
        %v2767 = vmax.f32 %v2763, 0.0
        %v2768 = vpack.c.bf16 %v2767, %v2766
        %v2770 = vrot.slane %v2768, 4
        %v2772 = vsel %vm1829, 0, %v2770
        %s2774 = scalar_lea.vmem [#allocation5], 640
        %v2775 = vld [vmem:[%s2774] sm:$0xf]
        %v2776 = vld [vmem:[%s2774 + $0x4] sm:$0xf]
        %v2777 = vld [vmem:[%s2774 + $0x8] sm:$0xf]
        %v2778 = vld [vmem:[%s2774 + $0xc] sm:$0xf]
        %v2779 = vld [vmem:[%s2774 + $0x10] sm:$0xf]
        %v2780 = vld [vmem:[%s2774 + $0x14] sm:$0xf]
        %v2781 = vld [vmem:[%s2774 + $0x18] sm:$0xf]
        %v2782 = vld [vmem:[%s2774 + $0x1c] sm:$0xf]
        %v2783 = vld [vmem:[%s2774 + $0x20] sm:$0xf]
        %v2784 = vld [vmem:[%s2774 + $0x24] sm:$0xf]
        %v2785 = vld [vmem:[%s2774 + $0x28] sm:$0xf]
        %v2786 = vld [vmem:[%s2774 + $0x2c] sm:$0xf]
        %v2787 = vld [vmem:[%s2774 + $0x30] sm:$0xf]
        %v2788 = vld [vmem:[%s2774 + $0x34] sm:$0xf]
        %v2789 = vld [vmem:[%s2774 + $0x38] sm:$0xf]
        %v2790 = vld [vmem:[%s2774 + $0x3c] sm:$0xf]
        %v2791 = vld [vmem:[%s2774 + $0x40] sm:$0xf]
        %v2792 = vld [vmem:[%s2774 + $0x44] sm:$0xf]
        %v2793 = vld [vmem:[%s2774 + $0x48] sm:$0xf]
        %v2794 = vld [vmem:[%s2774 + $0x4c] sm:$0xf]
        %v2795 = vld [vmem:[%s2774 + $0x50] sm:$0xf]
        %v2796 = vld [vmem:[%s2774 + $0x54] sm:$0xf]
        %v2797 = vld [vmem:[%s2774 + $0x58] sm:$0xf]
        %v2798 = vld [vmem:[%s2774 + $0x5c] sm:$0xf]
        %v2799 = vld [vmem:[%s2774 + $0x60] sm:$0xf]
        %v2800 = vld [vmem:[%s2774 + $0x64] sm:$0xf]
        %v2801 = vld [vmem:[%s2774 + $0x68] sm:$0xf]
        %v2802 = vld [vmem:[%s2774 + $0x6c] sm:$0xf]
        %v2803 = vld [vmem:[%s2774 + $0x70] sm:$0xf]
        %v2804 = vld [vmem:[%s2774 + $0x74] sm:$0xf]
        %v2805 = vld [vmem:[%s2774 + $0x78] sm:$0xf]
        %v2806 = vld [vmem:[%s2774 + $0x7c] sm:$0xf]
        %v2807 = vld [vmem:[%s2774 + $0x80] sm:$0xf]
        %v2808 = vld [vmem:[%s2774 + $0x84] sm:$0xf]
        %v2809 = vld [vmem:[%s2774 + $0x88] sm:$0xf]
        %v2810 = vld [vmem:[%s2774 + $0x8c] sm:$0xf]
        %v2811 = vld [vmem:[%s2774 + $0x90] sm:$0xf]
        %v2812 = vld [vmem:[%s2774 + $0x94] sm:$0xf]
        %v2813 = vld [vmem:[%s2774 + $0x98] sm:$0xf]
        %v2814 = vld [vmem:[%s2774 + $0x9c] sm:$0xf]
        %v2815 = vld [vmem:[%s2774 + $0xa0] sm:$0xf]
        %v2816 = vld [vmem:[%s2774 + $0xa4] sm:$0xf]
        %v2817 = vld [vmem:[%s2774 + $0xa8] sm:$0xf]
        %v2818 = vld [vmem:[%s2774 + $0xac] sm:$0xf]
        %v2819 = vld [vmem:[%s2774 + $0xb0] sm:$0xf]
        %v2820 = vld [vmem:[%s2774 + $0xb4] sm:$0xf]
        %v2821 = vld [vmem:[%s2774 + $0xb8] sm:$0xf]
        %v2822 = vld [vmem:[%s2774 + $0xbc] sm:$0xf]
        %v2823 = vld [vmem:[%s2774 + $0xc0] sm:$0xf]
        %v2824 = vld [vmem:[%s2774 + $0xc4] sm:$0xf]
        %v2825 = vld [vmem:[%s2774 + $0xc8] sm:$0xf]
        %v2826 = vld [vmem:[%s2774 + $0xcc] sm:$0xf]
        %v2827 = vld [vmem:[%s2774 + $0xd0] sm:$0xf]
        %v2828 = vld [vmem:[%s2774 + $0xd4] sm:$0xf]
        %v2829 = vld [vmem:[%s2774 + $0xd8] sm:$0xf]
        %v2830 = vld [vmem:[%s2774 + $0xdc] sm:$0xf]
        %v2831 = vld [vmem:[%s2774 + $0xe0] sm:$0xf]
        %v2832 = vld [vmem:[%s2774 + $0xe4] sm:$0xf]
        %v2833 = vld [vmem:[%s2774 + $0xe8] sm:$0xf]
        %v2834 = vld [vmem:[%s2774 + $0xec] sm:$0xf]
        %v2835 = vld [vmem:[%s2774 + $0xf0] sm:$0xf]
        %v2836 = vld [vmem:[%s2774 + $0xf4] sm:$0xf]
        %v2837 = vld [vmem:[%s2774 + $0xf8] sm:$0xf]
        %v2838 = vld [vmem:[%s2774 + $0xfc] sm:$0xf]
        %v2839 = vld [vmem:[%s2774 + $0x100] sm:$0xf]
        %v2840 = vld [vmem:[%s2774 + $0x104] sm:$0xf]
        %v2841 = vld [vmem:[%s2774 + $0x108] sm:$0xf]
        %v2842 = vld [vmem:[%s2774 + $0x10c] sm:$0xf]
        %v2843 = vld [vmem:[%s2774 + $0x110] sm:$0xf]
        %v2844 = vld [vmem:[%s2774 + $0x114] sm:$0xf]
        %v2845 = vld [vmem:[%s2774 + $0x118] sm:$0xf]
        %v2846 = vld [vmem:[%s2774 + $0x11c] sm:$0xf]
        %v2847 = vld [vmem:[%s2774 + $0x120] sm:$0xf]
        %v2848 = vld [vmem:[%s2774 + $0x124] sm:$0xf]
        %v2849 = vld [vmem:[%s2774 + $0x128] sm:$0xf]
        %v2850 = vld [vmem:[%s2774 + $0x12c] sm:$0xf]
        %v2851 = vld [vmem:[%s2774 + $0x130] sm:$0xf]
        %v2852 = vld [vmem:[%s2774 + $0x134] sm:$0xf]
        %v2853 = vld [vmem:[%s2774 + $0x138] sm:$0xf]
        %v2854 = vld [vmem:[%s2774 + $0x13c] sm:$0xf]
        %s2855 = scalar_lea.vmem %s5, 3
        %v2856 = vld [vmem:[%s2855] sm:$0x1]
        %v2858 = vlaneseq
        %v2859 = vshrl.u32 %v2858, 7
        %v2860 = vsub.s32 0, %v2859
        %v2861 = vrot.slane %v2856, %v2860
        %v2943 = vunpack.c.l.b16 %v2775
        %v2944 = vunpack.c.l.b16 %v2776
        %v2945 = vunpack.c.l.b16 %v2777
        %v2946 = vunpack.c.l.b16 %v2778
        %v2947 = vunpack.c.l.b16 %v2779
        %v2948 = vunpack.c.l.b16 %v2780
        %v2949 = vunpack.c.l.b16 %v2781
        %v2950 = vunpack.c.l.b16 %v2782
        %v2951 = vunpack.c.l.b16 %v2783
        %v2952 = vunpack.c.l.b16 %v2784
        %v2953 = vunpack.c.l.b16 %v2785
        %v2954 = vunpack.c.l.b16 %v2786
        %v2955 = vunpack.c.l.b16 %v2787
        %v2956 = vunpack.c.l.b16 %v2788
        %v2957 = vunpack.c.l.b16 %v2789
        %v2958 = vunpack.c.l.b16 %v2790
        %v2959 = vunpack.c.l.b16 %v2791
        %v2960 = vunpack.c.l.b16 %v2792
        %v2961 = vunpack.c.l.b16 %v2793
        %v2962 = vunpack.c.l.b16 %v2794
        %v2963 = vunpack.c.l.b16 %v2795
        %v2964 = vunpack.c.l.b16 %v2796
        %v2965 = vunpack.c.l.b16 %v2797
        %v2966 = vunpack.c.l.b16 %v2798
        %v2967 = vunpack.c.l.b16 %v2799
        %v2968 = vunpack.c.l.b16 %v2800
        %v2969 = vunpack.c.l.b16 %v2801
        %v2970 = vunpack.c.l.b16 %v2802
        %v2971 = vunpack.c.l.b16 %v2803
        %v2972 = vunpack.c.l.b16 %v2804
        %v2973 = vunpack.c.l.b16 %v2805
        %v2974 = vunpack.c.l.b16 %v2806
        %v2975 = vunpack.c.l.b16 %v2807
        %v2976 = vunpack.c.l.b16 %v2808
        %v2977 = vunpack.c.l.b16 %v2809
        %v2978 = vunpack.c.l.b16 %v2810
        %v2979 = vunpack.c.l.b16 %v2811
        %v2980 = vunpack.c.l.b16 %v2812
        %v2981 = vunpack.c.l.b16 %v2813
        %v2982 = vunpack.c.l.b16 %v2814
        %v2983 = vunpack.c.l.b16 %v2815
        %v2984 = vunpack.c.l.b16 %v2816
        %v2985 = vunpack.c.l.b16 %v2817
        %v2986 = vunpack.c.l.b16 %v2818
        %v2987 = vunpack.c.l.b16 %v2819
        %v2988 = vunpack.c.l.b16 %v2820
        %v2989 = vunpack.c.l.b16 %v2821
        %v2990 = vunpack.c.l.b16 %v2822
        %v2991 = vunpack.c.l.b16 %v2823
        %v2992 = vunpack.c.l.b16 %v2824
        %v2993 = vunpack.c.l.b16 %v2825
        %v2994 = vunpack.c.l.b16 %v2826
        %v2995 = vunpack.c.l.b16 %v2827
        %v2996 = vunpack.c.l.b16 %v2828
        %v2997 = vunpack.c.l.b16 %v2829
        %v2998 = vunpack.c.l.b16 %v2830
        %v2999 = vunpack.c.l.b16 %v2831
        %v3000 = vunpack.c.l.b16 %v2832
        %v3001 = vunpack.c.l.b16 %v2833
        %v3002 = vunpack.c.l.b16 %v2834
        %v3003 = vunpack.c.l.b16 %v2835
        %v3004 = vunpack.c.l.b16 %v2836
        %v3005 = vunpack.c.l.b16 %v2837
        %v3006 = vunpack.c.l.b16 %v2838
        %v3007 = vunpack.c.l.b16 %v2839
        %v3008 = vunpack.c.l.b16 %v2840
        %v3009 = vunpack.c.l.b16 %v2841
        %v3010 = vunpack.c.l.b16 %v2842
        %v3011 = vunpack.c.l.b16 %v2843
        %v3012 = vunpack.c.l.b16 %v2844
        %v3013 = vunpack.c.l.b16 %v2845
        %v3014 = vunpack.c.l.b16 %v2846
        %v3015 = vunpack.c.l.b16 %v2847
        %v3016 = vunpack.c.l.b16 %v2848
        %v3017 = vunpack.c.l.b16 %v2849
        %v3018 = vunpack.c.l.b16 %v2850
        %v3019 = vunpack.c.l.b16 %v2851
        %v3020 = vunpack.c.l.b16 %v2852
        %v3021 = vunpack.c.l.b16 %v2853
        %v3022 = vunpack.c.l.b16 %v2854
        %v3023 = vpack.c.b16 %v2944, %v2943
        %v3024 = vpack.c.b16 %v2946, %v2945
        %v3025 = vpack.c.b16 %v2948, %v2947
        %v3026 = vpack.c.b16 %v2950, %v2949
        %v3027 = vpack.c.b16 %v2952, %v2951
        %v3028 = vpack.c.b16 %v2954, %v2953
        %v3029 = vpack.c.b16 %v2956, %v2955
        %v3030 = vpack.c.b16 %v2958, %v2957
        %v3031 = vpack.c.b16 %v2960, %v2959
        %v3032 = vpack.c.b16 %v2962, %v2961
        %v3033 = vpack.c.b16 %v2964, %v2963
        %v3034 = vpack.c.b16 %v2966, %v2965
        %v3035 = vpack.c.b16 %v2968, %v2967
        %v3036 = vpack.c.b16 %v2970, %v2969
        %v3037 = vpack.c.b16 %v2972, %v2971
        %v3038 = vpack.c.b16 %v2974, %v2973
        %v3039 = vpack.c.b16 %v2976, %v2975
        %v3040 = vpack.c.b16 %v2978, %v2977
        %v3041 = vpack.c.b16 %v2980, %v2979
        %v3042 = vpack.c.b16 %v2982, %v2981
        %v3043 = vpack.c.b16 %v2984, %v2983
        %v3044 = vpack.c.b16 %v2986, %v2985
        %v3045 = vpack.c.b16 %v2988, %v2987
        %v3046 = vpack.c.b16 %v2990, %v2989
        %v3047 = vpack.c.b16 %v2992, %v2991
        %v3048 = vpack.c.b16 %v2994, %v2993
        %v3049 = vpack.c.b16 %v2996, %v2995
        %v3050 = vpack.c.b16 %v2998, %v2997
        %v3051 = vpack.c.b16 %v3000, %v2999
        %v3052 = vpack.c.b16 %v3002, %v3001
        %v3053 = vpack.c.b16 %v3004, %v3003
        %v3054 = vpack.c.b16 %v3006, %v3005
        %v3055 = vpack.c.b16 %v3008, %v3007
        %v3056 = vpack.c.b16 %v3010, %v3009
        %v3057 = vpack.c.b16 %v3012, %v3011
        %v3058 = vpack.c.b16 %v3014, %v3013
        %v3059 = vpack.c.b16 %v3016, %v3015
        %v3060 = vpack.c.b16 %v3018, %v3017
        %v3061 = vpack.c.b16 %v3020, %v3019
        %v3062 = vpack.c.b16 %v3022, %v3021
        %3103 = vmatprep.subr.bf16.mxu0 0
        %3104 = vmatpush1.bf16.msra.mxu0 %v3023
        %3105 = vmatprep.subr.bf16.mxu0 0
        %3106 = vmatpush1.bf16.msra.mxu0 %v3024
        %3107 = vmatprep.subr.bf16.mxu0 0
        %3108 = vmatpush1.bf16.msra.mxu0 %v3025
        %3109 = vmatprep.subr.bf16.mxu0 0
        %3110 = vmatpush1.bf16.msra.mxu0 %v3026
        %3111 = vmatprep.subr.bf16.mxu0 0
        %3112 = vmatpush1.bf16.msra.mxu0 %v3027
        %3113 = vmatprep.subr.bf16.mxu0 0
        %3114 = vmatpush1.bf16.msra.mxu0 %v3028
        %3115 = vmatprep.subr.bf16.mxu0 0
        %3116 = vmatpush1.bf16.msra.mxu0 %v3029
        %3117 = vmatprep.subr.bf16.mxu0 0
        %3118 = vmatpush1.bf16.msra.mxu0 %v3030
        %3119 = vmatprep.subr.bf16.mxu0 0
        %3120 = vmatpush1.bf16.msra.mxu0 %v3031
        %3121 = vmatprep.subr.bf16.mxu0 0
        %3122 = vmatpush1.bf16.msra.mxu0 %v3032
        %3123 = vmatprep.subr.bf16.mxu0 0
        %3124 = vmatpush1.bf16.msra.mxu0 %v3033
        %3125 = vmatprep.subr.bf16.mxu0 0
        %3126 = vmatpush1.bf16.msra.mxu0 %v3034
        %3127 = vmatprep.subr.bf16.mxu0 0
        %3128 = vmatpush1.bf16.msra.mxu0 %v3035
        %3129 = vmatprep.subr.bf16.mxu0 0
        %3130 = vmatpush1.bf16.msra.mxu0 %v3036
        %3131 = vmatprep.subr.bf16.mxu0 0
        %3132 = vmatpush1.bf16.msra.mxu0 %v3037
        %3133 = vmatprep.subr.bf16.mxu0 0
        %3134 = vmatpush1.bf16.msra.mxu0 %v3038
        %3135 = vmatprep.mubr.bf16.mxu0 0
        %3136 = vmatmul.mubr.bf16.gmra.mrb[0].mxu0 0
        %v3137 = vpop.f32.mrb[0].mxu0
        %v3138 = vadd.f32 %v2861, %v3137
        %v3139 = vpop.f32.mrb[0].mxu0
        %v3140 = vpop.f32.mrb[0].mxu0
        %v3141 = vadd.f32 %v2861, %v3140
        %v3142 = vpop.f32.mrb[0].mxu0
        %3143 = vdwg.mxu0
        %3144 = vmatprep.subr.bf16.mxu0 0
        %3145 = vmatpush1.bf16.msra.mxu0 %v3039
        %3146 = vmatprep.subr.bf16.mxu0 0
        %3147 = vmatpush1.bf16.msra.mxu0 %v3040
        %3148 = vmatprep.subr.bf16.mxu0 0
        %3149 = vmatpush1.bf16.msra.mxu0 %v3041
        %3150 = vmatprep.subr.bf16.mxu0 0
        %3151 = vmatpush1.bf16.msra.mxu0 %v3042
        %3152 = vmatprep.subr.bf16.mxu0 0
        %3153 = vmatpush1.bf16.msra.mxu0 %v3043
        %3154 = vmatprep.subr.bf16.mxu0 0
        %3155 = vmatpush1.bf16.msra.mxu0 %v3044
        %3156 = vmatprep.subr.bf16.mxu0 0
        %3157 = vmatpush1.bf16.msra.mxu0 %v3045
        %3158 = vmatprep.subr.bf16.mxu0 0
        %3159 = vmatpush1.bf16.msra.mxu0 %v3046
        %3160 = vmatprep.subr.bf16.mxu0 0
        %3161 = vmatpush1.bf16.msra.mxu0 %v3047
        %3162 = vmatprep.subr.bf16.mxu0 0
        %3163 = vmatpush1.bf16.msra.mxu0 %v3048
        %3164 = vmatprep.subr.bf16.mxu0 0
        %3165 = vmatpush1.bf16.msra.mxu0 %v3049
        %3166 = vmatprep.subr.bf16.mxu0 0
        %3167 = vmatpush1.bf16.msra.mxu0 %v3050
        %3168 = vmatprep.subr.bf16.mxu0 0
        %3169 = vmatpush1.bf16.msra.mxu0 %v3051
        %3170 = vmatprep.subr.bf16.mxu0 0
        %3171 = vmatpush1.bf16.msra.mxu0 %v3052
        %3172 = vmatprep.subr.bf16.mxu0 0
        %3173 = vmatpush1.bf16.msra.mxu0 %v3053
        %3174 = vmatprep.subr.bf16.mxu0 0
        %3175 = vmatpush1.bf16.msra.mxu0 %v3054
        %3176 = vmatprep.mubr.bf16.mxu0 %v2772
        %3177 = vmatmul.mubr.bf16.gmra.mrb[0].mxu0 0
        %v3178 = vpop.f32.mrb[0].mxu0
        %v3179 = vadd.f32 %v3138, %v3178
        %v3180 = vpop.f32.mrb[0].mxu0
        %v3181 = vpop.f32.mrb[0].mxu0
        %v3182 = vadd.f32 %v3141, %v3181
        %v3183 = vpop.f32.mrb[0].mxu0
        %3184 = vdwg.mxu0
        %3185 = vmatprep.subr.bf16.mxu0 0
        %3186 = vmatpush1.bf16.msra.mxu0 %v3055
        %3187 = vmatprep.subr.bf16.mxu0 0
        %3188 = vmatpush1.bf16.msra.mxu0 %v3056
        %3189 = vmatprep.subr.bf16.mxu0 0
        %3190 = vmatpush1.bf16.msra.mxu0 %v3057
        %3191 = vmatprep.subr.bf16.mxu0 0
        %3192 = vmatpush1.bf16.msra.mxu0 %v3058
        %3193 = vmatprep.subr.bf16.mxu0 0
        %3194 = vmatpush1.bf16.msra.mxu0 %v3059
        %3195 = vmatprep.subr.bf16.mxu0 0
        %3196 = vmatpush1.bf16.msra.mxu0 %v3060
        %3197 = vmatprep.subr.bf16.mxu0 0
        %3198 = vmatpush1.bf16.msra.mxu0 %v3061
        %3199 = vmatprep.subr.bf16.mxu0 0
        %3200 = vmatpush1.bf16.msra.mxu0 %v3062
        %3201 = vmatprep.subr.bf16.mxu0 0
        %3202 = vmatpush1.bf16.msra.mxu0 0
        %3203 = vmatprep.subr.bf16.mxu0 0
        %3204 = vmatpush1.bf16.msra.mxu0 0
        %3205 = vmatprep.subr.bf16.mxu0 0
        %3206 = vmatpush1.bf16.msra.mxu0 0
        %3207 = vmatprep.subr.bf16.mxu0 0
        %3208 = vmatpush1.bf16.msra.mxu0 0
        %3209 = vmatprep.subr.bf16.mxu0 0
        %3210 = vmatpush1.bf16.msra.mxu0 0
        %3211 = vmatprep.subr.bf16.mxu0 0
        %3212 = vmatpush1.bf16.msra.mxu0 0
        %3213 = vmatprep.subr.bf16.mxu0 0
        %3214 = vmatpush1.bf16.msra.mxu0 0
        %3215 = vmatprep.subr.bf16.mxu0 0
        %3216 = vmatpush1.bf16.msra.mxu0 0
        %3217 = vmatprep.mubr.bf16.mxu0 0
        %3218 = vmatmul.mubr.bf16.gmra.mrb[0].mxu0 %v2768
        %v3219 = vpop.f32.mrb[0].mxu0
        %v3220 = vadd.f32 %v3179, %v3219
        %v3221 = vpop.f32.mrb[0].mxu0
        %v3222 = vpop.f32.mrb[0].mxu0
        %v3223 = vadd.f32 %v3182, %v3222
        %v3224 = vpop.f32.mrb[0].mxu0
        %3225 = vdwg.mxu0
        %v3226 = vmax.f32 %v3220, 0.0
        %v3227 = vmax.f32 %v3223, 0.0
        %v3228 = vpack.c.bf16 %v3227, %v3226
        %s3229 = scalar_lea.vmem [#allocation5], 960
        %v3230 = vld [vmem:[%s3229] sm:$0xf]
        %v3231 = vld [vmem:[%s3229 + $0x4] sm:$0xf]
        %v3232 = vld [vmem:[%s3229 + $0x8] sm:$0xf]
        %v3233 = vld [vmem:[%s3229 + $0xc] sm:$0xf]
        %v3234 = vld [vmem:[%s3229 + $0x10] sm:$0xf]
        %v3235 = vld [vmem:[%s3229 + $0x14] sm:$0xf]
        %v3236 = vld [vmem:[%s3229 + $0x18] sm:$0xf]
        %v3237 = vld [vmem:[%s3229 + $0x1c] sm:$0xf]
        %v3238 = vld [vmem:[%s3229 + $0x20] sm:$0xf]
        %v3239 = vld [vmem:[%s3229 + $0x24] sm:$0xf]
        %v3240 = vld [vmem:[%s3229 + $0x28] sm:$0xf]
        %v3241 = vld [vmem:[%s3229 + $0x2c] sm:$0xf]
        %v3242 = vld [vmem:[%s3229 + $0x30] sm:$0xf]
        %v3243 = vld [vmem:[%s3229 + $0x34] sm:$0xf]
        %v3244 = vld [vmem:[%s3229 + $0x38] sm:$0xf]
        %v3245 = vld [vmem:[%s3229 + $0x3c] sm:$0xf]
        %v3246 = vld [vmem:[%s3229 + $0x40] sm:$0xf]
        %v3247 = vld [vmem:[%s3229 + $0x44] sm:$0xf]
        %v3248 = vld [vmem:[%s3229 + $0x48] sm:$0xf]
        %v3249 = vld [vmem:[%s3229 + $0x4c] sm:$0xf]
        %v3250 = vld [vmem:[%s3229 + $0x50] sm:$0xf]
        %v3251 = vld [vmem:[%s3229 + $0x54] sm:$0xf]
        %v3252 = vld [vmem:[%s3229 + $0x58] sm:$0xf]
        %v3253 = vld [vmem:[%s3229 + $0x5c] sm:$0xf]
        %v3254 = vld [vmem:[%s3229 + $0x60] sm:$0xf]
        %v3255 = vld [vmem:[%s3229 + $0x64] sm:$0xf]
        %v3256 = vld [vmem:[%s3229 + $0x68] sm:$0xf]
        %v3257 = vld [vmem:[%s3229 + $0x6c] sm:$0xf]
        %v3258 = vld [vmem:[%s3229 + $0x70] sm:$0xf]
        %v3259 = vld [vmem:[%s3229 + $0x74] sm:$0xf]
        %v3260 = vld [vmem:[%s3229 + $0x78] sm:$0xf]
        %v3261 = vld [vmem:[%s3229 + $0x7c] sm:$0xf]
        %v3262 = vld [vmem:[%s3229 + $0x80] sm:$0xf]
        %v3263 = vld [vmem:[%s3229 + $0x84] sm:$0xf]
        %v3264 = vld [vmem:[%s3229 + $0x88] sm:$0xf]
        %v3265 = vld [vmem:[%s3229 + $0x8c] sm:$0xf]
        %v3266 = vld [vmem:[%s3229 + $0x90] sm:$0xf]
        %v3267 = vld [vmem:[%s3229 + $0x94] sm:$0xf]
        %v3268 = vld [vmem:[%s3229 + $0x98] sm:$0xf]
        %v3269 = vld [vmem:[%s3229 + $0x9c] sm:$0xf]
        %v3270 = vld [vmem:[%s3229 + $0xa0] sm:$0xf]
        %v3271 = vld [vmem:[%s3229 + $0xa4] sm:$0xf]
        %v3272 = vld [vmem:[%s3229 + $0xa8] sm:$0xf]
        %v3273 = vld [vmem:[%s3229 + $0xac] sm:$0xf]
        %v3274 = vld [vmem:[%s3229 + $0xb0] sm:$0xf]
        %v3275 = vld [vmem:[%s3229 + $0xb4] sm:$0xf]
        %v3276 = vld [vmem:[%s3229 + $0xb8] sm:$0xf]
        %v3277 = vld [vmem:[%s3229 + $0xbc] sm:$0xf]
        %v3278 = vld [vmem:[%s3229 + $0xc0] sm:$0xf]
        %v3279 = vld [vmem:[%s3229 + $0xc4] sm:$0xf]
        %v3280 = vld [vmem:[%s3229 + $0xc8] sm:$0xf]
        %v3281 = vld [vmem:[%s3229 + $0xcc] sm:$0xf]
        %v3282 = vld [vmem:[%s3229 + $0xd0] sm:$0xf]
        %v3283 = vld [vmem:[%s3229 + $0xd4] sm:$0xf]
        %v3284 = vld [vmem:[%s3229 + $0xd8] sm:$0xf]
        %v3285 = vld [vmem:[%s3229 + $0xdc] sm:$0xf]
        %v3286 = vld [vmem:[%s3229 + $0xe0] sm:$0xf]
        %v3287 = vld [vmem:[%s3229 + $0xe4] sm:$0xf]
        %v3288 = vld [vmem:[%s3229 + $0xe8] sm:$0xf]
        %v3289 = vld [vmem:[%s3229 + $0xec] sm:$0xf]
        %v3290 = vld [vmem:[%s3229 + $0xf0] sm:$0xf]
        %v3291 = vld [vmem:[%s3229 + $0xf4] sm:$0xf]
        %v3292 = vld [vmem:[%s3229 + $0xf8] sm:$0xf]
        %v3293 = vld [vmem:[%s3229 + $0xfc] sm:$0xf]
        %v3294 = vld [vmem:[%s3229 + $0x100] sm:$0xf]
        %v3295 = vld [vmem:[%s3229 + $0x104] sm:$0xf]
        %v3296 = vld [vmem:[%s3229 + $0x108] sm:$0xf]
        %v3297 = vld [vmem:[%s3229 + $0x10c] sm:$0xf]
        %v3298 = vld [vmem:[%s3229 + $0x110] sm:$0xf]
        %v3299 = vld [vmem:[%s3229 + $0x114] sm:$0xf]
        %v3300 = vld [vmem:[%s3229 + $0x118] sm:$0xf]
        %v3301 = vld [vmem:[%s3229 + $0x11c] sm:$0xf]
        %v3302 = vld [vmem:[%s3229 + $0x120] sm:$0xf]
        %v3303 = vld [vmem:[%s3229 + $0x124] sm:$0xf]
        %v3304 = vld [vmem:[%s3229 + $0x128] sm:$0xf]
        %v3305 = vld [vmem:[%s3229 + $0x12c] sm:$0xf]
        %v3306 = vld [vmem:[%s3229 + $0x130] sm:$0xf]
        %v3307 = vld [vmem:[%s3229 + $0x134] sm:$0xf]
        %v3308 = vld [vmem:[%s3229 + $0x138] sm:$0xf]
        %v3309 = vld [vmem:[%s3229 + $0x13c] sm:$0xf]
        %s3310 = scalar_lea.vmem %s5, 4
        %v3311 = vld [vmem:[%s3310] sm:$0x1]
        %v3313 = vlaneseq
        %v3314 = vshrl.u32 %v3313, 7
        %v3315 = vsub.s32 0, %v3314
        %v3316 = vrot.slane %v3311, %v3315
        %v3398 = vunpack.c.l.b16 %v3230
        %v3399 = vunpack.c.l.b16 %v3231
        %v3400 = vunpack.c.l.b16 %v3232
        %v3401 = vunpack.c.l.b16 %v3233
        %v3402 = vunpack.c.l.b16 %v3234
        %v3403 = vunpack.c.l.b16 %v3235
        %v3404 = vunpack.c.l.b16 %v3236
        %v3405 = vunpack.c.l.b16 %v3237
        %v3406 = vunpack.c.l.b16 %v3238
        %v3407 = vunpack.c.l.b16 %v3239
        %v3408 = vunpack.c.l.b16 %v3240
        %v3409 = vunpack.c.l.b16 %v3241
        %v3410 = vunpack.c.l.b16 %v3242
        %v3411 = vunpack.c.l.b16 %v3243
        %v3412 = vunpack.c.l.b16 %v3244
        %v3413 = vunpack.c.l.b16 %v3245
        %v3414 = vunpack.c.l.b16 %v3246
        %v3415 = vunpack.c.l.b16 %v3247
        %v3416 = vunpack.c.l.b16 %v3248
        %v3417 = vunpack.c.l.b16 %v3249
        %v3418 = vunpack.c.l.b16 %v3250
        %v3419 = vunpack.c.l.b16 %v3251
        %v3420 = vunpack.c.l.b16 %v3252
        %v3421 = vunpack.c.l.b16 %v3253
        %v3422 = vunpack.c.l.b16 %v3254
        %v3423 = vunpack.c.l.b16 %v3255
        %v3424 = vunpack.c.l.b16 %v3256
        %v3425 = vunpack.c.l.b16 %v3257
        %v3426 = vunpack.c.l.b16 %v3258
        %v3427 = vunpack.c.l.b16 %v3259
        %v3428 = vunpack.c.l.b16 %v3260
        %v3429 = vunpack.c.l.b16 %v3261
        %v3430 = vunpack.c.l.b16 %v3262
        %v3431 = vunpack.c.l.b16 %v3263
        %v3432 = vunpack.c.l.b16 %v3264
        %v3433 = vunpack.c.l.b16 %v3265
        %v3434 = vunpack.c.l.b16 %v3266
        %v3435 = vunpack.c.l.b16 %v3267
        %v3436 = vunpack.c.l.b16 %v3268
        %v3437 = vunpack.c.l.b16 %v3269
        %v3438 = vunpack.c.l.b16 %v3270
        %v3439 = vunpack.c.l.b16 %v3271
        %v3440 = vunpack.c.l.b16 %v3272
        %v3441 = vunpack.c.l.b16 %v3273
        %v3442 = vunpack.c.l.b16 %v3274
        %v3443 = vunpack.c.l.b16 %v3275
        %v3444 = vunpack.c.l.b16 %v3276
        %v3445 = vunpack.c.l.b16 %v3277
        %v3446 = vunpack.c.l.b16 %v3278
        %v3447 = vunpack.c.l.b16 %v3279
        %v3448 = vunpack.c.l.b16 %v3280
        %v3449 = vunpack.c.l.b16 %v3281
        %v3450 = vunpack.c.l.b16 %v3282
        %v3451 = vunpack.c.l.b16 %v3283
        %v3452 = vunpack.c.l.b16 %v3284
        %v3453 = vunpack.c.l.b16 %v3285
        %v3454 = vunpack.c.l.b16 %v3286
        %v3455 = vunpack.c.l.b16 %v3287
        %v3456 = vunpack.c.l.b16 %v3288
        %v3457 = vunpack.c.l.b16 %v3289
        %v3458 = vunpack.c.l.b16 %v3290
        %v3459 = vunpack.c.l.b16 %v3291
        %v3460 = vunpack.c.l.b16 %v3292
        %v3461 = vunpack.c.l.b16 %v3293
        %v3462 = vunpack.c.l.b16 %v3294
        %v3463 = vunpack.c.l.b16 %v3295
        %v3464 = vunpack.c.l.b16 %v3296
        %v3465 = vunpack.c.l.b16 %v3297
        %v3466 = vunpack.c.l.b16 %v3298
        %v3467 = vunpack.c.l.b16 %v3299
        %v3468 = vunpack.c.l.b16 %v3300
        %v3469 = vunpack.c.l.b16 %v3301
        %v3470 = vunpack.c.l.b16 %v3302
        %v3471 = vunpack.c.l.b16 %v3303
        %v3472 = vunpack.c.l.b16 %v3304
        %v3473 = vunpack.c.l.b16 %v3305
        %v3474 = vunpack.c.l.b16 %v3306
        %v3475 = vunpack.c.l.b16 %v3307
        %v3476 = vunpack.c.l.b16 %v3308
        %v3477 = vunpack.c.l.b16 %v3309
        %v3478 = vpack.c.b16 %v3399, %v3398
        %v3479 = vpack.c.b16 %v3401, %v3400
        %v3480 = vpack.c.b16 %v3403, %v3402
        %v3481 = vpack.c.b16 %v3405, %v3404
        %v3482 = vpack.c.b16 %v3407, %v3406
        %v3483 = vpack.c.b16 %v3409, %v3408
        %v3484 = vpack.c.b16 %v3411, %v3410
        %v3485 = vpack.c.b16 %v3413, %v3412
        %v3486 = vpack.c.b16 %v3415, %v3414
        %v3487 = vpack.c.b16 %v3417, %v3416
        %v3488 = vpack.c.b16 %v3419, %v3418
        %v3489 = vpack.c.b16 %v3421, %v3420
        %v3490 = vpack.c.b16 %v3423, %v3422
        %v3491 = vpack.c.b16 %v3425, %v3424
        %v3492 = vpack.c.b16 %v3427, %v3426
        %v3493 = vpack.c.b16 %v3429, %v3428
        %v3494 = vpack.c.b16 %v3431, %v3430
        %v3495 = vpack.c.b16 %v3433, %v3432
        %v3496 = vpack.c.b16 %v3435, %v3434
        %v3497 = vpack.c.b16 %v3437, %v3436
        %v3498 = vpack.c.b16 %v3439, %v3438
        %v3499 = vpack.c.b16 %v3441, %v3440
        %v3500 = vpack.c.b16 %v3443, %v3442
        %v3501 = vpack.c.b16 %v3445, %v3444
        %v3502 = vpack.c.b16 %v3447, %v3446
        %v3503 = vpack.c.b16 %v3449, %v3448
        %v3504 = vpack.c.b16 %v3451, %v3450
        %v3505 = vpack.c.b16 %v3453, %v3452
        %v3506 = vpack.c.b16 %v3455, %v3454
        %v3507 = vpack.c.b16 %v3457, %v3456
        %v3508 = vpack.c.b16 %v3459, %v3458
        %v3509 = vpack.c.b16 %v3461, %v3460
        %v3510 = vpack.c.b16 %v3463, %v3462
        %v3511 = vpack.c.b16 %v3465, %v3464
        %v3512 = vpack.c.b16 %v3467, %v3466
        %v3513 = vpack.c.b16 %v3469, %v3468
        %v3514 = vpack.c.b16 %v3471, %v3470
        %v3515 = vpack.c.b16 %v3473, %v3472
        %v3516 = vpack.c.b16 %v3475, %v3474
        %v3517 = vpack.c.b16 %v3477, %v3476
        %3558 = vmatprep.subr.bf16.mxu0 0
        %3559 = vmatpush1.bf16.msra.mxu0 %v3478
        %3560 = vmatprep.subr.bf16.mxu0 0
        %3561 = vmatpush1.bf16.msra.mxu0 %v3479
        %3562 = vmatprep.subr.bf16.mxu0 0
        %3563 = vmatpush1.bf16.msra.mxu0 %v3480
        %3564 = vmatprep.subr.bf16.mxu0 0
        %3565 = vmatpush1.bf16.msra.mxu0 %v3481
        %3566 = vmatprep.subr.bf16.mxu0 0
        %3567 = vmatpush1.bf16.msra.mxu0 %v3482
        %3568 = vmatprep.subr.bf16.mxu0 0
        %3569 = vmatpush1.bf16.msra.mxu0 %v3483
        %3570 = vmatprep.subr.bf16.mxu0 0
        %3571 = vmatpush1.bf16.msra.mxu0 %v3484
        %3572 = vmatprep.subr.bf16.mxu0 0
        %3573 = vmatpush1.bf16.msra.mxu0 %v3485
        %3574 = vmatprep.subr.bf16.mxu0 0
        %3575 = vmatpush1.bf16.msra.mxu0 %v3486
        %3576 = vmatprep.subr.bf16.mxu0 0
        %3577 = vmatpush1.bf16.msra.mxu0 %v3487
        %3578 = vmatprep.subr.bf16.mxu0 0
        %3579 = vmatpush1.bf16.msra.mxu0 %v3488
        %3580 = vmatprep.subr.bf16.mxu0 0
        %3581 = vmatpush1.bf16.msra.mxu0 %v3489
        %3582 = vmatprep.subr.bf16.mxu0 0
        %3583 = vmatpush1.bf16.msra.mxu0 %v3490
        %3584 = vmatprep.subr.bf16.mxu0 0
        %3585 = vmatpush1.bf16.msra.mxu0 %v3491
        %3586 = vmatprep.subr.bf16.mxu0 0
        %3587 = vmatpush1.bf16.msra.mxu0 %v3492
        %3588 = vmatprep.subr.bf16.mxu0 0
        %3589 = vmatpush1.bf16.msra.mxu0 %v3493
        %3590 = vmatprep.mubr.bf16.mxu0 0
        %3591 = vmatmul.mubr.bf16.gmra.mrb[0].mxu0 0
        %v3592 = vpop.f32.mrb[0].mxu0
        %v3593 = vadd.f32 %v3316, %v3592
        %v3594 = vpop.f32.mrb[0].mxu0
        %v3595 = vpop.f32.mrb[0].mxu0
        %v3596 = vadd.f32 %v3316, %v3595
        %v3597 = vpop.f32.mrb[0].mxu0
        %3598 = vdwg.mxu0
        %3599 = vmatprep.subr.bf16.mxu0 0
        %3600 = vmatpush1.bf16.msra.mxu0 %v3494
        %3601 = vmatprep.subr.bf16.mxu0 0
        %3602 = vmatpush1.bf16.msra.mxu0 %v3495
        %3603 = vmatprep.subr.bf16.mxu0 0
        %3604 = vmatpush1.bf16.msra.mxu0 %v3496
        %3605 = vmatprep.subr.bf16.mxu0 0
        %3606 = vmatpush1.bf16.msra.mxu0 %v3497
        %3607 = vmatprep.subr.bf16.mxu0 0
        %3608 = vmatpush1.bf16.msra.mxu0 %v3498
        %3609 = vmatprep.subr.bf16.mxu0 0
        %3610 = vmatpush1.bf16.msra.mxu0 %v3499
        %3611 = vmatprep.subr.bf16.mxu0 0
        %3612 = vmatpush1.bf16.msra.mxu0 %v3500
        %3613 = vmatprep.subr.bf16.mxu0 0
        %3614 = vmatpush1.bf16.msra.mxu0 %v3501
        %3615 = vmatprep.subr.bf16.mxu0 0
        %3616 = vmatpush1.bf16.msra.mxu0 %v3502
        %3617 = vmatprep.subr.bf16.mxu0 0
        %3618 = vmatpush1.bf16.msra.mxu0 %v3503
        %3619 = vmatprep.subr.bf16.mxu0 0
        %3620 = vmatpush1.bf16.msra.mxu0 %v3504
        %3621 = vmatprep.subr.bf16.mxu0 0
        %3622 = vmatpush1.bf16.msra.mxu0 %v3505
        %3623 = vmatprep.subr.bf16.mxu0 0
        %3624 = vmatpush1.bf16.msra.mxu0 %v3506
        %3625 = vmatprep.subr.bf16.mxu0 0
        %3626 = vmatpush1.bf16.msra.mxu0 %v3507
        %3627 = vmatprep.subr.bf16.mxu0 0
        %3628 = vmatpush1.bf16.msra.mxu0 %v3508
        %3629 = vmatprep.subr.bf16.mxu0 0
        %3630 = vmatpush1.bf16.msra.mxu0 %v3509
        %3631 = vmatprep.mubr.bf16.mxu0 0
        %3632 = vmatmul.mubr.bf16.gmra.mrb[0].mxu0 0
        %v3633 = vpop.f32.mrb[0].mxu0
        %v3634 = vadd.f32 %v3593, %v3633
        %v3635 = vpop.f32.mrb[0].mxu0
        %v3636 = vpop.f32.mrb[0].mxu0
        %v3637 = vadd.f32 %v3596, %v3636
        %v3638 = vpop.f32.mrb[0].mxu0
        %3639 = vdwg.mxu0
        %3640 = vmatprep.subr.bf16.mxu0 0
        %3641 = vmatpush1.bf16.msra.mxu0 %v3510
        %3642 = vmatprep.subr.bf16.mxu0 0
        %3643 = vmatpush1.bf16.msra.mxu0 %v3511
        %3644 = vmatprep.subr.bf16.mxu0 0
        %3645 = vmatpush1.bf16.msra.mxu0 %v3512
        %3646 = vmatprep.subr.bf16.mxu0 0
        %3647 = vmatpush1.bf16.msra.mxu0 %v3513
        %3648 = vmatprep.subr.bf16.mxu0 0
        %3649 = vmatpush1.bf16.msra.mxu0 %v3514
        %3650 = vmatprep.subr.bf16.mxu0 0
        %3651 = vmatpush1.bf16.msra.mxu0 %v3515
        %3652 = vmatprep.subr.bf16.mxu0 0
        %3653 = vmatpush1.bf16.msra.mxu0 %v3516
        %3654 = vmatprep.subr.bf16.mxu0 0
        %3655 = vmatpush1.bf16.msra.mxu0 %v3517
        %3656 = vmatprep.subr.bf16.mxu0 0
        %3657 = vmatpush1.bf16.msra.mxu0 0
        %3658 = vmatprep.subr.bf16.mxu0 0
        %3659 = vmatpush1.bf16.msra.mxu0 0
        %3660 = vmatprep.subr.bf16.mxu0 0
        %3661 = vmatpush1.bf16.msra.mxu0 0
        %3662 = vmatprep.subr.bf16.mxu0 0
        %3663 = vmatpush1.bf16.msra.mxu0 0
        %3664 = vmatprep.subr.bf16.mxu0 0
        %3665 = vmatpush1.bf16.msra.mxu0 0
        %3666 = vmatprep.subr.bf16.mxu0 0
        %3667 = vmatpush1.bf16.msra.mxu0 0
        %3668 = vmatprep.subr.bf16.mxu0 0
        %3669 = vmatpush1.bf16.msra.mxu0 0
        %3670 = vmatprep.subr.bf16.mxu0 0
        %3671 = vmatpush1.bf16.msra.mxu0 0
        %3672 = vmatprep.mubr.bf16.mxu0 0
        %3673 = vmatmul.mubr.bf16.gmra.mrb[0].mxu0 %v3228
        %v3674 = vpop.f32.mrb[0].mxu0
        %v3675 = vadd.f32 %v3634, %v3674
        %v3676 = vpop.f32.mrb[0].mxu0
        %v3677 = vpop.f32.mrb[0].mxu0
        %v3678 = vadd.f32 %v3637, %v3677
        %v3679 = vpop.f32.mrb[0].mxu0
        %3680 = vdwg.mxu0
        %v3681 = vmax.f32 %v3675, 0.0
        %v3682 = vmax.f32 %v3678, 0.0
        %v3683 = vpack.c.bf16 %v3682, %v3681
        %s3684 = scalar_lea.vmem [#allocation5], 1280
        %v3685 = vld [vmem:[%s3684] sm:$0xf]
        %v3686 = vld [vmem:[%s3684 + $0x4] sm:$0xf]
        %v3687 = vld [vmem:[%s3684 + $0x8] sm:$0xf]
        %v3688 = vld [vmem:[%s3684 + $0xc] sm:$0xf]
        %v3689 = vld [vmem:[%s3684 + $0x10] sm:$0xf]
        %v3690 = vld [vmem:[%s3684 + $0x14] sm:$0xf]
        %v3691 = vld [vmem:[%s3684 + $0x18] sm:$0xf]
        %v3692 = vld [vmem:[%s3684 + $0x1c] sm:$0xf]
        %v3693 = vld [vmem:[%s3684 + $0x20] sm:$0xf]
        %v3694 = vld [vmem:[%s3684 + $0x24] sm:$0xf]
        %v3695 = vld [vmem:[%s3684 + $0x28] sm:$0xf]
        %v3696 = vld [vmem:[%s3684 + $0x2c] sm:$0xf]
        %v3697 = vld [vmem:[%s3684 + $0x30] sm:$0xf]
        %v3698 = vld [vmem:[%s3684 + $0x34] sm:$0xf]
        %v3699 = vld [vmem:[%s3684 + $0x38] sm:$0xf]
        %v3700 = vld [vmem:[%s3684 + $0x3c] sm:$0xf]
        %v3701 = vld [vmem:[%s3684 + $0x40] sm:$0xf]
        %v3702 = vld [vmem:[%s3684 + $0x44] sm:$0xf]
        %v3703 = vld [vmem:[%s3684 + $0x48] sm:$0xf]
        %v3704 = vld [vmem:[%s3684 + $0x4c] sm:$0xf]
        %v3705 = vld [vmem:[%s3684 + $0x50] sm:$0xf]
        %v3706 = vld [vmem:[%s3684 + $0x54] sm:$0xf]
        %v3707 = vld [vmem:[%s3684 + $0x58] sm:$0xf]
        %v3708 = vld [vmem:[%s3684 + $0x5c] sm:$0xf]
        %v3709 = vld [vmem:[%s3684 + $0x60] sm:$0xf]
        %v3710 = vld [vmem:[%s3684 + $0x64] sm:$0xf]
        %v3711 = vld [vmem:[%s3684 + $0x68] sm:$0xf]
        %v3712 = vld [vmem:[%s3684 + $0x6c] sm:$0xf]
        %v3713 = vld [vmem:[%s3684 + $0x70] sm:$0xf]
        %v3714 = vld [vmem:[%s3684 + $0x74] sm:$0xf]
        %v3715 = vld [vmem:[%s3684 + $0x78] sm:$0xf]
        %v3716 = vld [vmem:[%s3684 + $0x7c] sm:$0xf]
        %v3717 = vld [vmem:[%s3684 + $0x80] sm:$0xf]
        %v3718 = vld [vmem:[%s3684 + $0x84] sm:$0xf]
        %v3719 = vld [vmem:[%s3684 + $0x88] sm:$0xf]
        %v3720 = vld [vmem:[%s3684 + $0x8c] sm:$0xf]
        %v3721 = vld [vmem:[%s3684 + $0x90] sm:$0xf]
        %v3722 = vld [vmem:[%s3684 + $0x94] sm:$0xf]
        %v3723 = vld [vmem:[%s3684 + $0x98] sm:$0xf]
        %v3724 = vld [vmem:[%s3684 + $0x9c] sm:$0xf]
        %v3725 = vld [vmem:[%s3684 + $0xa0] sm:$0xf]
        %v3726 = vld [vmem:[%s3684 + $0xa4] sm:$0xf]
        %v3727 = vld [vmem:[%s3684 + $0xa8] sm:$0xf]
        %v3728 = vld [vmem:[%s3684 + $0xac] sm:$0xf]
        %v3729 = vld [vmem:[%s3684 + $0xb0] sm:$0xf]
        %v3730 = vld [vmem:[%s3684 + $0xb4] sm:$0xf]
        %v3731 = vld [vmem:[%s3684 + $0xb8] sm:$0xf]
        %v3732 = vld [vmem:[%s3684 + $0xbc] sm:$0xf]
        %v3733 = vld [vmem:[%s3684 + $0xc0] sm:$0xf]
        %v3734 = vld [vmem:[%s3684 + $0xc4] sm:$0xf]
        %v3735 = vld [vmem:[%s3684 + $0xc8] sm:$0xf]
        %v3736 = vld [vmem:[%s3684 + $0xcc] sm:$0xf]
        %v3737 = vld [vmem:[%s3684 + $0xd0] sm:$0xf]
        %v3738 = vld [vmem:[%s3684 + $0xd4] sm:$0xf]
        %v3739 = vld [vmem:[%s3684 + $0xd8] sm:$0xf]
        %v3740 = vld [vmem:[%s3684 + $0xdc] sm:$0xf]
        %v3741 = vld [vmem:[%s3684 + $0xe0] sm:$0xf]
        %v3742 = vld [vmem:[%s3684 + $0xe4] sm:$0xf]
        %v3743 = vld [vmem:[%s3684 + $0xe8] sm:$0xf]
        %v3744 = vld [vmem:[%s3684 + $0xec] sm:$0xf]
        %v3745 = vld [vmem:[%s3684 + $0xf0] sm:$0xf]
        %v3746 = vld [vmem:[%s3684 + $0xf4] sm:$0xf]
        %v3747 = vld [vmem:[%s3684 + $0xf8] sm:$0xf]
        %v3748 = vld [vmem:[%s3684 + $0xfc] sm:$0xf]
        %v3749 = vld [vmem:[%s3684 + $0x100] sm:$0xf]
        %v3750 = vld [vmem:[%s3684 + $0x104] sm:$0xf]
        %v3751 = vld [vmem:[%s3684 + $0x108] sm:$0xf]
        %v3752 = vld [vmem:[%s3684 + $0x10c] sm:$0xf]
        %v3753 = vld [vmem:[%s3684 + $0x110] sm:$0xf]
        %v3754 = vld [vmem:[%s3684 + $0x114] sm:$0xf]
        %v3755 = vld [vmem:[%s3684 + $0x118] sm:$0xf]
        %v3756 = vld [vmem:[%s3684 + $0x11c] sm:$0xf]
        %v3757 = vld [vmem:[%s3684 + $0x120] sm:$0xf]
        %v3758 = vld [vmem:[%s3684 + $0x124] sm:$0xf]
        %v3759 = vld [vmem:[%s3684 + $0x128] sm:$0xf]
        %v3760 = vld [vmem:[%s3684 + $0x12c] sm:$0xf]
        %v3761 = vld [vmem:[%s3684 + $0x130] sm:$0xf]
        %v3762 = vld [vmem:[%s3684 + $0x134] sm:$0xf]
        %v3763 = vld [vmem:[%s3684 + $0x138] sm:$0xf]
        %v3764 = vld [vmem:[%s3684 + $0x13c] sm:$0xf]
        %s3765 = scalar_lea.vmem %s5, 5
        %v3766 = vld [vmem:[%s3765] sm:$0x1]
        %v3768 = vlaneseq
        %v3769 = vshrl.u32 %v3768, 7
        %v3770 = vsub.s32 0, %v3769
        %v3771 = vrot.slane %v3766, %v3770
        %v3853 = vunpack.c.l.b16 %v3685
        %v3854 = vunpack.c.l.b16 %v3686
        %v3855 = vunpack.c.l.b16 %v3687
        %v3856 = vunpack.c.l.b16 %v3688
        %v3857 = vunpack.c.l.b16 %v3689
        %v3858 = vunpack.c.l.b16 %v3690
        %v3859 = vunpack.c.l.b16 %v3691
        %v3860 = vunpack.c.l.b16 %v3692
        %v3861 = vunpack.c.l.b16 %v3693
        %v3862 = vunpack.c.l.b16 %v3694
        %v3863 = vunpack.c.l.b16 %v3695
        %v3864 = vunpack.c.l.b16 %v3696
        %v3865 = vunpack.c.l.b16 %v3697
        %v3866 = vunpack.c.l.b16 %v3698
        %v3867 = vunpack.c.l.b16 %v3699
        %v3868 = vunpack.c.l.b16 %v3700
        %v3869 = vunpack.c.l.b16 %v3701
        %v3870 = vunpack.c.l.b16 %v3702
        %v3871 = vunpack.c.l.b16 %v3703
        %v3872 = vunpack.c.l.b16 %v3704
        %v3873 = vunpack.c.l.b16 %v3705
        %v3874 = vunpack.c.l.b16 %v3706
        %v3875 = vunpack.c.l.b16 %v3707
        %v3876 = vunpack.c.l.b16 %v3708
        %v3877 = vunpack.c.l.b16 %v3709
        %v3878 = vunpack.c.l.b16 %v3710
        %v3879 = vunpack.c.l.b16 %v3711
        %v3880 = vunpack.c.l.b16 %v3712
        %v3881 = vunpack.c.l.b16 %v3713
        %v3882 = vunpack.c.l.b16 %v3714
        %v3883 = vunpack.c.l.b16 %v3715
        %v3884 = vunpack.c.l.b16 %v3716
        %v3885 = vunpack.c.l.b16 %v3717
        %v3886 = vunpack.c.l.b16 %v3718
        %v3887 = vunpack.c.l.b16 %v3719
        %v3888 = vunpack.c.l.b16 %v3720
        %v3889 = vunpack.c.l.b16 %v3721
        %v3890 = vunpack.c.l.b16 %v3722
        %v3891 = vunpack.c.l.b16 %v3723
        %v3892 = vunpack.c.l.b16 %v3724
        %v3893 = vunpack.c.l.b16 %v3725
        %v3894 = vunpack.c.l.b16 %v3726
        %v3895 = vunpack.c.l.b16 %v3727
        %v3896 = vunpack.c.l.b16 %v3728
        %v3897 = vunpack.c.l.b16 %v3729
        %v3898 = vunpack.c.l.b16 %v3730
        %v3899 = vunpack.c.l.b16 %v3731
        %v3900 = vunpack.c.l.b16 %v3732
        %v3901 = vunpack.c.l.b16 %v3733
        %v3902 = vunpack.c.l.b16 %v3734
        %v3903 = vunpack.c.l.b16 %v3735
        %v3904 = vunpack.c.l.b16 %v3736
        %v3905 = vunpack.c.l.b16 %v3737
        %v3906 = vunpack.c.l.b16 %v3738
        %v3907 = vunpack.c.l.b16 %v3739
        %v3908 = vunpack.c.l.b16 %v3740
        %v3909 = vunpack.c.l.b16 %v3741
        %v3910 = vunpack.c.l.b16 %v3742
        %v3911 = vunpack.c.l.b16 %v3743
        %v3912 = vunpack.c.l.b16 %v3744
        %v3913 = vunpack.c.l.b16 %v3745
        %v3914 = vunpack.c.l.b16 %v3746
        %v3915 = vunpack.c.l.b16 %v3747
        %v3916 = vunpack.c.l.b16 %v3748
        %v3917 = vunpack.c.l.b16 %v3749
        %v3918 = vunpack.c.l.b16 %v3750
        %v3919 = vunpack.c.l.b16 %v3751
        %v3920 = vunpack.c.l.b16 %v3752
        %v3921 = vunpack.c.l.b16 %v3753
        %v3922 = vunpack.c.l.b16 %v3754
        %v3923 = vunpack.c.l.b16 %v3755
        %v3924 = vunpack.c.l.b16 %v3756
        %v3925 = vunpack.c.l.b16 %v3757
        %v3926 = vunpack.c.l.b16 %v3758
        %v3927 = vunpack.c.l.b16 %v3759
        %v3928 = vunpack.c.l.b16 %v3760
        %v3929 = vunpack.c.l.b16 %v3761
        %v3930 = vunpack.c.l.b16 %v3762
        %v3931 = vunpack.c.l.b16 %v3763
        %v3932 = vunpack.c.l.b16 %v3764
        %v3933 = vpack.c.b16 %v3854, %v3853
        %v3934 = vpack.c.b16 %v3856, %v3855
        %v3935 = vpack.c.b16 %v3858, %v3857
        %v3936 = vpack.c.b16 %v3860, %v3859
        %v3937 = vpack.c.b16 %v3862, %v3861
        %v3938 = vpack.c.b16 %v3864, %v3863
        %v3939 = vpack.c.b16 %v3866, %v3865
        %v3940 = vpack.c.b16 %v3868, %v3867
        %v3941 = vpack.c.b16 %v3870, %v3869
        %v3942 = vpack.c.b16 %v3872, %v3871
        %v3943 = vpack.c.b16 %v3874, %v3873
        %v3944 = vpack.c.b16 %v3876, %v3875
        %v3945 = vpack.c.b16 %v3878, %v3877
        %v3946 = vpack.c.b16 %v3880, %v3879
        %v3947 = vpack.c.b16 %v3882, %v3881
        %v3948 = vpack.c.b16 %v3884, %v3883
        %v3949 = vpack.c.b16 %v3886, %v3885
        %v3950 = vpack.c.b16 %v3888, %v3887
        %v3951 = vpack.c.b16 %v3890, %v3889
        %v3952 = vpack.c.b16 %v3892, %v3891
        %v3953 = vpack.c.b16 %v3894, %v3893
        %v3954 = vpack.c.b16 %v3896, %v3895
        %v3955 = vpack.c.b16 %v3898, %v3897
        %v3956 = vpack.c.b16 %v3900, %v3899
        %v3957 = vpack.c.b16 %v3902, %v3901
        %v3958 = vpack.c.b16 %v3904, %v3903
        %v3959 = vpack.c.b16 %v3906, %v3905
        %v3960 = vpack.c.b16 %v3908, %v3907
        %v3961 = vpack.c.b16 %v3910, %v3909
        %v3962 = vpack.c.b16 %v3912, %v3911
        %v3963 = vpack.c.b16 %v3914, %v3913
        %v3964 = vpack.c.b16 %v3916, %v3915
        %v3965 = vpack.c.b16 %v3918, %v3917
        %v3966 = vpack.c.b16 %v3920, %v3919
        %v3967 = vpack.c.b16 %v3922, %v3921
        %v3968 = vpack.c.b16 %v3924, %v3923
        %v3969 = vpack.c.b16 %v3926, %v3925
        %v3970 = vpack.c.b16 %v3928, %v3927
        %v3971 = vpack.c.b16 %v3930, %v3929
        %v3972 = vpack.c.b16 %v3932, %v3931
        %4013 = vmatprep.subr.bf16.mxu0 0
        %4014 = vmatpush1.bf16.msra.mxu0 %v3933
        %4015 = vmatprep.subr.bf16.mxu0 0
        %4016 = vmatpush1.bf16.msra.mxu0 %v3934
        %4017 = vmatprep.subr.bf16.mxu0 0
        %4018 = vmatpush1.bf16.msra.mxu0 %v3935
        %4019 = vmatprep.subr.bf16.mxu0 0
        %4020 = vmatpush1.bf16.msra.mxu0 %v3936
        %4021 = vmatprep.subr.bf16.mxu0 0
        %4022 = vmatpush1.bf16.msra.mxu0 %v3937
        %4023 = vmatprep.subr.bf16.mxu0 0
        %4024 = vmatpush1.bf16.msra.mxu0 %v3938
        %4025 = vmatprep.subr.bf16.mxu0 0
        %4026 = vmatpush1.bf16.msra.mxu0 %v3939
        %4027 = vmatprep.subr.bf16.mxu0 0
        %4028 = vmatpush1.bf16.msra.mxu0 %v3940
        %4029 = vmatprep.subr.bf16.mxu0 0
        %4030 = vmatpush1.bf16.msra.mxu0 %v3941
        %4031 = vmatprep.subr.bf16.mxu0 0
        %4032 = vmatpush1.bf16.msra.mxu0 %v3942
        %4033 = vmatprep.subr.bf16.mxu0 0
        %4034 = vmatpush1.bf16.msra.mxu0 %v3943
        %4035 = vmatprep.subr.bf16.mxu0 0
        %4036 = vmatpush1.bf16.msra.mxu0 %v3944
        %4037 = vmatprep.subr.bf16.mxu0 0
        %4038 = vmatpush1.bf16.msra.mxu0 %v3945
        %4039 = vmatprep.subr.bf16.mxu0 0
        %4040 = vmatpush1.bf16.msra.mxu0 %v3946
        %4041 = vmatprep.subr.bf16.mxu0 0
        %4042 = vmatpush1.bf16.msra.mxu0 %v3947
        %4043 = vmatprep.subr.bf16.mxu0 0
        %4044 = vmatpush1.bf16.msra.mxu0 %v3948
        %4045 = vmatprep.mubr.bf16.mxu0 0
        %4046 = vmatmul.mubr.bf16.gmra.mrb[0].mxu0 0
        %v4047 = vpop.f32.mrb[0].mxu0
        %v4048 = vadd.f32 %v3771, %v4047
        %v4049 = vpop.f32.mrb[0].mxu0
        %v4050 = vpop.f32.mrb[0].mxu0
        %v4051 = vadd.f32 %v3771, %v4050
        %v4052 = vpop.f32.mrb[0].mxu0
        %4053 = vdwg.mxu0
        %4054 = vmatprep.subr.bf16.mxu0 0
        %4055 = vmatpush1.bf16.msra.mxu0 %v3949
        %4056 = vmatprep.subr.bf16.mxu0 0
        %4057 = vmatpush1.bf16.msra.mxu0 %v3950
        %4058 = vmatprep.subr.bf16.mxu0 0
        %4059 = vmatpush1.bf16.msra.mxu0 %v3951
        %4060 = vmatprep.subr.bf16.mxu0 0
        %4061 = vmatpush1.bf16.msra.mxu0 %v3952
        %4062 = vmatprep.subr.bf16.mxu0 0
        %4063 = vmatpush1.bf16.msra.mxu0 %v3953
        %4064 = vmatprep.subr.bf16.mxu0 0
        %4065 = vmatpush1.bf16.msra.mxu0 %v3954
        %4066 = vmatprep.subr.bf16.mxu0 0
        %4067 = vmatpush1.bf16.msra.mxu0 %v3955
        %4068 = vmatprep.subr.bf16.mxu0 0
        %4069 = vmatpush1.bf16.msra.mxu0 %v3956
        %4070 = vmatprep.subr.bf16.mxu0 0
        %4071 = vmatpush1.bf16.msra.mxu0 %v3957
        %4072 = vmatprep.subr.bf16.mxu0 0
        %4073 = vmatpush1.bf16.msra.mxu0 %v3958
        %4074 = vmatprep.subr.bf16.mxu0 0
        %4075 = vmatpush1.bf16.msra.mxu0 %v3959
        %4076 = vmatprep.subr.bf16.mxu0 0
        %4077 = vmatpush1.bf16.msra.mxu0 %v3960
        %4078 = vmatprep.subr.bf16.mxu0 0
        %4079 = vmatpush1.bf16.msra.mxu0 %v3961
        %4080 = vmatprep.subr.bf16.mxu0 0
        %4081 = vmatpush1.bf16.msra.mxu0 %v3962
        %4082 = vmatprep.subr.bf16.mxu0 0
        %4083 = vmatpush1.bf16.msra.mxu0 %v3963
        %4084 = vmatprep.subr.bf16.mxu0 0
        %4085 = vmatpush1.bf16.msra.mxu0 %v3964
        %4086 = vmatprep.mubr.bf16.mxu0 0
        %4087 = vmatmul.mubr.bf16.gmra.mrb[0].mxu0 0
        %v4088 = vpop.f32.mrb[0].mxu0
        %v4089 = vadd.f32 %v4048, %v4088
        %v4090 = vpop.f32.mrb[0].mxu0
        %v4091 = vpop.f32.mrb[0].mxu0
        %v4092 = vadd.f32 %v4051, %v4091
        %v4093 = vpop.f32.mrb[0].mxu0
        %4094 = vdwg.mxu0
        %4095 = vmatprep.subr.bf16.mxu0 0
        %4096 = vmatpush1.bf16.msra.mxu0 %v3965
        %4097 = vmatprep.subr.bf16.mxu0 0
        %4098 = vmatpush1.bf16.msra.mxu0 %v3966
        %4099 = vmatprep.subr.bf16.mxu0 0
        %4100 = vmatpush1.bf16.msra.mxu0 %v3967
        %4101 = vmatprep.subr.bf16.mxu0 0
        %4102 = vmatpush1.bf16.msra.mxu0 %v3968
        %4103 = vmatprep.subr.bf16.mxu0 0
        %4104 = vmatpush1.bf16.msra.mxu0 %v3969
        %4105 = vmatprep.subr.bf16.mxu0 0
        %4106 = vmatpush1.bf16.msra.mxu0 %v3970
        %4107 = vmatprep.subr.bf16.mxu0 0
        %4108 = vmatpush1.bf16.msra.mxu0 %v3971
        %4109 = vmatprep.subr.bf16.mxu0 0
        %4110 = vmatpush1.bf16.msra.mxu0 %v3972
        %4111 = vmatprep.subr.bf16.mxu0 0
        %4112 = vmatpush1.bf16.msra.mxu0 0
        %4113 = vmatprep.subr.bf16.mxu0 0
        %4114 = vmatpush1.bf16.msra.mxu0 0
        %4115 = vmatprep.subr.bf16.mxu0 0
        %4116 = vmatpush1.bf16.msra.mxu0 0
        %4117 = vmatprep.subr.bf16.mxu0 0
        %4118 = vmatpush1.bf16.msra.mxu0 0
        %4119 = vmatprep.subr.bf16.mxu0 0
        %4120 = vmatpush1.bf16.msra.mxu0 0
        %4121 = vmatprep.subr.bf16.mxu0 0
        %4122 = vmatpush1.bf16.msra.mxu0 0
        %4123 = vmatprep.subr.bf16.mxu0 0
        %4124 = vmatpush1.bf16.msra.mxu0 0
        %4125 = vmatprep.subr.bf16.mxu0 0
        %4126 = vmatpush1.bf16.msra.mxu0 0
        %4127 = vmatprep.mubr.bf16.mxu0 0
        %4128 = vmatmul.mubr.bf16.gmra.mrb[0].mxu0 %v3683
        %v4129 = vpop.f32.mrb[0].mxu0
        %v4130 = vadd.f32 %v4089, %v4129
        %v4131 = vpop.f32.mrb[0].mxu0
        %v4132 = vpop.f32.mrb[0].mxu0
        %v4133 = vadd.f32 %v4092, %v4132
        %v4134 = vpop.f32.mrb[0].mxu0
        %4135 = vdwg.mxu0
        %v4136 = vmax.f32 %v4130, 0.0
        %v4137 = vmax.f32 %v4133, 0.0
        %v4138 = vpack.c.bf16 %v4137, %v4136
        %s4139 = scalar_lea.vmem [#allocation5], 1600
        %v4140 = vld [vmem:[%s4139] sm:$0xf]
        %v4141 = vld [vmem:[%s4139 + $0x4] sm:$0xf]
        %v4142 = vld [vmem:[%s4139 + $0x8] sm:$0xf]
        %v4143 = vld [vmem:[%s4139 + $0xc] sm:$0xf]
        %v4144 = vld [vmem:[%s4139 + $0x10] sm:$0xf]
        %v4145 = vld [vmem:[%s4139 + $0x14] sm:$0xf]
        %v4146 = vld [vmem:[%s4139 + $0x18] sm:$0xf]
        %v4147 = vld [vmem:[%s4139 + $0x1c] sm:$0xf]
        %v4148 = vld [vmem:[%s4139 + $0x20] sm:$0xf]
        %v4149 = vld [vmem:[%s4139 + $0x24] sm:$0xf]
        %v4150 = vld [vmem:[%s4139 + $0x28] sm:$0xf]
        %v4151 = vld [vmem:[%s4139 + $0x2c] sm:$0xf]
        %v4152 = vld [vmem:[%s4139 + $0x30] sm:$0xf]
        %v4153 = vld [vmem:[%s4139 + $0x34] sm:$0xf]
        %v4154 = vld [vmem:[%s4139 + $0x38] sm:$0xf]
        %v4155 = vld [vmem:[%s4139 + $0x3c] sm:$0xf]
        %v4156 = vld [vmem:[%s4139 + $0x40] sm:$0xf]
        %v4157 = vld [vmem:[%s4139 + $0x44] sm:$0xf]
        %v4158 = vld [vmem:[%s4139 + $0x48] sm:$0xf]
        %v4159 = vld [vmem:[%s4139 + $0x4c] sm:$0xf]
        %v4160 = vld [vmem:[%s4139 + $0x50] sm:$0xf]
        %v4161 = vld [vmem:[%s4139 + $0x54] sm:$0xf]
        %v4162 = vld [vmem:[%s4139 + $0x58] sm:$0xf]
        %v4163 = vld [vmem:[%s4139 + $0x5c] sm:$0xf]
        %v4164 = vld [vmem:[%s4139 + $0x60] sm:$0xf]
        %v4165 = vld [vmem:[%s4139 + $0x64] sm:$0xf]
        %v4166 = vld [vmem:[%s4139 + $0x68] sm:$0xf]
        %v4167 = vld [vmem:[%s4139 + $0x6c] sm:$0xf]
        %v4168 = vld [vmem:[%s4139 + $0x70] sm:$0xf]
        %v4169 = vld [vmem:[%s4139 + $0x74] sm:$0xf]
        %v4170 = vld [vmem:[%s4139 + $0x78] sm:$0xf]
        %v4171 = vld [vmem:[%s4139 + $0x7c] sm:$0xf]
        %v4172 = vld [vmem:[%s4139 + $0x80] sm:$0xf]
        %v4173 = vld [vmem:[%s4139 + $0x84] sm:$0xf]
        %v4174 = vld [vmem:[%s4139 + $0x88] sm:$0xf]
        %v4175 = vld [vmem:[%s4139 + $0x8c] sm:$0xf]
        %v4176 = vld [vmem:[%s4139 + $0x90] sm:$0xf]
        %v4177 = vld [vmem:[%s4139 + $0x94] sm:$0xf]
        %v4178 = vld [vmem:[%s4139 + $0x98] sm:$0xf]
        %v4179 = vld [vmem:[%s4139 + $0x9c] sm:$0xf]
        %v4180 = vld [vmem:[%s4139 + $0xa0] sm:$0xf]
        %v4181 = vld [vmem:[%s4139 + $0xa4] sm:$0xf]
        %v4182 = vld [vmem:[%s4139 + $0xa8] sm:$0xf]
        %v4183 = vld [vmem:[%s4139 + $0xac] sm:$0xf]
        %v4184 = vld [vmem:[%s4139 + $0xb0] sm:$0xf]
        %v4185 = vld [vmem:[%s4139 + $0xb4] sm:$0xf]
        %v4186 = vld [vmem:[%s4139 + $0xb8] sm:$0xf]
        %v4187 = vld [vmem:[%s4139 + $0xbc] sm:$0xf]
        %v4188 = vld [vmem:[%s4139 + $0xc0] sm:$0xf]
        %v4189 = vld [vmem:[%s4139 + $0xc4] sm:$0xf]
        %v4190 = vld [vmem:[%s4139 + $0xc8] sm:$0xf]
        %v4191 = vld [vmem:[%s4139 + $0xcc] sm:$0xf]
        %v4192 = vld [vmem:[%s4139 + $0xd0] sm:$0xf]
        %v4193 = vld [vmem:[%s4139 + $0xd4] sm:$0xf]
        %v4194 = vld [vmem:[%s4139 + $0xd8] sm:$0xf]
        %v4195 = vld [vmem:[%s4139 + $0xdc] sm:$0xf]
        %v4196 = vld [vmem:[%s4139 + $0xe0] sm:$0xf]
        %v4197 = vld [vmem:[%s4139 + $0xe4] sm:$0xf]
        %v4198 = vld [vmem:[%s4139 + $0xe8] sm:$0xf]
        %v4199 = vld [vmem:[%s4139 + $0xec] sm:$0xf]
        %v4200 = vld [vmem:[%s4139 + $0xf0] sm:$0xf]
        %v4201 = vld [vmem:[%s4139 + $0xf4] sm:$0xf]
        %v4202 = vld [vmem:[%s4139 + $0xf8] sm:$0xf]
        %v4203 = vld [vmem:[%s4139 + $0xfc] sm:$0xf]
        %v4204 = vld [vmem:[%s4139 + $0x100] sm:$0xf]
        %v4205 = vld [vmem:[%s4139 + $0x104] sm:$0xf]
        %v4206 = vld [vmem:[%s4139 + $0x108] sm:$0xf]
        %v4207 = vld [vmem:[%s4139 + $0x10c] sm:$0xf]
        %v4208 = vld [vmem:[%s4139 + $0x110] sm:$0xf]
        %v4209 = vld [vmem:[%s4139 + $0x114] sm:$0xf]
        %v4210 = vld [vmem:[%s4139 + $0x118] sm:$0xf]
        %v4211 = vld [vmem:[%s4139 + $0x11c] sm:$0xf]
        %v4212 = vld [vmem:[%s4139 + $0x120] sm:$0xf]
        %v4213 = vld [vmem:[%s4139 + $0x124] sm:$0xf]
        %v4214 = vld [vmem:[%s4139 + $0x128] sm:$0xf]
        %v4215 = vld [vmem:[%s4139 + $0x12c] sm:$0xf]
        %v4216 = vld [vmem:[%s4139 + $0x130] sm:$0xf]
        %v4217 = vld [vmem:[%s4139 + $0x134] sm:$0xf]
        %v4218 = vld [vmem:[%s4139 + $0x138] sm:$0xf]
        %v4219 = vld [vmem:[%s4139 + $0x13c] sm:$0xf]
        %s4220 = scalar_lea.vmem %s5, 6
        %v4221 = vld [vmem:[%s4220] sm:$0x1]
        %v4223 = vlaneseq
        %v4224 = vshrl.u32 %v4223, 7
        %v4225 = vsub.s32 0, %v4224
        %v4226 = vrot.slane %v4221, %v4225
        %v4308 = vunpack.c.l.b16 %v4140
        %v4309 = vunpack.c.l.b16 %v4141
        %v4310 = vunpack.c.l.b16 %v4142
        %v4311 = vunpack.c.l.b16 %v4143
        %v4312 = vunpack.c.l.b16 %v4144
        %v4313 = vunpack.c.l.b16 %v4145
        %v4314 = vunpack.c.l.b16 %v4146
        %v4315 = vunpack.c.l.b16 %v4147
        %v4316 = vunpack.c.l.b16 %v4148
        %v4317 = vunpack.c.l.b16 %v4149
        %v4318 = vunpack.c.l.b16 %v4150
        %v4319 = vunpack.c.l.b16 %v4151
        %v4320 = vunpack.c.l.b16 %v4152
        %v4321 = vunpack.c.l.b16 %v4153
        %v4322 = vunpack.c.l.b16 %v4154
        %v4323 = vunpack.c.l.b16 %v4155
        %v4324 = vunpack.c.l.b16 %v4156
        %v4325 = vunpack.c.l.b16 %v4157
        %v4326 = vunpack.c.l.b16 %v4158
        %v4327 = vunpack.c.l.b16 %v4159
        %v4328 = vunpack.c.l.b16 %v4160
        %v4329 = vunpack.c.l.b16 %v4161
        %v4330 = vunpack.c.l.b16 %v4162
        %v4331 = vunpack.c.l.b16 %v4163
        %v4332 = vunpack.c.l.b16 %v4164
        %v4333 = vunpack.c.l.b16 %v4165
        %v4334 = vunpack.c.l.b16 %v4166
        %v4335 = vunpack.c.l.b16 %v4167
        %v4336 = vunpack.c.l.b16 %v4168
        %v4337 = vunpack.c.l.b16 %v4169
        %v4338 = vunpack.c.l.b16 %v4170
        %v4339 = vunpack.c.l.b16 %v4171
        %v4340 = vunpack.c.l.b16 %v4172
        %v4341 = vunpack.c.l.b16 %v4173
        %v4342 = vunpack.c.l.b16 %v4174
        %v4343 = vunpack.c.l.b16 %v4175
        %v4344 = vunpack.c.l.b16 %v4176
        %v4345 = vunpack.c.l.b16 %v4177
        %v4346 = vunpack.c.l.b16 %v4178
        %v4347 = vunpack.c.l.b16 %v4179
        %v4348 = vunpack.c.l.b16 %v4180
        %v4349 = vunpack.c.l.b16 %v4181
        %v4350 = vunpack.c.l.b16 %v4182
        %v4351 = vunpack.c.l.b16 %v4183
        %v4352 = vunpack.c.l.b16 %v4184
        %v4353 = vunpack.c.l.b16 %v4185
        %v4354 = vunpack.c.l.b16 %v4186
        %v4355 = vunpack.c.l.b16 %v4187
        %v4356 = vunpack.c.l.b16 %v4188
        %v4357 = vunpack.c.l.b16 %v4189
        %v4358 = vunpack.c.l.b16 %v4190
        %v4359 = vunpack.c.l.b16 %v4191
        %v4360 = vunpack.c.l.b16 %v4192
        %v4361 = vunpack.c.l.b16 %v4193
        %v4362 = vunpack.c.l.b16 %v4194
        %v4363 = vunpack.c.l.b16 %v4195
        %v4364 = vunpack.c.l.b16 %v4196
        %v4365 = vunpack.c.l.b16 %v4197
        %v4366 = vunpack.c.l.b16 %v4198
        %v4367 = vunpack.c.l.b16 %v4199
        %v4368 = vunpack.c.l.b16 %v4200
        %v4369 = vunpack.c.l.b16 %v4201
        %v4370 = vunpack.c.l.b16 %v4202
        %v4371 = vunpack.c.l.b16 %v4203
        %v4372 = vunpack.c.l.b16 %v4204
        %v4373 = vunpack.c.l.b16 %v4205
        %v4374 = vunpack.c.l.b16 %v4206
        %v4375 = vunpack.c.l.b16 %v4207
        %v4376 = vunpack.c.l.b16 %v4208
        %v4377 = vunpack.c.l.b16 %v4209
        %v4378 = vunpack.c.l.b16 %v4210
        %v4379 = vunpack.c.l.b16 %v4211
        %v4380 = vunpack.c.l.b16 %v4212
        %v4381 = vunpack.c.l.b16 %v4213
        %v4382 = vunpack.c.l.b16 %v4214
        %v4383 = vunpack.c.l.b16 %v4215
        %v4384 = vunpack.c.l.b16 %v4216
        %v4385 = vunpack.c.l.b16 %v4217
        %v4386 = vunpack.c.l.b16 %v4218
        %v4387 = vunpack.c.l.b16 %v4219
        %v4388 = vpack.c.b16 %v4309, %v4308
        %v4389 = vpack.c.b16 %v4311, %v4310
        %v4390 = vpack.c.b16 %v4313, %v4312
        %v4391 = vpack.c.b16 %v4315, %v4314
        %v4392 = vpack.c.b16 %v4317, %v4316
        %v4393 = vpack.c.b16 %v4319, %v4318
        %v4394 = vpack.c.b16 %v4321, %v4320
        %v4395 = vpack.c.b16 %v4323, %v4322
        %v4396 = vpack.c.b16 %v4325, %v4324
        %v4397 = vpack.c.b16 %v4327, %v4326
        %v4398 = vpack.c.b16 %v4329, %v4328
        %v4399 = vpack.c.b16 %v4331, %v4330
        %v4400 = vpack.c.b16 %v4333, %v4332
        %v4401 = vpack.c.b16 %v4335, %v4334
        %v4402 = vpack.c.b16 %v4337, %v4336
        %v4403 = vpack.c.b16 %v4339, %v4338
        %v4404 = vpack.c.b16 %v4341, %v4340
        %v4405 = vpack.c.b16 %v4343, %v4342
        %v4406 = vpack.c.b16 %v4345, %v4344
        %v4407 = vpack.c.b16 %v4347, %v4346
        %v4408 = vpack.c.b16 %v4349, %v4348
        %v4409 = vpack.c.b16 %v4351, %v4350
        %v4410 = vpack.c.b16 %v4353, %v4352
        %v4411 = vpack.c.b16 %v4355, %v4354
        %v4412 = vpack.c.b16 %v4357, %v4356
        %v4413 = vpack.c.b16 %v4359, %v4358
        %v4414 = vpack.c.b16 %v4361, %v4360
        %v4415 = vpack.c.b16 %v4363, %v4362
        %v4416 = vpack.c.b16 %v4365, %v4364
        %v4417 = vpack.c.b16 %v4367, %v4366
        %v4418 = vpack.c.b16 %v4369, %v4368
        %v4419 = vpack.c.b16 %v4371, %v4370
        %v4420 = vpack.c.b16 %v4373, %v4372
        %v4421 = vpack.c.b16 %v4375, %v4374
        %v4422 = vpack.c.b16 %v4377, %v4376
        %v4423 = vpack.c.b16 %v4379, %v4378
        %v4424 = vpack.c.b16 %v4381, %v4380
        %v4425 = vpack.c.b16 %v4383, %v4382
        %v4426 = vpack.c.b16 %v4385, %v4384
        %v4427 = vpack.c.b16 %v4387, %v4386
        %4468 = vmatprep.subr.bf16.mxu0 0
        %4469 = vmatpush1.bf16.msra.mxu0 %v4388
        %4470 = vmatprep.subr.bf16.mxu0 0
        %4471 = vmatpush1.bf16.msra.mxu0 %v4389
        %4472 = vmatprep.subr.bf16.mxu0 0
        %4473 = vmatpush1.bf16.msra.mxu0 %v4390
        %4474 = vmatprep.subr.bf16.mxu0 0
        %4475 = vmatpush1.bf16.msra.mxu0 %v4391
        %4476 = vmatprep.subr.bf16.mxu0 0
        %4477 = vmatpush1.bf16.msra.mxu0 %v4392
        %4478 = vmatprep.subr.bf16.mxu0 0
        %4479 = vmatpush1.bf16.msra.mxu0 %v4393
        %4480 = vmatprep.subr.bf16.mxu0 0
        %4481 = vmatpush1.bf16.msra.mxu0 %v4394
        %4482 = vmatprep.subr.bf16.mxu0 0
        %4483 = vmatpush1.bf16.msra.mxu0 %v4395
        %4484 = vmatprep.subr.bf16.mxu0 0
        %4485 = vmatpush1.bf16.msra.mxu0 %v4396
        %4486 = vmatprep.subr.bf16.mxu0 0
        %4487 = vmatpush1.bf16.msra.mxu0 %v4397
        %4488 = vmatprep.subr.bf16.mxu0 0
        %4489 = vmatpush1.bf16.msra.mxu0 %v4398
        %4490 = vmatprep.subr.bf16.mxu0 0
        %4491 = vmatpush1.bf16.msra.mxu0 %v4399
        %4492 = vmatprep.subr.bf16.mxu0 0
        %4493 = vmatpush1.bf16.msra.mxu0 %v4400
        %4494 = vmatprep.subr.bf16.mxu0 0
        %4495 = vmatpush1.bf16.msra.mxu0 %v4401
        %4496 = vmatprep.subr.bf16.mxu0 0
        %4497 = vmatpush1.bf16.msra.mxu0 %v4402
        %4498 = vmatprep.subr.bf16.mxu0 0
        %4499 = vmatpush1.bf16.msra.mxu0 %v4403
        %4500 = vmatprep.mubr.bf16.mxu0 0
        %4501 = vmatmul.mubr.bf16.gmra.mrb[0].mxu0 0
        %v4502 = vpop.f32.mrb[0].mxu0
        %v4503 = vpop.f32.mrb[0].mxu0
        %v4504 = vpop.f32.mrb[0].mxu0
        %v4505 = vadd.f32 %v4226, %v4504
        %v4506 = vpop.f32.mrb[0].mxu0
        %4507 = vdwg.mxu0
        %4508 = vmatprep.subr.bf16.mxu0 0
        %4509 = vmatpush1.bf16.msra.mxu0 %v4404
        %4510 = vmatprep.subr.bf16.mxu0 0
        %4511 = vmatpush1.bf16.msra.mxu0 %v4405
        %4512 = vmatprep.subr.bf16.mxu0 0
        %4513 = vmatpush1.bf16.msra.mxu0 %v4406
        %4514 = vmatprep.subr.bf16.mxu0 0
        %4515 = vmatpush1.bf16.msra.mxu0 %v4407
        %4516 = vmatprep.subr.bf16.mxu0 0
        %4517 = vmatpush1.bf16.msra.mxu0 %v4408
        %4518 = vmatprep.subr.bf16.mxu0 0
        %4519 = vmatpush1.bf16.msra.mxu0 %v4409
        %4520 = vmatprep.subr.bf16.mxu0 0
        %4521 = vmatpush1.bf16.msra.mxu0 %v4410
        %4522 = vmatprep.subr.bf16.mxu0 0
        %4523 = vmatpush1.bf16.msra.mxu0 %v4411
        %4524 = vmatprep.subr.bf16.mxu0 0
        %4525 = vmatpush1.bf16.msra.mxu0 %v4412
        %4526 = vmatprep.subr.bf16.mxu0 0
        %4527 = vmatpush1.bf16.msra.mxu0 %v4413
        %4528 = vmatprep.subr.bf16.mxu0 0
        %4529 = vmatpush1.bf16.msra.mxu0 %v4414
        %4530 = vmatprep.subr.bf16.mxu0 0
        %4531 = vmatpush1.bf16.msra.mxu0 %v4415
        %4532 = vmatprep.subr.bf16.mxu0 0
        %4533 = vmatpush1.bf16.msra.mxu0 %v4416
        %4534 = vmatprep.subr.bf16.mxu0 0
        %4535 = vmatpush1.bf16.msra.mxu0 %v4417
        %4536 = vmatprep.subr.bf16.mxu0 0
        %4537 = vmatpush1.bf16.msra.mxu0 %v4418
        %4538 = vmatprep.subr.bf16.mxu0 0
        %4539 = vmatpush1.bf16.msra.mxu0 %v4419
        %4540 = vmatprep.mubr.bf16.mxu0 0
        %4541 = vmatmul.mubr.bf16.gmra.mrb[0].mxu0 0
        %v4542 = vpop.f32.mrb[0].mxu0
        %v4543 = vpop.f32.mrb[0].mxu0
        %v4544 = vpop.f32.mrb[0].mxu0
        %v4545 = vadd.f32 %v4505, %v4544
        %v4546 = vpop.f32.mrb[0].mxu0
        %4547 = vdwg.mxu0
        %4548 = vmatprep.subr.bf16.mxu0 0
        %4549 = vmatpush1.bf16.msra.mxu0 %v4420
        %4550 = vmatprep.subr.bf16.mxu0 0
        %4551 = vmatpush1.bf16.msra.mxu0 %v4421
        %4552 = vmatprep.subr.bf16.mxu0 0
        %4553 = vmatpush1.bf16.msra.mxu0 %v4422
        %4554 = vmatprep.subr.bf16.mxu0 0
        %4555 = vmatpush1.bf16.msra.mxu0 %v4423
        %4556 = vmatprep.subr.bf16.mxu0 0
        %4557 = vmatpush1.bf16.msra.mxu0 %v4424
        %4558 = vmatprep.subr.bf16.mxu0 0
        %4559 = vmatpush1.bf16.msra.mxu0 %v4425
        %4560 = vmatprep.subr.bf16.mxu0 0
        %4561 = vmatpush1.bf16.msra.mxu0 %v4426
        %4562 = vmatprep.subr.bf16.mxu0 0
        %4563 = vmatpush1.bf16.msra.mxu0 %v4427
        %4564 = vmatprep.subr.bf16.mxu0 0
        %4565 = vmatpush1.bf16.msra.mxu0 0
        %4566 = vmatprep.subr.bf16.mxu0 0
        %4567 = vmatpush1.bf16.msra.mxu0 0
        %4568 = vmatprep.subr.bf16.mxu0 0
        %4569 = vmatpush1.bf16.msra.mxu0 0
        %4570 = vmatprep.subr.bf16.mxu0 0
        %4571 = vmatpush1.bf16.msra.mxu0 0
        %4572 = vmatprep.subr.bf16.mxu0 0
        %4573 = vmatpush1.bf16.msra.mxu0 0
        %4574 = vmatprep.subr.bf16.mxu0 0
        %4575 = vmatpush1.bf16.msra.mxu0 0
        %4576 = vmatprep.subr.bf16.mxu0 0
        %4577 = vmatpush1.bf16.msra.mxu0 0
        %4578 = vmatprep.subr.bf16.mxu0 0
        %4579 = vmatpush1.bf16.msra.mxu0 0
        %4580 = vmatprep.mubr.bf16.mxu0 0
        %4581 = vmatmul.mubr.bf16.gmra.mrb[0].mxu0 %v4138
        %v4582 = vpop.f32.mrb[0].mxu0
        %v4583 = vpop.f32.mrb[0].mxu0
        %v4584 = vpop.f32.mrb[0].mxu0
        %v4585 = vadd.f32 %v4545, %v4584
        %v4586 = vpop.f32.mrb[0].mxu0
        %4587 = vdwg.mxu0
        %v4588 = vmax.f32 %v4585, 0.0
        %v4589 = vld [vmem:[%s6] sm:$0xff]
        %v4590 = vld [vmem:[%s6 + $0x8] sm:$0xff]
        %v4591 = vld [vmem:[%s6 + $0x10] sm:$0xff]
        %v4592 = vld [vmem:[%s6 + $0x18] sm:$0xff]
        %v4593 = vld [vmem:[%s6 + $0x20] sm:$0xff]
        %v4594 = vld [vmem:[%s6 + $0x28] sm:$0xff]
        %v4595 = vld [vmem:[%s6 + $0x30] sm:$0xff]
        %v4596 = vld [vmem:[%s6 + $0x38] sm:$0xff]
        %v4597 = vld [vmem:[%s6 + $0x40] sm:$0xff]
        %v4598 = vld [vmem:[%s6 + $0x48] sm:$0xff]
        %v4599 = vld [vmem:[%s6 + $0x50] sm:$0xff]
        %v4600 = vld [vmem:[%s6 + $0x58] sm:$0xff]
        %v4601 = vld [vmem:[%s6 + $0x60] sm:$0xff]
        %v4602 = vld [vmem:[%s6 + $0x68] sm:$0xff]
        %v4603 = vld [vmem:[%s6 + $0x70] sm:$0xff]
        %v4604 = vld [vmem:[%s6 + $0x78] sm:$0xff]
        %v4605 = vld [vmem:[%s432] sm:$0x1]
        %v4607 = vrot.slane %v4588, 7
        %4609 = vmatprep.subr.mxu0 0.0
        %4610 = vmatpush1.msra.mxu0 %v4589
        %4611 = vmatprep.subr.mxu0 0.0
        %4612 = vmatpush1.msra.mxu0 %v4590
        %4613 = vmatprep.subr.mxu0 0.0
        %4614 = vmatpush1.msra.mxu0 %v4591
        %4615 = vmatprep.subr.mxu0 0.0
        %4616 = vmatpush1.msra.mxu0 %v4592
        %4617 = vmatprep.subr.mxu0 0.0
        %4618 = vmatpush1.msra.mxu0 %v4593
        %4619 = vmatprep.subr.mxu0 0.0
        %4620 = vmatpush1.msra.mxu0 %v4594
        %4621 = vmatprep.subr.mxu0 0.0
        %4622 = vmatpush1.msra.mxu0 %v4595
        %4623 = vmatprep.subr.mxu0 0.0
        %4624 = vmatpush1.msra.mxu0 %v4596
        %4625 = vmatprep.subr.mxu0 0.0
        %4626 = vmatpush1.msra.mxu0 %v4597
        %4627 = vmatprep.subr.mxu0 0.0
        %4628 = vmatpush1.msra.mxu0 %v4598
        %4629 = vmatprep.subr.mxu0 0.0
        %4630 = vmatpush1.msra.mxu0 %v4599
        %4631 = vmatprep.subr.mxu0 0.0
        %4632 = vmatpush1.msra.mxu0 %v4600
        %4633 = vmatprep.subr.mxu0 0.0
        %4634 = vmatpush1.msra.mxu0 %v4601
        %4635 = vmatprep.subr.mxu0 0.0
        %4636 = vmatpush1.msra.mxu0 %v4602
        %4637 = vmatprep.subr.mxu0 0.0
        %4638 = vmatpush1.msra.mxu0 %v4603
        %4639 = vmatprep.subr.mxu0 0.0
        %4640 = vmatpush1.msra.mxu0 %v4604
        %4641 = vmatprep.subr.mxu0 0.0
        %4642 = vmatpush1.msra.mxu0 0.0
        %4643 = vmatprep.subr.mxu0 0.0
        %4644 = vmatpush1.msra.mxu0 0.0
        %4645 = vmatprep.subr.mxu0 0.0
        %4646 = vmatpush1.msra.mxu0 0.0
        %4647 = vmatprep.subr.mxu0 0.0
        %4648 = vmatpush1.msra.mxu0 0.0
        %4649 = vmatprep.subr.mxu0 0.0
        %4650 = vmatpush1.msra.mxu0 0.0
        %4651 = vmatprep.subr.mxu0 0.0
        %4652 = vmatpush1.msra.mxu0 0.0
        %4653 = vmatprep.subr.mxu0 0.0
        %4654 = vmatpush1.msra.mxu0 0.0
        %4655 = vmatprep.subr.mxu0 0.0
        %4656 = vmatpush1.msra.mxu0 0.0
        %4657 = vmatprep.subr.mxu0 0.0
        %4658 = vmatpush1.msra.mxu0 0.0
        %4659 = vmatprep.subr.mxu0 0.0
        %4660 = vmatpush1.msra.mxu0 0.0
        %4661 = vmatprep.subr.mxu0 0.0
        %4662 = vmatpush1.msra.mxu0 0.0
        %4663 = vmatprep.subr.mxu0 0.0
        %4664 = vmatpush1.msra.mxu0 0.0
        %4665 = vmatprep.subr.mxu0 0.0
        %4666 = vmatpush1.msra.mxu0 0.0
        %4667 = vmatprep.subr.mxu0 0.0
        %4668 = vmatpush1.msra.mxu0 0.0
        %4669 = vmatprep.subr.mxu0 0.0
        %4670 = vmatpush1.msra.mxu0 0.0
        %4671 = vmatprep.subr.mxu0 0.0
        %4672 = vmatpush1.msra.mxu0 0.0
        %4673 = vmatprep.mubr.f32.mxu0 0.0
        %4674 = vmatmul.mubr.f32.gmra.mrb[0].mxu0 %v4607
        %v4675 = vpop.f32.mrb[0].mxu0
        %v4676 = vadd.f32 %v4605, %v4675
        %v4677 = vpop.f32.mrb[0].mxu0
        %4678 = vdwg.mxu0
        %v4679 = vmax.f32 %v4676, 0.0
        %v4680 = vld [vmem:[%s7] sm:$0xff]
        %v4681 = vld [vmem:[%s7 + $0x8] sm:$0xff]
        %v4682 = vld [vmem:[%s7 + $0x10] sm:$0xff]
        %v4683 = vld [vmem:[%s7 + $0x18] sm:$0xff]
        %v4684 = vld [vmem:[%s7 + $0x20] sm:$0xff]
        %v4685 = vld [vmem:[%s7 + $0x28] sm:$0xff]
        %v4686 = vld [vmem:[%s7 + $0x30] sm:$0xff]
        %v4687 = vld [vmem:[%s7 + $0x38] sm:$0xff]
        %v4688 = vld [vmem:[%s8] sm:$0x1]
        %vm4689 = vcmask 523264
        %v4691 = vsel %vm4689, %v4679, 0
        %4693 = vmatprep.subr.mxu0 0.0
        %4694 = vmatpush1.msra.mxu0 %v4680
        %4695 = vmatprep.subr.mxu0 0.0
        %4696 = vmatpush1.msra.mxu0 %v4681
        %4697 = vmatprep.subr.mxu0 0.0
        %4698 = vmatpush1.msra.mxu0 %v4682
        %4699 = vmatprep.subr.mxu0 0.0
        %4700 = vmatpush1.msra.mxu0 %v4683
        %4701 = vmatprep.subr.mxu0 0.0
        %4702 = vmatpush1.msra.mxu0 %v4684
        %4703 = vmatprep.subr.mxu0 0.0
        %4704 = vmatpush1.msra.mxu0 %v4685
        %4705 = vmatprep.subr.mxu0 0.0
        %4706 = vmatpush1.msra.mxu0 %v4686
        %4707 = vmatprep.subr.mxu0 0.0
        %4708 = vmatpush1.msra.mxu0 %v4687
        %4709 = vmatprep.subr.mxu0 0.0
        %4710 = vmatpush1.msra.mxu0 0.0
        %4711 = vmatprep.subr.mxu0 0.0
        %4712 = vmatpush1.msra.mxu0 0.0
        %4713 = vmatprep.subr.mxu0 0.0
        %4714 = vmatpush1.msra.mxu0 0.0
        %4715 = vmatprep.subr.mxu0 0.0
        %4716 = vmatpush1.msra.mxu0 0.0
        %4717 = vmatprep.subr.mxu0 0.0
        %4718 = vmatpush1.msra.mxu0 0.0
        %4719 = vmatprep.subr.mxu0 0.0
        %4720 = vmatpush1.msra.mxu0 0.0
        %4721 = vmatprep.subr.mxu0 0.0
        %4722 = vmatpush1.msra.mxu0 0.0
        %4723 = vmatprep.subr.mxu0 0.0
        %4724 = vmatpush1.msra.mxu0 0.0
        %4725 = vmatprep.subr.mxu0 0.0
        %4726 = vmatpush1.msra.mxu0 0.0
        %4727 = vmatprep.subr.mxu0 0.0
        %4728 = vmatpush1.msra.mxu0 0.0
        %4729 = vmatprep.subr.mxu0 0.0
        %4730 = vmatpush1.msra.mxu0 0.0
        %4731 = vmatprep.subr.mxu0 0.0
        %4732 = vmatpush1.msra.mxu0 0.0
        %4733 = vmatprep.subr.mxu0 0.0
        %4734 = vmatpush1.msra.mxu0 0.0
        %4735 = vmatprep.subr.mxu0 0.0
        %4736 = vmatpush1.msra.mxu0 0.0
        %4737 = vmatprep.subr.mxu0 0.0
        %4738 = vmatpush1.msra.mxu0 0.0
        %4739 = vmatprep.subr.mxu0 0.0
        %4740 = vmatpush1.msra.mxu0 0.0
        %4741 = vmatprep.subr.mxu0 0.0
        %4742 = vmatpush1.msra.mxu0 0.0
        %4743 = vmatprep.subr.mxu0 0.0
        %4744 = vmatpush1.msra.mxu0 0.0
        %4745 = vmatprep.subr.mxu0 0.0
        %4746 = vmatpush1.msra.mxu0 0.0
        %4747 = vmatprep.subr.mxu0 0.0
        %4748 = vmatpush1.msra.mxu0 0.0
        %4749 = vmatprep.subr.mxu0 0.0
        %4750 = vmatpush1.msra.mxu0 0.0
        %4751 = vmatprep.subr.mxu0 0.0
        %4752 = vmatpush1.msra.mxu0 0.0
        %4753 = vmatprep.subr.mxu0 0.0
        %4754 = vmatpush1.msra.mxu0 0.0
        %4755 = vmatprep.subr.mxu0 0.0
        %4756 = vmatpush1.msra.mxu0 0.0
        %4757 = vmatprep.mubr.f32.mxu0 0.0
        %4758 = vmatmul.mubr.f32.gmra.mrb[0].mxu0 %v4691
        %v4759 = vpop.f32.mrb[0].mxu0
        %v4760 = vadd.f32 %v4688, %v4759
        %v4761 = vpop.f32.mrb[0].mxu0
        %4762 = vdwg.mxu0
        %v4763 = vmax.f32 %v4760, 0.0
        %v4764 = vld [vmem:[%s9] sm:$0xff]
        %v4765 = vld [vmem:[%s9 + $0x8] sm:$0xff]
        %v4766 = vld [vmem:[%s9 + $0x10] sm:$0xff]
        %v4767 = vld [vmem:[%s9 + $0x18] sm:$0xff]
        %v4768 = vld [vmem:[%s10] sm:$0x1]
        %vm4769 = vcmask 261120
        %v4771 = vsel %vm4769, %v4763, 0
        %4773 = vmatprep.subr.mxu0 0.0
        %4774 = vmatpush1.msra.mxu0 %v4764
        %4775 = vmatprep.subr.mxu0 0.0
        %4776 = vmatpush1.msra.mxu0 %v4765
        %4777 = vmatprep.subr.mxu0 0.0
        %4778 = vmatpush1.msra.mxu0 %v4766
        %4779 = vmatprep.subr.mxu0 0.0
        %4780 = vmatpush1.msra.mxu0 %v4767
        %4781 = vmatprep.subr.mxu0 0.0
        %4782 = vmatpush1.msra.mxu0 0.0
        %4783 = vmatprep.subr.mxu0 0.0
        %4784 = vmatpush1.msra.mxu0 0.0
        %4785 = vmatprep.subr.mxu0 0.0
        %4786 = vmatpush1.msra.mxu0 0.0
        %4787 = vmatprep.subr.mxu0 0.0
        %4788 = vmatpush1.msra.mxu0 0.0
        %4789 = vmatprep.subr.mxu0 0.0
        %4790 = vmatpush1.msra.mxu0 0.0
        %4791 = vmatprep.subr.mxu0 0.0
        %4792 = vmatpush1.msra.mxu0 0.0
        %4793 = vmatprep.subr.mxu0 0.0
        %4794 = vmatpush1.msra.mxu0 0.0
        %4795 = vmatprep.subr.mxu0 0.0
        %4796 = vmatpush1.msra.mxu0 0.0
        %4797 = vmatprep.subr.mxu0 0.0
        %4798 = vmatpush1.msra.mxu0 0.0
        %4799 = vmatprep.subr.mxu0 0.0
        %4800 = vmatpush1.msra.mxu0 0.0
        %4801 = vmatprep.subr.mxu0 0.0
        %4802 = vmatpush1.msra.mxu0 0.0
        %4803 = vmatprep.subr.mxu0 0.0
        %4804 = vmatpush1.msra.mxu0 0.0
        %4805 = vmatprep.subr.mxu0 0.0
        %4806 = vmatpush1.msra.mxu0 0.0
        %4807 = vmatprep.subr.mxu0 0.0
        %4808 = vmatpush1.msra.mxu0 0.0
        %4809 = vmatprep.subr.mxu0 0.0
        %4810 = vmatpush1.msra.mxu0 0.0
        %4811 = vmatprep.subr.mxu0 0.0
        %4812 = vmatpush1.msra.mxu0 0.0
        %4813 = vmatprep.subr.mxu0 0.0
        %4814 = vmatpush1.msra.mxu0 0.0
        %4815 = vmatprep.subr.mxu0 0.0
        %4816 = vmatpush1.msra.mxu0 0.0
        %4817 = vmatprep.subr.mxu0 0.0
        %4818 = vmatpush1.msra.mxu0 0.0
        %4819 = vmatprep.subr.mxu0 0.0
        %4820 = vmatpush1.msra.mxu0 0.0
        %4821 = vmatprep.subr.mxu0 0.0
        %4822 = vmatpush1.msra.mxu0 0.0
        %4823 = vmatprep.subr.mxu0 0.0
        %4824 = vmatpush1.msra.mxu0 0.0
        %4825 = vmatprep.subr.mxu0 0.0
        %4826 = vmatpush1.msra.mxu0 0.0
        %4827 = vmatprep.subr.mxu0 0.0
        %4828 = vmatpush1.msra.mxu0 0.0
        %4829 = vmatprep.subr.mxu0 0.0
        %4830 = vmatpush1.msra.mxu0 0.0
        %4831 = vmatprep.subr.mxu0 0.0
        %4832 = vmatpush1.msra.mxu0 0.0
        %4833 = vmatprep.subr.mxu0 0.0
        %4834 = vmatpush1.msra.mxu0 0.0
        %4835 = vmatprep.subr.mxu0 0.0
        %4836 = vmatpush1.msra.mxu0 0.0
        %4837 = vmatprep.mubr.f32.mxu0 0.0
        %4838 = vmatmul.mubr.f32.gmra.mrb[0].mxu0 %v4771
        %v4839 = vpop.f32.mrb[0].mxu0
        %v4840 = vadd.f32 %v4768, %v4839
        %v4841 = vpop.f32.mrb[0].mxu0
        %4842 = vdwg.mxu0
        %4843 = vst [vmem:[%s422] sm:$0x1] %v4840
        %s4844 = sand.u32 %s276, 1
        %s4845 = scalar_lea.sflag [#allocation4], %s4844
        %s4846 = sand.u32 %s276, 1
        %s4847 = scalar_lea.vmem [#allocation7], %s4846
        // Predicated region
        $region73: #{tpu_custom_call.1} parent=63 // pred_check
          %p4848 = pneg %p286
        $region74: #{tpu_custom_call.1} parent=63 // pred_check_branch
          %4850 = sbr.rel (%p4848) target = $region76
        $region75: #{tpu_custom_call.1} parent=63 // pred_region
          %s4852 = ssub.s32 16, 16
          %4853 = vsyncadd %s4845, %s4852
          %s4854 = smul.addr %s27, 16
          %s4855 = scalar_lea.hbm %s11, %s4854
          %s4857 = sshll.u32 %s4847, 4
          %s4858 = int_to_ptr.vmem [resolvable:$true] %s4857
          %4860 = dma.vmem_to_hbm [thread:$0]  %s4858, 16, %s4855, %s4845
        $region76: #{tpu_custom_call.1} parent=63 // pred_fallthru
          _
      $region64: #{tpu_custom_call.1} parent=5 // pred_fallthru
        _
      %p4861 = scmp.le.s32.totalorder 2, %s22
      // Predicated region
      $region77: #{tpu_custom_call.1} parent=5 // pred_check
        %p4862 = pneg %p4861
      $region78: #{tpu_custom_call.1} parent=5 // pred_check_branch
        %4864 = sbr.rel (%p4862) target = $region80
      $region79: #{tpu_custom_call.1} parent=5 // pred_region
        %s4865 = ssub.s32 %s22, 2
        // Predicated region
        $region81: #{tpu_custom_call.1} parent=79 // pred_check
          %p4866 = pneg %p292
        $region82: #{tpu_custom_call.1} parent=79 // pred_check_branch
          %4868 = sbr.rel (%p4866) target = $region84
        $region83: #{tpu_custom_call.1} parent=79 // pred_region
          %s4869 = sand.u32 %s277, 1
          %s4870 = scalar_lea.sflag [#allocation4], %s4869
          %s4871 = sand.u32 %s277, 1
          %s4872 = scalar_lea.vmem [#allocation7], %s4871
          %4873 = dma.done %s4870, 16
        $region84: #{tpu_custom_call.1} parent=79 // pred_fallthru
          _
      $region80: #{tpu_custom_call.1} parent=5 // pred_fallthru
        _
    $region6: #{tpu_custom_call.1} parent=1 // loop_footer
      %s26 = sadd.s32 1, %s22
    $region7: #{tpu_custom_call.1} parent=1 // loop_footer_branch
      %21 = sbr.rel target = $region3
    $region8: #{tpu_custom_call.1} parent=1 // loop_exit
      _
    %4874 = vsyncpa [#allocation3], 1
    %s4875 = scalar_lea.sflag [#allocation3], 1
    %4876 = vsyncpa %s4875, 1
    %4877 = vsyncpa [#allocation6], 1
    %4878 = vsyncpa [#allocation4], 1
    %s4879 = scalar_lea.sflag [#allocation4], 1
    %4880 = vsyncpa %s4879, 1

</llo_original>
